<compile_context>
chip_gen: v7x
topology: tpu7x:2x2x1
jax: 0.10.0
libtpu: 0.0.40
codegen_flags: <defaults>
</compile_context>

<pallas_src>
import jax
import jax.numpy as jnp
from jax.experimental import pallas as pl
from jax.experimental.pallas import tpu as pltpu

EPS = 1e-5
VMEM_LIMIT = 32 * 1024 * 1024   # >= default scoped VMEM on v5e/v6e/v7x, < physical


# ---------------------------------------------------------------------------
# tile-size helpers
# ---------------------------------------------------------------------------
def _largest_divisor(n, cap, multiple_of=1):
    cap = max(min(cap, n), 1)
    for t in range(cap, 0, -1):
        if n % t == 0 and t % multiple_of == 0:
            return t
    return n                      # fall back to the full extent (always legal)


def _pick_band(hd, wd, cin, cmid, budget_bytes=8 << 20):
    """Largest row-band dividing hd that (a) leaves >=2 bands for pipelining and
    (b) keeps the per-step working set well under the scoped-VMEM budget."""
    per_row = wd * (cin + cmid) * 4 * 6 + 1     # rough: dbl-buffered in/out + scratch
    cap = max(1, min(hd // 2 if hd >= 2 else hd, budget_bytes // per_row))
    return _largest_divisor(hd, cap)


def _bn_scale_shift(s, sq, count, gamma, beta):
    """Fold training-mode BN (batch stats, biased var) into y = x*scale + shift."""
    mean = s / count
    var = jnp.maximum(sq / count - mean * mean, 0.0)
    scale = gamma * jax.lax.rsqrt(var + EPS)
    shift = beta - mean * scale
    return scale, shift


# ---------------------------------------------------------------------------
# Kernel 1: ConvTranspose2d(k=2, s=2) as a per-pixel matmul (bf16 MXU, f32 acc),
#           fused with per-channel batch statistics of its own output.
# ---------------------------------------------------------------------------
def _up_matmul_kernel(x_ref, w_ref, b_ref, y_ref, ps_ref, pq_ref):
    y = jnp.dot(x_ref[...].astype(jnp.bfloat16), w_ref[...],
                preferred_element_type=jnp.float32) + b_ref[...]
    y_ref[...] = y
    c4 = y.shape[-1]
    ps_ref[...] = jnp.broadcast_to(
        y.sum(0, keepdims=True).reshape(1, 1, c4), ps_ref.shape)
    pq_ref[...] = jnp.broadcast_to(
        (y * y).sum(0, keepdims=True).reshape(1, 1, c4), pq_ref.shape)


def _up_matmul(x1_flat, wmat_bf16, bias_row):
    m, cin = x1_flat.shape
    c4 = wmat_bf16.shape[1]
    tm = _largest_divisor(m, min(1024, max(m // 2, 8)), multiple_of=8)
    nt = m // tm
    y, ps, pq = pl.pallas_call(
        _up_matmul_kernel,
        out_shape=(jax.ShapeDtypeStruct((m, c4), jnp.float32),
                   jax.ShapeDtypeStruct((nt, 8, c4), jnp.float32),
                   jax.ShapeDtypeStruct((nt, 8, c4), jnp.float32)),
        grid=(nt,),
        in_specs=[pl.BlockSpec((tm, cin), lambda i: (i, 0)),
                  pl.BlockSpec((cin, c4), lambda i: (0, 0)),
                  pl.BlockSpec((1, c4), lambda i: (0, 0))],
        out_specs=(pl.BlockSpec((tm, c4), lambda i: (i, 0)),
                   pl.BlockSpec((1, 8, c4), lambda i: (i, 0, 0)),
                   pl.BlockSpec((1, 8, c4), lambda i: (i, 0, 0))),
        compiler_params=pltpu.CompilerParams(
            dimension_semantics=("parallel",),
            vmem_limit_bytes=VMEM_LIMIT),
        cost_estimate=pl.CostEstimate(
            flops=2 * m * cin * c4,
            transcendentals=0,
            bytes_accessed=4 * (m * cin + cin * c4 + m * c4)),
    )(x1_flat, wmat_bf16, bias_row)
    return y, ps[:, 0, :].sum(0), pq[:, 0, :].sum(0)


# ---------------------------------------------------------------------------
# Kernel 2: per-channel sum / sum-of-squares of a (M, C) activation (for the
#           x2 half of the first BatchNorm).  Tiled, parallel, partial sums out.
# ---------------------------------------------------------------------------
def _stats_kernel(x_ref, ps_ref, pq_ref):
    v = x_ref[...]
    c = v.shape[-1]
    ps_ref[...] = jnp.broadcast_to(
        v.sum(0, keepdims=True).reshape(1, 1, c), ps_ref.shape)
    pq_ref[...] = jnp.broadcast_to(
        (v * v).sum(0, keepdims=True).reshape(1, 1, c), pq_ref.shape)


def _channel_stats(x_flat):
    m, c = x_flat.shape
    tm = _largest_divisor(m, min(2048, max(m // 2, 8)), multiple_of=8)
    nt = m // tm
    ps, pq = pl.pallas_call(
        _stats_kernel,
        out_shape=(jax.ShapeDtypeStruct((nt, 8, c), jnp.float32),
                   jax.ShapeDtypeStruct((nt, 8, c), jnp.float32)),
        grid=(nt,),
        in_specs=[pl.BlockSpec((tm, c), lambda i: (i, 0))],
        out_specs=(pl.BlockSpec((1, 8, c), lambda i: (i, 0, 0)),
                   pl.BlockSpec((1, 8, c), lambda i: (i, 0, 0))),
        compiler_params=pltpu.CompilerParams(
            dimension_semantics=("parallel",),
            vmem_limit_bytes=VMEM_LIMIT),
    )(x_flat)
    return ps[:, 0, :].sum(0), pq[:, 0, :].sum(0)


# ---------------------------------------------------------------------------
# Shared: 3x3 'same' conv over a halo/zero-padded (tb+2, wd+2, cin) scratch as
# 3 bf16 MXU matmuls (dy loop) with the dx taps folded into K = 3*cin.
# ---------------------------------------------------------------------------
def _conv3x3_rows(zp_ref, w_ref, tb, wd, cin, cout):
    acc = jnp.zeros((tb * wd, cout), jnp.float32)
    for dy in range(3):
        lhs = jnp.concatenate(
            [zp_ref[dy:dy + tb, 0:wd, :],
             zp_ref[dy:dy + tb, 1:wd + 1, :],
             zp_ref[dy:dy + tb, 2:wd + 2, :]], axis=-1)        # (tb, wd, 3*cin)
        acc = acc + jnp.dot(
            lhs.reshape(tb * wd, 3 * cin).astype(jnp.bfloat16), w_ref[dy],
            preferred_element_type=jnp.float32)
    return acc


def _halo_specs(hd, wd, c, tb):
    """(main, top, bot) BlockSpecs for a (N, hd, wd, c) activation tiled into
    tb-row bands; halos use clamped element indices (block size 1 on rows) and
    are masked to zero at the image boundary inside the kernel."""
    main = pl.BlockSpec((1, tb, wd, c), lambda n, b: (n, b, 0, 0))
    top = pl.BlockSpec((1, 1, wd, c),
                       lambda n, b: (n, jnp.maximum(b * tb - 1, 0), 0, 0))
    bot = pl.BlockSpec((1, 1, wd, c),
                       lambda n, b: (n, jnp.minimum((b + 1) * tb, hd - 1), 0, 0))
    return main, top, bot


# ---------------------------------------------------------------------------
# Kernel 3: BN1 -> ReLU -> Conv3x3 with the channel concat fused (x2 half and
#           upsampled half normalized separately), plus partial BN2 statistics.
# ---------------------------------------------------------------------------
def _bn_relu_conv1_kernel(a_ref, at_ref, ab_ref, b_ref, bt_ref, bb_ref,
                          sca_ref, sha_ref, scb_ref, shb_ref, w_ref, cb_ref,
                          h_ref, ps_ref, pq_ref, zp_ref):
    tb, wd = a_ref.shape[1], a_ref.shape[2]
    cin = zp_ref.shape[-1]
    cmid = w_ref.shape[-1]
    band = pl.program_id(1)
    last = pl.num_programs(1) - 1

    def norm(x, sc, sh):                       # folded BN (x*s + t) + ReLU, f32
        return jnp.maximum(x * sc + sh, 0.0)

    # zero only the 1-pixel W border; everything else is overwritten below
    zp_ref[:, 0:1, :] = jnp.zeros((tb + 2, 1, cin), zp_ref.dtype)
    zp_ref[:, wd + 1:wd + 2, :] = jnp.zeros((tb + 2, 1, cin), zp_ref.dtype)

    # interior rows: concat([x2, up(x1)]) built directly in VMEM (no z in HBM)
    inner = jnp.concatenate(
        [norm(a_ref[0], sca_ref[...], sha_ref[...]),
         norm(b_ref[0], scb_ref[...], shb_ref[...])], axis=-1)
    zp_ref[1:tb + 1, 1:wd + 1, :] = inner

    # halo rows (masked to zero at the top/bottom of the image)
    top = jnp.concatenate(
        [norm(at_ref[0, 0], sca_ref[...], sha_ref[...]),
         norm(bt_ref[0, 0], scb_ref[...], shb_ref[...])], axis=-1)
    top = jnp.where(band > 0, top, 0.0)
    zp_ref[0:1, 1:wd + 1, :] = top.reshape(1, wd, cin)

    bot = jnp.concatenate(
        [norm(ab_ref[0, 0], sca_ref[...], sha_ref[...]),
         norm(bb_ref[0, 0], scb_ref[...], shb_ref[...])], axis=-1)
    bot = jnp.where(band < last, bot, 0.0)
    zp_ref[tb + 1:tb + 2, 1:wd + 1, :] = bot.reshape(1, wd, cin)

    acc = _conv3x3_rows(zp_ref, w_ref, tb, wd, cin, cmid) + cb_ref[...]
    h_ref[...] = acc.reshape(1, tb, wd, cmid)

    # partial batch statistics of h for the second BatchNorm
    ps_ref[...] = jnp.broadcast_to(
        acc.sum(0, keepdims=True).reshape(1, 1, 1, cmid), ps_ref.shape)
    pq_ref[...] = jnp.broadcast_to(
        (acc * acc).sum(0, keepdims=True).reshape(1, 1, 1, cmid), pq_ref.shape)


def _bn_relu_conv1(x2, y_up, sc1, sh1, w1k, cb1, tb):
    n, hd, wd, ch = x2.shape
    cin = 2 * ch
    cmid = w1k.shape[-1]
    nb = hd // tb
    a_specs = _halo_specs(hd, wd, ch, tb)
    b_specs = _halo_specs(hd, wd, ch, tb)
    vec = lambda c: pl.BlockSpec((1, c), lambda n_, b_: (0, 0))
    h, ps, pq = pl.pallas_call(
        _bn_relu_conv1_kernel,
        out_shape=(jax.ShapeDtypeStruct((n, hd, wd, cmid), jnp.float32),
                   jax.ShapeDtypeStruct((n, nb, 8, cmid), jnp.float32),
                   jax.ShapeDtypeStruct((n, nb, 8, cmid), jnp.float32)),
        grid=(n, nb),
        in_specs=[*a_specs, *b_specs,
                  vec(ch), vec(ch), vec(ch), vec(ch),
                  pl.BlockSpec((3, 3 * cin, cmid), lambda n_, b_: (0, 0, 0)),
                  vec(cmid)],
        out_specs=(pl.BlockSpec((1, tb, wd, cmid), lambda n_, b_: (n_, b_, 0, 0)),
                   pl.BlockSpec((1, 1, 8, cmid), lambda n_, b_: (n_, b_, 0, 0)),
                   pl.BlockSpec((1, 1, 8, cmid), lambda n_, b_: (n_, b_, 0, 0))),
        scratch_shapes=[pltpu.VMEM((tb + 2, wd + 2, cin), jnp.float32)],
        compiler_params=pltpu.CompilerParams(
            dimension_semantics=("parallel", "parallel"),
            vmem_limit_bytes=VMEM_LIMIT),
        cost_estimate=pl.CostEstimate(
            flops=2 * n * hd * wd * 9 * cin * cmid,
            transcendentals=0,
            bytes_accessed=4 * n * hd * wd * (cin + cmid)),
    )(x2, x2, x2, y_up, y_up, y_up,
      sc1[:, :ch], sh1[:, :ch], sc1[:, ch:], sh1[:, ch:], w1k, cb1)
    return h, ps[:, :, 0, :].sum((0, 1)), pq[:, :, 0, :].sum((0, 1))


# ---------------------------------------------------------------------------
# Kernel 4: BN2 -> ReLU -> Conv3x3 (single channel group, final output)
# ---------------------------------------------------------------------------
def _bn_relu_conv2_kernel(x_ref, xt_ref, xb_ref, sc_ref, sh_ref, w_ref, cb_ref,
                          o_ref, zp_ref):
    tb, wd = x_ref.shape[1], x_ref.shape[2]
    cin = zp_ref.shape[-1]
    cout = w_ref.shape[-1]
    band = pl.program_id(1)
    last = pl.num_programs(1) - 1

    def norm(x):
        return jnp.maximum(x * sc_ref[...] + sh_ref[...], 0.0)

    zp_ref[:, 0:1, :] = jnp.zeros((tb + 2, 1, cin), zp_ref.dtype)
    zp_ref[:, wd + 1:wd + 2, :] = jnp.zeros((tb + 2, 1, cin), zp_ref.dtype)
    zp_ref[1:tb + 1, 1:wd + 1, :] = norm(x_ref[0])
    top = jnp.where(band > 0, norm(xt_ref[0, 0]), 0.0)
    zp_ref[0:1, 1:wd + 1, :] = top.reshape(1, wd, cin)
    bot = jnp.where(band < last, norm(xb_ref[0, 0]), 0.0)
    zp_ref[tb + 1:tb + 2, 1:wd + 1, :] = bot.reshape(1, wd, cin)

    acc = _conv3x3_rows(zp_ref, w_ref, tb, wd, cin, cout) + cb_ref[...]
    o_ref[...] = acc.reshape(1, tb, wd, cout)


def _bn_relu_conv2(h, sc2, sh2, w2k, cb2, tb):
    n, hd, wd, cmid = h.shape
    cout = w2k.shape[-1]
    nb = hd // tb
    specs = _halo_specs(hd, wd, cmid, tb)
    vec = lambda c: pl.BlockSpec((1, c), lambda n_, b_: (0, 0))
    return pl.pallas_call(
        _bn_relu_conv2_kernel,
        out_shape=jax.ShapeDtypeStruct((n, hd, wd, cout), jnp.float32),
        grid=(n, nb),
        in_specs=[*specs, vec(cmid), vec(cmid),
                  pl.BlockSpec((3, 3 * cmid, cout), lambda n_, b_: (0, 0, 0)),
                  vec(cout)],
        out_specs=pl.BlockSpec((1, tb, wd, cout), lambda n_, b_: (n_, b_, 0, 0)),
        scratch_shapes=[pltpu.VMEM((tb + 2, wd + 2, cmid), jnp.float32)],
        compiler_params=pltpu.CompilerParams(
            dimension_semantics=("parallel", "parallel"),
            vmem_limit_bytes=VMEM_LIMIT),
        cost_estimate=pl.CostEstimate(
            flops=2 * n * hd * wd * 9 * cmid * cout,
            transcendentals=0,
            bytes_accessed=4 * n * hd * wd * (cmid + cout)),
    )(h, h, h, sc2, sh2, w2k, cb2)


# ---------------------------------------------------------------------------
# Up.forward
# ---------------------------------------------------------------------------
def up_forward(x1_nchw, x2_nchw, params):
    n, cin, hin, win = x1_nchw.shape
    ch = cin // 2
    hd, wd = 2 * hin, 2 * win

    x1 = jnp.transpose(x1_nchw, (0, 2, 3, 1)).astype(jnp.float32)   # (N,H1,W1,Cin)
    x2 = jnp.transpose(x2_nchw, (0, 2, 3, 1)).astype(jnp.float32)   # (N,2H,2W,Ch)

    # --- repack PyTorch-layout weights into kernel layouts ------------------
    # ConvTranspose2d (Cin, Ch, 2, 2) -> (Cin, 4*Ch) with column order (di,dj,co)
    wmat = jnp.transpose(params["up_w"], (0, 2, 3, 1)).reshape(cin, 4 * ch)
    wmat = wmat.astype(jnp.bfloat16)
    bvec = jnp.tile(params["up_b"], 4).reshape(1, 4 * ch).astype(jnp.float32)
    cmid = params["w1"].shape[0]
    cout = params["w2"].shape[0]
    # Conv2d (Cout, Cin, 3, 3) -> (dy, dx*Cin + cin, cout), bf16 MXU operands
    w1k = jnp.transpose(params["w1"], (2, 3, 1, 0)).reshape(3, 3 * cin, cmid)
    w1k = w1k.astype(jnp.bfloat16)
    w2k = jnp.transpose(params["w2"], (2, 3, 1, 0)).reshape(3, 3 * cmid, cout)
    w2k = w2k.astype(jnp.bfloat16)
    cb1 = params["cb1"].reshape(1, cmid).astype(jnp.float32)
    cb2 = params["cb2"].reshape(1, cout).astype(jnp.float32)

    # --- Kernel 1: ConvTranspose(k=2,s=2) + its own batch statistics --------
    m1 = n * hin * win
    y_flat, ysum4, ysq4 = _up_matmul(x1.reshape(m1, cin), wmat, bvec)
    ysum = ysum4.reshape(4, ch).sum(0)          # fold the (di,dj) groups per co
    ysq = ysq4.reshape(4, ch).sum(0)

    # 2x2 zero-overlap scatter onto the upsampled grid (pure data movement).
    # TODO(synk): fold into the matmul out_spec with strided stores to save one
    #             HBM round-trip of the upsampled half.
    y_up = y_flat.reshape(n, hin, win, 2, 2, ch)
    y_up = jnp.transpose(y_up, (0, 1, 3, 2, 4, 5)).reshape(n, hd, wd, ch)

    # --- Kernel 2: batch statistics of x2 (other half of the concat) --------
    xsum, xsq = _channel_stats(x2.reshape(n * hd * wd, ch))

    # --- BatchNorm1 folded to per-channel scale/shift ------------------------
    count = float(n * hd * wd)
    scale1, shift1 = _bn_scale_shift(jnp.concatenate([xsum, ysum]),
                                     jnp.concatenate([xsq, ysq]),
                                     count, params["g1"], params["b1"])
    scale1 = scale1.reshape(1, cin).astype(jnp.float32)
    shift1 = shift1.reshape(1, cin).astype(jnp.float32)

    tb = _pick_band(hd, wd, cin, cmid)

    # --- Kernel 3: BN1 -> ReLU -> Conv3x3 (concat fused) + BN2 statistics ----
    h, hsum, hsq = _bn_relu_conv1(x2, y_up, scale1, shift1, w1k, cb1, tb)

    scale2, shift2 = _bn_scale_shift(hsum, hsq, count, params["g2"], params["b2"])
    scale2 = scale2.reshape(1, cmid).astype(jnp.float32)
    shift2 = shift2.reshape(1, cmid).astype(jnp.float32)

    # --- Kernel 4: BN2 -> ReLU -> Conv3x3 ------------------------------------
    out = _bn_relu_conv2(h, scale2, shift2, w2k, cb2, tb)

    return jnp.transpose(out, (0, 3, 1, 2))      # back to NCHW


# ---------------------------------------------------------------------------
# Deterministic synthetic parameters in PyTorch layouts
# ---------------------------------------------------------------------------
def init_params(key, in_channels, out_channels):
    cin, ch = in_channels, in_channels // 2
    cmid = cout = out_channels                   # mid_channels defaults to out
    ks = jax.random.split(key, 6)
    return {
        "up_w": 0.1 * jax.random.normal(ks[0], (cin, ch, 2, 2), jnp.float32),
        "up_b": 0.1 * jax.random.normal(ks[1], (ch,), jnp.float32),
        "g1": jnp.ones((cin,), jnp.float32),
        "b1": jnp.zeros((cin,), jnp.float32),
        "w1": 0.1 * jax.random.normal(ks[2], (cmid, cin, 3, 3), jnp.float32),
        "cb1": 0.1 * jax.random.normal(ks[3], (cmid,), jnp.float32),
        "g2": jnp.ones((cmid,), jnp.float32),
        "b2": jnp.zeros((cmid,), jnp.float32),
        "w2": 0.1 * jax.random.normal(ks[4], (cout, cmid, 3, 3), jnp.float32),
        "cb2": 0.1 * jax.random.normal(ks[5], (cout,), jnp.float32),
    }


if __name__ == "__main__":
    key = jax.random.PRNGKey(0)
    k1, k2, kp = jax.random.split(key, 3)

    n, cin, h1, w1 = 2, 4, 8, 8                  # x1: coarse feature map (NCHW)
    cout = 4
    x1 = jax.random.normal(k1, (n, cin, h1, w1), jnp.float32)
    x2 = jax.random.normal(k2, (n, cin // 2, 2 * h1, 2 * w1), jnp.float32)

    params = init_params(kp, cin, cout)
    out = jax.jit(up_forward)(x1, x2, params)
    jax.block_until_ready(out)
    assert out.shape == (n, cout, 2 * h1, 2 * w1), out.shape
    print("KERNEL_OK")
</pallas_src>

<mosaic_0001>
module attributes {stable_mosaic.version = 11 : i64} {
  func.func @_stats_kernel(%arg0: i32, %arg1: memref<256x2xf32, #tpu.memory_space<vmem>>, %arg2: memref<1x8x2xf32, #tpu.memory_space<vmem>>, %arg3: memref<1x8x2xf32, #tpu.memory_space<vmem>>) attributes {dimension_semantics = [#tpu.dimension_semantics<parallel>], iteration_bounds = array<i64: 2>, scalar_prefetch = 0 : i64, scratch_operands = 0 : i64, tpu.core_type = #tpu.core_type<tc>, window_params = [{transform_indices = @transform_0, window_bounds = array<i64: 256, 2>}, {transform_indices = @transform_1, window_bounds = array<i64: 1, 8, 2>}, {transform_indices = @transform_2, window_bounds = array<i64: 1, 8, 2>}]} {
    %c0 = arith.constant 0 : index
    %c0_0 = arith.constant 0 : index
    %0 = vector.load %arg1[%c0, %c0_0] : memref<256x2xf32, #tpu.memory_space<vmem>>, vector<256x2xf32>
    %cst = arith.constant dense<0.000000e+00> : vector<2xf32>
    %1 = vector.multi_reduction <add>, %0, %cst [0] : vector<256x2xf32> to vector<2xf32>
    %2 = vector.shape_cast %1 : vector<2xf32> to vector<1x2xf32>
    %3 = vector.shape_cast %2 : vector<1x2xf32> to vector<1x1x2xf32>
    %4 = vector.shape_cast %3 : vector<1x1x2xf32> to vector<1x1x2xf32>
    %5 = vector.broadcast %4 : vector<1x1x2xf32> to vector<1x8x2xf32>
    %c0_1 = arith.constant 0 : index
    %c0_2 = arith.constant 0 : index
    %c0_3 = arith.constant 0 : index
    %6 = vector.load %arg2[%c0_1, %c0_2, %c0_3] : memref<1x8x2xf32, #tpu.memory_space<vmem>>, vector<1x8x2xf32>
    tpu.vector_store %arg2[%c0_1, %c0_2, %c0_3], %5 {strides = array<i32>} : memref<1x8x2xf32, #tpu.memory_space<vmem>>, vector<1x8x2xf32>,
    %7 = arith.mulf %0, %0 : vector<256x2xf32>
    %cst_4 = arith.constant dense<0.000000e+00> : vector<2xf32>
    %8 = vector.multi_reduction <add>, %7, %cst_4 [0] : vector<256x2xf32> to vector<2xf32>
    %9 = vector.shape_cast %8 : vector<2xf32> to vector<1x2xf32>
    %10 = vector.shape_cast %9 : vector<1x2xf32> to vector<1x1x2xf32>
    %11 = vector.shape_cast %10 : vector<1x1x2xf32> to vector<1x1x2xf32>
    %12 = vector.broadcast %11 : vector<1x1x2xf32> to vector<1x8x2xf32>
    %c0_5 = arith.constant 0 : index
    %c0_6 = arith.constant 0 : index
    %c0_7 = arith.constant 0 : index
    %13 = vector.load %arg3[%c0_5, %c0_6, %c0_7] : memref<1x8x2xf32, #tpu.memory_space<vmem>>, vector<1x8x2xf32>
    tpu.vector_store %arg3[%c0_5, %c0_6, %c0_7], %12 {strides = array<i32>} : memref<1x8x2xf32, #tpu.memory_space<vmem>>, vector<1x8x2xf32>,
    return
  }
  func.func @transform_0(%arg0: i32) -> (i32, i32) {
    %c0_i32 = arith.constant 0 : i32
    %c0_i32_0 = arith.constant 0 : i32
    return %arg0, %c0_i32 : i32, i32
  }
  func.func @transform_1(%arg0: i32) -> (i32, i32, i32) {
    %c0_i32 = arith.constant 0 : i32
    %c0_i32_0 = arith.constant 0 : i32
    %c0_i32_1 = arith.constant 0 : i32
    return %arg0, %c0_i32, %c0_i32_0 : i32, i32, i32
  }
  func.func @transform_2(%arg0: i32) -> (i32, i32, i32) {
    %c0_i32 = arith.constant 0 : i32
    %c0_i32_0 = arith.constant 0 : i32
    %c0_i32_1 = arith.constant 0 : i32
    return %arg0, %c0_i32, %c0_i32_0 : i32, i32, i32
  }
}

module attributes {stable_mosaic.version = 11 : i64} {
  func.func @_up_matmul_kernel(%arg0: i32, %arg1: memref<64x4xf32, #tpu.memory_space<vmem>>, %arg2: memref<4x8xbf16, #tpu.memory_space<vmem>>, %arg3: memref<1x8xf32, #tpu.memory_space<vmem>>, %arg4: memref<64x8xf32, #tpu.memory_space<vmem>>, %arg5: memref<1x8x8xf32, #tpu.memory_space<vmem>>, %arg6: memref<1x8x8xf32, #tpu.memory_space<vmem>>) attributes {dimension_semantics = [#tpu.dimension_semantics<parallel>], iteration_bounds = array<i64: 2>, scalar_prefetch = 0 : i64, scratch_operands = 0 : i64, tpu.core_type = #tpu.core_type<tc>, window_params = [{transform_indices = @transform_0, window_bounds = array<i64: 64, 4>}, {pipeline_mode = #tpu.pipeline_mode<synchronous>, transform_indices = @transform_1, window_bounds = array<i64: 4, 8>}, {pipeline_mode = #tpu.pipeline_mode<synchronous>, transform_indices = @transform_2, window_bounds = array<i64: 1, 8>}, {transform_indices = @transform_3, window_bounds = array<i64: 64, 8>}, {transform_indices = @transform_4, window_bounds = array<i64: 1, 8, 8>}, {transform_indices = @transform_5, window_bounds = array<i64: 1, 8, 8>}]} {
    %c0 = arith.constant 0 : index
    %c0_0 = arith.constant 0 : index
    %0 = vector.load %arg1[%c0, %c0_0] : memref<64x4xf32, #tpu.memory_space<vmem>>, vector<64x4xf32>
    %1 = arith.truncf %0 : vector<64x4xf32> to vector<64x4xbf16>
    %c0_1 = arith.constant 0 : index
    %c0_2 = arith.constant 0 : index
    %2 = vector.load %arg2[%c0_1, %c0_2] : memref<4x8xbf16, #tpu.memory_space<vmem>>, vector<4x8xbf16>
    %cst = arith.constant dense<0.000000e+00> : vector<64x8xf32>
    %3 = tpu.matmul %1, %2, %cst {dimension_numbers = #tpu.dot_dimension_numbers<[1], [0], [0], [1], [0, 0, 1, 1], [], []>} : vector<64x4xbf16>, vector<4x8xbf16>, vector<64x8xf32> -> vector<64x8xf32>
    %c0_3 = arith.constant 0 : index
    %c0_4 = arith.constant 0 : index
    %4 = vector.load %arg3[%c0_3, %c0_4] : memref<1x8xf32, #tpu.memory_space<vmem>>, vector<1x8xf32>
    %5 = vector.broadcast %4 : vector<1x8xf32> to vector<64x8xf32>
    %6 = arith.addf %3, %5 : vector<64x8xf32>
    %c0_5 = arith.constant 0 : index
    %c0_6 = arith.constant 0 : index
    %7 = vector.load %arg4[%c0_5, %c0_6] : memref<64x8xf32, #tpu.memory_space<vmem>>, vector<64x8xf32>
    tpu.vector_store %arg4[%c0_5, %c0_6], %6 {strides = array<i32>} : memref<64x8xf32, #tpu.memory_space<vmem>>, vector<64x8xf32>,
    %cst_7 = arith.constant dense<0.000000e+00> : vector<8xf32>
    %8 = vector.multi_reduction <add>, %6, %cst_7 [0] : vector<64x8xf32> to vector<8xf32>
    %9 = vector.shape_cast %8 : vector<8xf32> to vector<1x8xf32>
    %10 = vector.shape_cast %9 : vector<1x8xf32> to vector<1x1x8xf32>
    %11 = vector.shape_cast %10 : vector<1x1x8xf32> to vector<1x1x8xf32>
    %12 = vector.broadcast %11 : vector<1x1x8xf32> to vector<1x8x8xf32>
    %c0_8 = arith.constant 0 : index
    %c0_9 = arith.constant 0 : index
    %c0_10 = arith.constant 0 : index
    %13 = vector.load %arg5[%c0_8, %c0_9, %c0_10] : memref<1x8x8xf32, #tpu.memory_space<vmem>>, vector<1x8x8xf32>
    tpu.vector_store %arg5[%c0_8, %c0_9, %c0_10], %12 {strides = array<i32>} : memref<1x8x8xf32, #tpu.memory_space<vmem>>, vector<1x8x8xf32>,
    %14 = arith.mulf %6, %6 : vector<64x8xf32>
    %cst_11 = arith.constant dense<0.000000e+00> : vector<8xf32>
    %15 = vector.multi_reduction <add>, %14, %cst_11 [0] : vector<64x8xf32> to vector<8xf32>
    %16 = vector.shape_cast %15 : vector<8xf32> to vector<1x8xf32>
    %17 = vector.shape_cast %16 : vector<1x8xf32> to vector<1x1x8xf32>
    %18 = vector.shape_cast %17 : vector<1x1x8xf32> to vector<1x1x8xf32>
    %19 = vector.broadcast %18 : vector<1x1x8xf32> to vector<1x8x8xf32>
    %c0_12 = arith.constant 0 : index
    %c0_13 = arith.constant 0 : index
    %c0_14 = arith.constant 0 : index
    %20 = vector.load %arg6[%c0_12, %c0_13, %c0_14] : memref<1x8x8xf32, #tpu.memory_space<vmem>>, vector<1x8x8xf32>
    tpu.vector_store %arg6[%c0_12, %c0_13, %c0_14], %19 {strides = array<i32>} : memref<1x8x8xf32, #tpu.memory_space<vmem>>, vector<1x8x8xf32>,
    return
  }
  func.func @transform_0(%arg0: i32) -> (i32, i32) {
    %c0_i32 = arith.constant 0 : i32
    %c0_i32_0 = arith.constant 0 : i32
    return %arg0, %c0_i32 : i32, i32
  }
  func.func @transform_1(%arg0: i32) -> (i32, i32) {
    %c0_i32 = arith.constant 0 : i32
    %c0_i32_0 = arith.constant 0 : i32
    %c0_i32_1 = arith.constant 0 : i32
    return %c0_i32, %c0_i32_0 : i32, i32
  }
  func.func @transform_2(%arg0: i32) -> (i32, i32) {
    %c0_i32 = arith.constant 0 : i32
    %c0_i32_0 = arith.constant 0 : i32
    %c0_i32_1 = arith.constant 0 : i32
    return %c0_i32, %c0_i32_0 : i32, i32
  }
  func.func @transform_3(%arg0: i32) -> (i32, i32) {
    %c0_i32 = arith.constant 0 : i32
    %c0_i32_0 = arith.constant 0 : i32
    return %arg0, %c0_i32 : i32, i32
  }
  func.func @transform_4(%arg0: i32) -> (i32, i32, i32) {
    %c0_i32 = arith.constant 0 : i32
    %c0_i32_0 = arith.constant 0 : i32
    %c0_i32_1 = arith.constant 0 : i32
    return %arg0, %c0_i32, %c0_i32_0 : i32, i32, i32
  }
  func.func @transform_5(%arg0: i32) -> (i32, i32, i32) {
    %c0_i32 = arith.constant 0 : i32
    %c0_i32_0 = arith.constant 0 : i32
    %c0_i32_1 = arith.constant 0 : i32
    return %arg0, %c0_i32, %c0_i32_0 : i32, i32, i32
  }
}

module attributes {stable_mosaic.version = 11 : i64} {
  func.func @_bn_relu_conv1_kernel(%arg0: i32, %arg1: i32, %arg2: memref<1x8x16x2xf32, #tpu.memory_space<vmem>>, %arg3: memref<1x1x16x2xf32, #tpu.memory_space<vmem>>, %arg4: memref<1x1x16x2xf32, #tpu.memory_space<vmem>>, %arg5: memref<1x8x16x2xf32, #tpu.memory_space<vmem>>, %arg6: memref<1x1x16x2xf32, #tpu.memory_space<vmem>>, %arg7: memref<1x1x16x2xf32, #tpu.memory_space<vmem>>, %arg8: memref<1x2xf32, #tpu.memory_space<vmem>>, %arg9: memref<1x2xf32, #tpu.memory_space<vmem>>, %arg10: memref<1x2xf32, #tpu.memory_space<vmem>>, %arg11: memref<1x2xf32, #tpu.memory_space<vmem>>, %arg12: memref<3x12x4xbf16, #tpu.memory_space<vmem>>, %arg13: memref<1x4xf32, #tpu.memory_space<vmem>>, %arg14: memref<1x8x16x4xf32, #tpu.memory_space<vmem>>, %arg15: memref<1x1x8x4xf32, #tpu.memory_space<vmem>>, %arg16: memref<1x1x8x4xf32, #tpu.memory_space<vmem>>, %arg17: memref<10x18x4xf32, #tpu.memory_space<vmem>>) attributes {dimension_semantics = [#tpu.dimension_semantics<parallel>, #tpu.dimension_semantics<parallel>], iteration_bounds = array<i64: 2, 2>, scalar_prefetch = 0 : i64, scratch_operands = 1 : i64, tpu.core_type = #tpu.core_type<tc>, window_params = [{transform_indices = @transform_0, window_bounds = array<i64: 1, 8, 16, 2>}, {transform_indices = @transform_1, window_bounds = array<i64: 1, 1, 16, 2>}, {transform_indices = @transform_2, window_bounds = array<i64: 1, 1, 16, 2>}, {transform_indices = @transform_3, window_bounds = array<i64: 1, 8, 16, 2>}, {transform_indices = @transform_4, window_bounds = array<i64: 1, 1, 16, 2>}, {transform_indices = @transform_5, window_bounds = array<i64: 1, 1, 16, 2>}, {pipeline_mode = #tpu.pipeline_mode<synchronous>, transform_indices = @transform_6, window_bounds = array<i64: 1, 2>}, {pipeline_mode = #tpu.pipeline_mode<synchronous>, transform_indices = @transform_7, window_bounds = array<i64: 1, 2>}, {pipeline_mode = #tpu.pipeline_mode<synchronous>, transform_indices = @transform_8, window_bounds = array<i64: 1, 2>}, {pipeline_mode = #tpu.pipeline_mode<synchronous>, transform_indices = @transform_9, window_bounds = array<i64: 1, 2>}, {pipeline_mode = #tpu.pipeline_mode<synchronous>, transform_indices = @transform_10, window_bounds = array<i64: 3, 12, 4>}, {pipeline_mode = #tpu.pipeline_mode<synchronous>, transform_indices = @transform_11, window_bounds = array<i64: 1, 4>}, {transform_indices = @transform_12, window_bounds = array<i64: 1, 8, 16, 4>}, {transform_indices = @transform_13, window_bounds = array<i64: 1, 1, 8, 4>}, {transform_indices = @transform_14, window_bounds = array<i64: 1, 1, 8, 4>}]} {
    %cst = arith.constant 0.000000e+00 : f32
    %0 = vector.broadcast %cst : f32 to vector<10x1x4xf32>
    %c0 = arith.constant 0 : index
    %c0_0 = arith.constant 0 : index
    %c0_1 = arith.constant 0 : index
    %1 = vector.load %arg17[%c0, %c0_0, %c0_1] : memref<10x18x4xf32, #tpu.memory_space<vmem>>, vector<10x1x4xf32>
    tpu.vector_store %arg17[%c0, %c0_0, %c0_1], %0 {strides = array<i32>} : memref<10x18x4xf32, #tpu.memory_space<vmem>>, vector<10x1x4xf32>,
    %cst_2 = arith.constant 0.000000e+00 : f32
    %2 = vector.broadcast %cst_2 : f32 to vector<10x1x4xf32>
    %c0_3 = arith.constant 0 : index
    %c17 = arith.constant 17 : index
    %c0_4 = arith.constant 0 : index
    %3 = vector.load %arg17[%c0_3, %c17, %c0_4] : memref<10x18x4xf32, #tpu.memory_space<vmem>>, vector<10x1x4xf32>
    tpu.vector_store %arg17[%c0_3, %c17, %c0_4], %2 {strides = array<i32>} : memref<10x18x4xf32, #tpu.memory_space<vmem>>, vector<10x1x4xf32>,
    %c0_5 = arith.constant 0 : index
    %c0_6 = arith.constant 0 : index
    %c0_7 = arith.constant 0 : index
    %c0_8 = arith.constant 0 : index
    %4 = vector.load %arg2[%c0_5, %c0_6, %c0_7, %c0_8] : memref<1x8x16x2xf32, #tpu.memory_space<vmem>>, vector<1x8x16x2xf32>
    %5 = vector.shape_cast %4 : vector<1x8x16x2xf32> to vector<8x16x2xf32>
    %c0_9 = arith.constant 0 : index
    %c0_10 = arith.constant 0 : index
    %6 = vector.load %arg8[%c0_9, %c0_10] : memref<1x2xf32, #tpu.memory_space<vmem>>, vector<1x2xf32>
    %c0_11 = arith.constant 0 : index
    %c0_12 = arith.constant 0 : index
    %7 = vector.load %arg9[%c0_11, %c0_12] : memref<1x2xf32, #tpu.memory_space<vmem>>, vector<1x2xf32>
    %8 = vector.shape_cast %6 : vector<1x2xf32> to vector<1x1x2xf32>
    %9 = vector.broadcast %8 : vector<1x1x2xf32> to vector<8x16x2xf32>
    %10 = arith.mulf %5, %9 : vector<8x16x2xf32>
    %11 = vector.shape_cast %7 : vector<1x2xf32> to vector<1x1x2xf32>
    %12 = vector.broadcast %11 : vector<1x1x2xf32> to vector<8x16x2xf32>
    %13 = arith.addf %10, %12 : vector<8x16x2xf32>
    %cst_13 = arith.constant 0.000000e+00 : f32
    %14 = vector.broadcast %cst_13 : f32 to vector<8x16x2xf32>
    %15 = arith.maximumf %13, %14 : vector<8x16x2xf32>
    %c0_14 = arith.constant 0 : index
    %c0_15 = arith.constant 0 : index
    %c0_16 = arith.constant 0 : index
    %c0_17 = arith.constant 0 : index
    %16 = vector.load %arg5[%c0_14, %c0_15, %c0_16, %c0_17] : memref<1x8x16x2xf32, #tpu.memory_space<vmem>>, vector<1x8x16x2xf32>
    %17 = vector.shape_cast %16 : vector<1x8x16x2xf32> to vector<8x16x2xf32>
    %c0_18 = arith.constant 0 : index
    %c0_19 = arith.constant 0 : index
    %18 = vector.load %arg10[%c0_18, %c0_19] : memref<1x2xf32, #tpu.memory_space<vmem>>, vector<1x2xf32>
    %c0_20 = arith.constant 0 : index
    %c0_21 = arith.constant 0 : index
    %19 = vector.load %arg11[%c0_20, %c0_21] : memref<1x2xf32, #tpu.memory_space<vmem>>, vector<1x2xf32>
    %20 = vector.shape_cast %18 : vector<1x2xf32> to vector<1x1x2xf32>
    %21 = vector.broadcast %20 : vector<1x1x2xf32> to vector<8x16x2xf32>
    %22 = arith.mulf %17, %21 : vector<8x16x2xf32>
    %23 = vector.shape_cast %19 : vector<1x2xf32> to vector<1x1x2xf32>
    %24 = vector.broadcast %23 : vector<1x1x2xf32> to vector<8x16x2xf32>
    %25 = arith.addf %22, %24 : vector<8x16x2xf32>
    %cst_22 = arith.constant 0.000000e+00 : f32
    %26 = vector.broadcast %cst_22 : f32 to vector<8x16x2xf32>
    %27 = arith.maximumf %25, %26 : vector<8x16x2xf32>
    %28 = tpu.concatenate %15, %27 in 2 : vector<8x16x2xf32>, vector<8x16x2xf32> -> vector<8x16x4xf32>
    %c1 = arith.constant 1 : index
    %c1_23 = arith.constant 1 : index
    %c0_24 = arith.constant 0 : index
    %29 = vector.load %arg17[%c1, %c1_23, %c0_24] : memref<10x18x4xf32, #tpu.memory_space<vmem>>, vector<8x16x4xf32>
    tpu.vector_store %arg17[%c1, %c1_23, %c0_24], %28 {strides = array<i32>} : memref<10x18x4xf32, #tpu.memory_space<vmem>>, vector<8x16x4xf32>,
    %c0_25 = arith.constant 0 : index
    %c0_26 = arith.constant 0 : index
    %c0_27 = arith.constant 0 : index
    %c0_28 = arith.constant 0 : index
    %30 = vector.load %arg3[%c0_25, %c0_26, %c0_27, %c0_28] : memref<1x1x16x2xf32, #tpu.memory_space<vmem>>, vector<1x1x16x2xf32>
    %31 = vector.shape_cast %30 : vector<1x1x16x2xf32> to vector<16x2xf32>
    %c0_29 = arith.constant 0 : index
    %c0_30 = arith.constant 0 : index
    %32 = vector.load %arg8[%c0_29, %c0_30] : memref<1x2xf32, #tpu.memory_space<vmem>>, vector<1x2xf32>
    %c0_31 = arith.constant 0 : index
    %c0_32 = arith.constant 0 : index
    %33 = vector.load %arg9[%c0_31, %c0_32] : memref<1x2xf32, #tpu.memory_space<vmem>>, vector<1x2xf32>
    %34 = vector.broadcast %32 : vector<1x2xf32> to vector<16x2xf32>
    %35 = arith.mulf %31, %34 : vector<16x2xf32>
    %36 = vector.broadcast %33 : vector<1x2xf32> to vector<16x2xf32>
    %37 = arith.addf %35, %36 : vector<16x2xf32>
    %cst_33 = arith.constant 0.000000e+00 : f32
    %38 = vector.broadcast %cst_33 : f32 to vector<16x2xf32>
    %39 = arith.maximumf %37, %38 : vector<16x2xf32>
    %c0_34 = arith.constant 0 : index
    %c0_35 = arith.constant 0 : index
    %c0_36 = arith.constant 0 : index
    %c0_37 = arith.constant 0 : index
    %40 = vector.load %arg6[%c0_34, %c0_35, %c0_36, %c0_37] : memref<1x1x16x2xf32, #tpu.memory_space<vmem>>, vector<1x1x16x2xf32>
    %41 = vector.shape_cast %40 : vector<1x1x16x2xf32> to vector<16x2xf32>
    %c0_38 = arith.constant 0 : index
    %c0_39 = arith.constant 0 : index
    %42 = vector.load %arg10[%c0_38, %c0_39] : memref<1x2xf32, #tpu.memory_space<vmem>>, vector<1x2xf32>
    %c0_40 = arith.constant 0 : index
    %c0_41 = arith.constant 0 : index
    %43 = vector.load %arg11[%c0_40, %c0_41] : memref<1x2xf32, #tpu.memory_space<vmem>>, vector<1x2xf32>
    %44 = vector.broadcast %42 : vector<1x2xf32> to vector<16x2xf32>
    %45 = arith.mulf %41, %44 : vector<16x2xf32>
    %46 = vector.broadcast %43 : vector<1x2xf32> to vector<16x2xf32>
    %47 = arith.addf %45, %46 : vector<16x2xf32>
    %cst_42 = arith.constant 0.000000e+00 : f32
    %48 = vector.broadcast %cst_42 : f32 to vector<16x2xf32>
    %49 = arith.maximumf %47, %48 : vector<16x2xf32>
    %50 = tpu.concatenate %39, %49 in 1 : vector<16x2xf32>, vector<16x2xf32> -> vector<16x4xf32>
    %c0_i32 = arith.constant 0 : i32
    %51 = arith.cmpi sgt, %arg1, %c0_i32 : i32
    %cst_43 = arith.constant 0.000000e+00 : f32
    %52 = vector.broadcast %cst_43 : f32 to vector<16x4xf32>
    %53 = arith.select %51, %50, %52 : vector<16x4xf32>
    %54 = vector.shape_cast %53 : vector<16x4xf32> to vector<1x16x4xf32>
    %c0_44 = arith.constant 0 : index
    %c1_45 = arith.constant 1 : index
    %c0_46 = arith.constant 0 : index
    %55 = vector.load %arg17[%c0_44, %c1_45, %c0_46] : memref<10x18x4xf32, #tpu.memory_space<vmem>>, vector<1x16x4xf32>
    tpu.vector_store %arg17[%c0_44, %c1_45, %c0_46], %54 {strides = array<i32>} : memref<10x18x4xf32, #tpu.memory_space<vmem>>, vector<1x16x4xf32>,
    %c0_47 = arith.constant 0 : index
    %c0_48 = arith.constant 0 : index
    %c0_49 = arith.constant 0 : index
    %c0_50 = arith.constant 0 : index
    %56 = vector.load %arg4[%c0_47, %c0_48, %c0_49, %c0_50] : memref<1x1x16x2xf32, #tpu.memory_space<vmem>>, vector<1x1x16x2xf32>
    %57 = vector.shape_cast %56 : vector<1x1x16x2xf32> to vector<16x2xf32>
    %c0_51 = arith.constant 0 : index
    %c0_52 = arith.constant 0 : index
    %58 = vector.load %arg8[%c0_51, %c0_52] : memref<1x2xf32, #tpu.memory_space<vmem>>, vector<1x2xf32>
    %c0_53 = arith.constant 0 : index
    %c0_54 = arith.constant 0 : index
    %59 = vector.load %arg9[%c0_53, %c0_54] : memref<1x2xf32, #tpu.memory_space<vmem>>, vector<1x2xf32>
    %60 = vector.broadcast %58 : vector<1x2xf32> to vector<16x2xf32>
    %61 = arith.mulf %57, %60 : vector<16x2xf32>
    %62 = vector.broadcast %59 : vector<1x2xf32> to vector<16x2xf32>
    %63 = arith.addf %61, %62 : vector<16x2xf32>
    %cst_55 = arith.constant 0.000000e+00 : f32
    %64 = vector.broadcast %cst_55 : f32 to vector<16x2xf32>
    %65 = arith.maximumf %63, %64 : vector<16x2xf32>
    %c0_56 = arith.constant 0 : index
    %c0_57 = arith.constant 0 : index
    %c0_58 = arith.constant 0 : index
    %c0_59 = arith.constant 0 : index
    %66 = vector.load %arg7[%c0_56, %c0_57, %c0_58, %c0_59] : memref<1x1x16x2xf32, #tpu.memory_space<vmem>>, vector<1x1x16x2xf32>
    %67 = vector.shape_cast %66 : vector<1x1x16x2xf32> to vector<16x2xf32>
    %c0_60 = arith.constant 0 : index
    %c0_61 = arith.constant 0 : index
    %68 = vector.load %arg10[%c0_60, %c0_61] : memref<1x2xf32, #tpu.memory_space<vmem>>, vector<1x2xf32>
    %c0_62 = arith.constant 0 : index
    %c0_63 = arith.constant 0 : index
    %69 = vector.load %arg11[%c0_62, %c0_63] : memref<1x2xf32, #tpu.memory_space<vmem>>, vector<1x2xf32>
    %70 = vector.broadcast %68 : vector<1x2xf32> to vector<16x2xf32>
    %71 = arith.mulf %67, %70 : vector<16x2xf32>
    %72 = vector.broadcast %69 : vector<1x2xf32> to vector<16x2xf32>
    %73 = arith.addf %71, %72 : vector<16x2xf32>
    %cst_64 = arith.constant 0.000000e+00 : f32
    %74 = vector.broadcast %cst_64 : f32 to vector<16x2xf32>
    %75 = arith.maximumf %73, %74 : vector<16x2xf32>
    %76 = tpu.concatenate %65, %75 in 1 : vector<16x2xf32>, vector<16x2xf32> -> vector<16x4xf32>
    %c1_i32 = arith.constant 1 : i32
    %77 = arith.cmpi slt, %arg1, %c1_i32 : i32
    %cst_65 = arith.constant 0.000000e+00 : f32
    %78 = vector.broadcast %cst_65 : f32 to vector<16x4xf32>
    %79 = arith.select %77, %76, %78 : vector<16x4xf32>
    %80 = vector.shape_cast %79 : vector<16x4xf32> to vector<1x16x4xf32>
    %c9 = arith.constant 9 : index
    %c1_66 = arith.constant 1 : index
    %c0_67 = arith.constant 0 : index
    %81 = vector.load %arg17[%c9, %c1_66, %c0_67] : memref<10x18x4xf32, #tpu.memory_space<vmem>>, vector<1x16x4xf32>
    tpu.vector_store %arg17[%c9, %c1_66, %c0_67], %80 {strides = array<i32>} : memref<10x18x4xf32, #tpu.memory_space<vmem>>, vector<1x16x4xf32>,
    %cst_68 = arith.constant 0.000000e+00 : f32
    %82 = vector.broadcast %cst_68 : f32 to vector<128x4xf32>
    %c0_69 = arith.constant 0 : index
    %c0_70 = arith.constant 0 : index
    %c0_71 = arith.constant 0 : index
    %83 = vector.load %arg17[%c0_69, %c0_70, %c0_71] : memref<10x18x4xf32, #tpu.memory_space<vmem>>, vector<8x16x4xf32>
    %c0_72 = arith.constant 0 : index
    %c1_73 = arith.constant 1 : index
    %c0_74 = arith.constant 0 : index
    %84 = vector.load %arg17[%c0_72, %c1_73, %c0_74] : memref<10x18x4xf32, #tpu.memory_space<vmem>>, vector<8x16x4xf32>
    %c0_75 = arith.constant 0 : index
    %c2 = arith.constant 2 : index
    %c0_76 = arith.constant 0 : index
    %85 = vector.load %arg17[%c0_75, %c2, %c0_76] : memref<10x18x4xf32, #tpu.memory_space<vmem>>, vector<8x16x4xf32>
    %86 = tpu.concatenate %83, %84, %85 in 2 : vector<8x16x4xf32>, vector<8x16x4xf32>, vector<8x16x4xf32> -> vector<8x16x12xf32>
    %87 = vector.shape_cast %86 : vector<8x16x12xf32> to vector<128x12xf32>
    %88 = arith.truncf %87 : vector<128x12xf32> to vector<128x12xbf16>
    %c0_77 = arith.constant 0 : index
    %c0_78 = arith.constant 0 : index
    %c0_79 = arith.constant 0 : index
    %89 = vector.load %arg12[%c0_77, %c0_78, %c0_79] : memref<3x12x4xbf16, #tpu.memory_space<vmem>>, vector<1x12x4xbf16>
    %90 = vector.shape_cast %89 : vector<1x12x4xbf16> to vector<12x4xbf16>
    %cst_80 = arith.constant dense<0.000000e+00> : vector<128x4xf32>
    %91 = tpu.matmul %88, %90, %cst_80 {dimension_numbers = #tpu.dot_dimension_numbers<[1], [0], [0], [1], [0, 0, 1, 1], [], []>} : vector<128x12xbf16>, vector<12x4xbf16>, vector<128x4xf32> -> vector<128x4xf32>
    %92 = arith.addf %82, %91 : vector<128x4xf32>
    %c1_81 = arith.constant 1 : index
    %c0_82 = arith.constant 0 : index
    %c0_83 = arith.constant 0 : index
    %93 = vector.load %arg17[%c1_81, %c0_82, %c0_83] : memref<10x18x4xf32, #tpu.memory_space<vmem>>, vector<8x16x4xf32>
    %c1_84 = arith.constant 1 : index
    %c1_85 = arith.constant 1 : index
    %c0_86 = arith.constant 0 : index
    %94 = vector.load %arg17[%c1_84, %c1_85, %c0_86] : memref<10x18x4xf32, #tpu.memory_space<vmem>>, vector<8x16x4xf32>
    %c1_87 = arith.constant 1 : index
    %c2_88 = arith.constant 2 : index
    %c0_89 = arith.constant 0 : index
    %95 = vector.load %arg17[%c1_87, %c2_88, %c0_89] : memref<10x18x4xf32, #tpu.memory_space<vmem>>, vector<8x16x4xf32>
    %96 = tpu.concatenate %93, %94, %95 in 2 : vector<8x16x4xf32>, vector<8x16x4xf32>, vector<8x16x4xf32> -> vector<8x16x12xf32>
    %97 = vector.shape_cast %96 : vector<8x16x12xf32> to vector<128x12xf32>
    %98 = arith.truncf %97 : vector<128x12xf32> to vector<128x12xbf16>
    %c1_90 = arith.constant 1 : index
    %c0_91 = arith.constant 0 : index
    %c0_92 = arith.constant 0 : index
    %99 = vector.load %arg12[%c1_90, %c0_91, %c0_92] : memref<3x12x4xbf16, #tpu.memory_space<vmem>>, vector<1x12x4xbf16>
    %100 = vector.shape_cast %99 : vector<1x12x4xbf16> to vector<12x4xbf16>
    %cst_93 = arith.constant dense<0.000000e+00> : vector<128x4xf32>
    %101 = tpu.matmul %98, %100, %cst_93 {dimension_numbers = #tpu.dot_dimension_numbers<[1], [0], [0], [1], [0, 0, 1, 1], [], []>} : vector<128x12xbf16>, vector<12x4xbf16>, vector<128x4xf32> -> vector<128x4xf32>
    %102 = arith.addf %92, %101 : vector<128x4xf32>
    %c2_94 = arith.constant 2 : index
    %c0_95 = arith.constant 0 : index
    %c0_96 = arith.constant 0 : index
    %103 = vector.load %arg17[%c2_94, %c0_95, %c0_96] : memref<10x18x4xf32, #tpu.memory_space<vmem>>, vector<8x16x4xf32>
    %c2_97 = arith.constant 2 : index
    %c1_98 = arith.constant 1 : index
    %c0_99 = arith.constant 0 : index
    %104 = vector.load %arg17[%c2_97, %c1_98, %c0_99] : memref<10x18x4xf32, #tpu.memory_space<vmem>>, vector<8x16x4xf32>
    %c2_100 = arith.constant 2 : index
    %c2_101 = arith.constant 2 : index
    %c0_102 = arith.constant 0 : index
    %105 = vector.load %arg17[%c2_100, %c2_101, %c0_102] : memref<10x18x4xf32, #tpu.memory_space<vmem>>, vector<8x16x4xf32>
    %106 = tpu.concatenate %103, %104, %105 in 2 : vector<8x16x4xf32>, vector<8x16x4xf32>, vector<8x16x4xf32> -> vector<8x16x12xf32>
    %107 = vector.shape_cast %106 : vector<8x16x12xf32> to vector<128x12xf32>
    %108 = arith.truncf %107 : vector<128x12xf32> to vector<128x12xbf16>
    %c2_103 = arith.constant 2 : index
    %c0_104 = arith.constant 0 : index
    %c0_105 = arith.constant 0 : index
    %109 = vector.load %arg12[%c2_103, %c0_104, %c0_105] : memref<3x12x4xbf16, #tpu.memory_space<vmem>>, vector<1x12x4xbf16>
    %110 = vector.shape_cast %109 : vector<1x12x4xbf16> to vector<12x4xbf16>
    %cst_106 = arith.constant dense<0.000000e+00> : vector<128x4xf32>
    %111 = tpu.matmul %108, %110, %cst_106 {dimension_numbers = #tpu.dot_dimension_numbers<[1], [0], [0], [1], [0, 0, 1, 1], [], []>} : vector<128x12xbf16>, vector<12x4xbf16>, vector<128x4xf32> -> vector<128x4xf32>
    %112 = arith.addf %102, %111 : vector<128x4xf32>
    %c0_107 = arith.constant 0 : index
    %c0_108 = arith.constant 0 : index
    %113 = vector.load %arg13[%c0_107, %c0_108] : memref<1x4xf32, #tpu.memory_space<vmem>>, vector<1x4xf32>
    %114 = vector.broadcast %113 : vector<1x4xf32> to vector<128x4xf32>
    %115 = arith.addf %112, %114 : vector<128x4xf32>
    %116 = vector.shape_cast %115 : vector<128x4xf32> to vector<1x8x16x4xf32>
    %c0_109 = arith.constant 0 : index
    %c0_110 = arith.constant 0 : index
    %c0_111 = arith.constant 0 : index
    %c0_112 = arith.constant 0 : index
    %117 = vector.load %arg14[%c0_109, %c0_110, %c0_111, %c0_112] : memref<1x8x16x4xf32, #tpu.memory_space<vmem>>, vector<1x8x16x4xf32>
    tpu.vector_store %arg14[%c0_109, %c0_110, %c0_111, %c0_112], %116 {strides = array<i32>} : memref<1x8x16x4xf32, #tpu.memory_space<vmem>>, vector<1x8x16x4xf32>,
    %cst_113 = arith.constant dense<0.000000e+00> : vector<4xf32>
    %118 = vector.multi_reduction <add>, %115, %cst_113 [0] : vector<128x4xf32> to vector<4xf32>
    %119 = vector.shape_cast %118 : vector<4xf32> to vector<1x4xf32>
    %120 = vector.shape_cast %119 : vector<1x4xf32> to vector<1x1x1x4xf32>
    %121 = vector.shape_cast %120 : vector<1x1x1x4xf32> to vector<1x1x1x4xf32>
    %122 = vector.broadcast %121 : vector<1x1x1x4xf32> to vector<1x1x8x4xf32>
    %c0_114 = arith.constant 0 : index
    %c0_115 = arith.constant 0 : index
    %c0_116 = arith.constant 0 : index
    %c0_117 = arith.constant 0 : index
    %123 = vector.load %arg15[%c0_114, %c0_115, %c0_116, %c0_117] : memref<1x1x8x4xf32, #tpu.memory_space<vmem>>, vector<1x1x8x4xf32>
    tpu.vector_store %arg15[%c0_114, %c0_115, %c0_116, %c0_117], %122 {strides = array<i32>} : memref<1x1x8x4xf32, #tpu.memory_space<vmem>>, vector<1x1x8x4xf32>,
    %124 = arith.mulf %115, %115 : vector<128x4xf32>
    %cst_118 = arith.constant dense<0.000000e+00> : vector<4xf32>
    %125 = vector.multi_reduction <add>, %124, %cst_118 [0] : vector<128x4xf32> to vector<4xf32>
    %126 = vector.shape_cast %125 : vector<4xf32> to vector<1x4xf32>
    %127 = vector.shape_cast %126 : vector<1x4xf32> to vector<1x1x1x4xf32>
    %128 = vector.shape_cast %127 : vector<1x1x1x4xf32> to vector<1x1x1x4xf32>
    %129 = vector.broadcast %128 : vector<1x1x1x4xf32> to vector<1x1x8x4xf32>
    %c0_119 = arith.constant 0 : index
    %c0_120 = arith.constant 0 : index
    %c0_121 = arith.constant 0 : index
    %c0_122 = arith.constant 0 : index
    %130 = vector.load %arg16[%c0_119, %c0_120, %c0_121, %c0_122] : memref<1x1x8x4xf32, #tpu.memory_space<vmem>>, vector<1x1x8x4xf32>
    tpu.vector_store %arg16[%c0_119, %c0_120, %c0_121, %c0_122], %129 {strides = array<i32>} : memref<1x1x8x4xf32, #tpu.memory_space<vmem>>, vector<1x1x8x4xf32>,
    return
  }
  func.func @transform_0(%arg0: i32, %arg1: i32) -> (i32, i32, i32, i32) {
    %c0_i32 = arith.constant 0 : i32
    %c0_i32_0 = arith.constant 0 : i32
    %c0_i32_1 = arith.constant 0 : i32
    return %arg0, %arg1, %c0_i32, %c0_i32_0 : i32, i32, i32, i32
  }
  func.func @transform_1(%arg0: i32, %arg1: i32) -> (i32, i32, i32, i32) {
    %c8_i32 = arith.constant 8 : i32
    %0 = arith.muli %arg1, %c8_i32 : i32
    %c1_i32 = arith.constant 1 : i32
    %1 = arith.subi %0, %c1_i32 : i32
    %c0_i32 = arith.constant 0 : i32
    %2 = arith.maxsi %1, %c0_i32 : i32
    %c0_i32_0 = arith.constant 0 : i32
    %c0_i32_1 = arith.constant 0 : i32
    %c0_i32_2 = arith.constant 0 : i32
    return %arg0, %2, %c0_i32_0, %c0_i32_1 : i32, i32, i32, i32
  }
  func.func @transform_2(%arg0: i32, %arg1: i32) -> (i32, i32, i32, i32) {
    %c1_i32 = arith.constant 1 : i32
    %0 = arith.addi %arg1, %c1_i32 : i32
    %c8_i32 = arith.constant 8 : i32
    %1 = arith.muli %0, %c8_i32 : i32
    %c15_i32 = arith.constant 15 : i32
    %2 = arith.minsi %1, %c15_i32 : i32
    %c0_i32 = arith.constant 0 : i32
    %c0_i32_0 = arith.constant 0 : i32
    %c0_i32_1 = arith.constant 0 : i32
    return %arg0, %2, %c0_i32, %c0_i32_0 : i32, i32, i32, i32
  }
  func.func @transform_3(%arg0: i32, %arg1: i32) -> (i32, i32, i32, i32) {
    %c0_i32 = arith.constant 0 : i32
    %c0_i32_0 = arith.constant 0 : i32
    %c0_i32_1 = arith.constant 0 : i32
    return %arg0, %arg1, %c0_i32, %c0_i32_0 : i32, i32, i32, i32
  }
  func.func @transform_4(%arg0: i32, %arg1: i32) -> (i32, i32, i32, i32) {
    %c8_i32 = arith.constant 8 : i32
    %0 = arith.muli %arg1, %c8_i32 : i32
    %c1_i32 = arith.constant 1 : i32
    %1 = arith.subi %0, %c1_i32 : i32
    %c0_i32 = arith.constant 0 : i32
    %2 = arith.maxsi %1, %c0_i32 : i32
    %c0_i32_0 = arith.constant 0 : i32
    %c0_i32_1 = arith.constant 0 : i32
    %c0_i32_2 = arith.constant 0 : i32
    return %arg0, %2, %c0_i32_0, %c0_i32_1 : i32, i32, i32, i32
  }
  func.func @transform_5(%arg0: i32, %arg1: i32) -> (i32, i32, i32, i32) {
    %c1_i32 = arith.constant 1 : i32
    %0 = arith.addi %arg1, %c1_i32 : i32
    %c8_i32 = arith.constant 8 : i32
    %1 = arith.muli %0, %c8_i32 : i32
    %c15_i32 = arith.constant 15 : i32
    %2 = arith.minsi %1, %c15_i32 : i32
    %c0_i32 = arith.constant 0 : i32
    %c0_i32_0 = arith.constant 0 : i32
    %c0_i32_1 = arith.constant 0 : i32
    return %arg0, %2, %c0_i32, %c0_i32_0 : i32, i32, i32, i32
  }
  func.func @transform_6(%arg0: i32, %arg1: i32) -> (i32, i32) {
    %c0_i32 = arith.constant 0 : i32
    %c0_i32_0 = arith.constant 0 : i32
    %c0_i32_1 = arith.constant 0 : i32
    return %c0_i32, %c0_i32_0 : i32, i32
  }
  func.func @transform_7(%arg0: i32, %arg1: i32) -> (i32, i32) {
    %c0_i32 = arith.constant 0 : i32
    %c0_i32_0 = arith.constant 0 : i32
    %c0_i32_1 = arith.constant 0 : i32
    return %c0_i32, %c0_i32_0 : i32, i32
  }
  func.func @transform_8(%arg0: i32, %arg1: i32) -> (i32, i32) {
    %c0_i32 = arith.constant 0 : i32
    %c0_i32_0 = arith.constant 0 : i32
    %c0_i32_1 = arith.constant 0 : i32
    return %c0_i32, %c0_i32_0 : i32, i32
  }
  func.func @transform_9(%arg0: i32, %arg1: i32) -> (i32, i32) {
    %c0_i32 = arith.constant 0 : i32
    %c0_i32_0 = arith.constant 0 : i32
    %c0_i32_1 = arith.constant 0 : i32
    return %c0_i32, %c0_i32_0 : i32, i32
  }
  func.func @transform_10(%arg0: i32, %arg1: i32) -> (i32, i32, i32) {
    %c0_i32 = arith.constant 0 : i32
    %c0_i32_0 = arith.constant 0 : i32
    %c0_i32_1 = arith.constant 0 : i32
    %c0_i32_2 = arith.constant 0 : i32
    return %c0_i32, %c0_i32_0, %c0_i32_1 : i32, i32, i32
  }
  func.func @transform_11(%arg0: i32, %arg1: i32) -> (i32, i32) {
    %c0_i32 = arith.constant 0 : i32
    %c0_i32_0 = arith.constant 0 : i32
    %c0_i32_1 = arith.constant 0 : i32
    return %c0_i32, %c0_i32_0 : i32, i32
  }
  func.func @transform_12(%arg0: i32, %arg1: i32) -> (i32, i32, i32, i32) {
    %c0_i32 = arith.constant 0 : i32
    %c0_i32_0 = arith.constant 0 : i32
    %c0_i32_1 = arith.constant 0 : i32
    return %arg0, %arg1, %c0_i32, %c0_i32_0 : i32, i32, i32, i32
  }
  func.func @transform_13(%arg0: i32, %arg1: i32) -> (i32, i32, i32, i32) {
    %c0_i32 = arith.constant 0 : i32
    %c0_i32_0 = arith.constant 0 : i32
    %c0_i32_1 = arith.constant 0 : i32
    return %arg0, %arg1, %c0_i32, %c0_i32_0 : i32, i32, i32, i32
  }
  func.func @transform_14(%arg0: i32, %arg1: i32) -> (i32, i32, i32, i32) {
    %c0_i32 = arith.constant 0 : i32
    %c0_i32_0 = arith.constant 0 : i32
    %c0_i32_1 = arith.constant 0 : i32
    return %arg0, %arg1, %c0_i32, %c0_i32_0 : i32, i32, i32, i32
  }
}

module attributes {stable_mosaic.version = 11 : i64} {
  func.func @_bn_relu_conv2_kernel(%arg0: i32, %arg1: i32, %arg2: memref<1x8x16x4xf32, #tpu.memory_space<vmem>>, %arg3: memref<1x1x16x4xf32, #tpu.memory_space<vmem>>, %arg4: memref<1x1x16x4xf32, #tpu.memory_space<vmem>>, %arg5: memref<1x4xf32, #tpu.memory_space<vmem>>, %arg6: memref<1x4xf32, #tpu.memory_space<vmem>>, %arg7: memref<3x12x4xbf16, #tpu.memory_space<vmem>>, %arg8: memref<1x4xf32, #tpu.memory_space<vmem>>, %arg9: memref<1x8x16x4xf32, #tpu.memory_space<vmem>>, %arg10: memref<10x18x4xf32, #tpu.memory_space<vmem>>) attributes {dimension_semantics = [#tpu.dimension_semantics<parallel>, #tpu.dimension_semantics<parallel>], iteration_bounds = array<i64: 2, 2>, scalar_prefetch = 0 : i64, scratch_operands = 1 : i64, tpu.core_type = #tpu.core_type<tc>, window_params = [{transform_indices = @transform_0, window_bounds = array<i64: 1, 8, 16, 4>}, {transform_indices = @transform_1, window_bounds = array<i64: 1, 1, 16, 4>}, {transform_indices = @transform_2, window_bounds = array<i64: 1, 1, 16, 4>}, {pipeline_mode = #tpu.pipeline_mode<synchronous>, transform_indices = @transform_3, window_bounds = array<i64: 1, 4>}, {pipeline_mode = #tpu.pipeline_mode<synchronous>, transform_indices = @transform_4, window_bounds = array<i64: 1, 4>}, {pipeline_mode = #tpu.pipeline_mode<synchronous>, transform_indices = @transform_5, window_bounds = array<i64: 3, 12, 4>}, {pipeline_mode = #tpu.pipeline_mode<synchronous>, transform_indices = @transform_6, window_bounds = array<i64: 1, 4>}, {transform_indices = @transform_7, window_bounds = array<i64: 1, 8, 16, 4>}]} {
    %cst = arith.constant 0.000000e+00 : f32
    %0 = vector.broadcast %cst : f32 to vector<10x1x4xf32>
    %c0 = arith.constant 0 : index
    %c0_0 = arith.constant 0 : index
    %c0_1 = arith.constant 0 : index
    %1 = vector.load %arg10[%c0, %c0_0, %c0_1] : memref<10x18x4xf32, #tpu.memory_space<vmem>>, vector<10x1x4xf32>
    tpu.vector_store %arg10[%c0, %c0_0, %c0_1], %0 {strides = array<i32>} : memref<10x18x4xf32, #tpu.memory_space<vmem>>, vector<10x1x4xf32>,
    %cst_2 = arith.constant 0.000000e+00 : f32
    %2 = vector.broadcast %cst_2 : f32 to vector<10x1x4xf32>
    %c0_3 = arith.constant 0 : index
    %c17 = arith.constant 17 : index
    %c0_4 = arith.constant 0 : index
    %3 = vector.load %arg10[%c0_3, %c17, %c0_4] : memref<10x18x4xf32, #tpu.memory_space<vmem>>, vector<10x1x4xf32>
    tpu.vector_store %arg10[%c0_3, %c17, %c0_4], %2 {strides = array<i32>} : memref<10x18x4xf32, #tpu.memory_space<vmem>>, vector<10x1x4xf32>,
    %c0_5 = arith.constant 0 : index
    %c0_6 = arith.constant 0 : index
    %c0_7 = arith.constant 0 : index
    %c0_8 = arith.constant 0 : index
    %4 = vector.load %arg2[%c0_5, %c0_6, %c0_7, %c0_8] : memref<1x8x16x4xf32, #tpu.memory_space<vmem>>, vector<1x8x16x4xf32>
    %5 = vector.shape_cast %4 : vector<1x8x16x4xf32> to vector<8x16x4xf32>
    %c0_9 = arith.constant 0 : index
    %c0_10 = arith.constant 0 : index
    %6 = vector.load %arg5[%c0_9, %c0_10] : memref<1x4xf32, #tpu.memory_space<vmem>>, vector<1x4xf32>
    %7 = vector.shape_cast %6 : vector<1x4xf32> to vector<1x1x4xf32>
    %8 = vector.broadcast %7 : vector<1x1x4xf32> to vector<8x16x4xf32>
    %9 = arith.mulf %5, %8 : vector<8x16x4xf32>
    %c0_11 = arith.constant 0 : index
    %c0_12 = arith.constant 0 : index
    %10 = vector.load %arg6[%c0_11, %c0_12] : memref<1x4xf32, #tpu.memory_space<vmem>>, vector<1x4xf32>
    %11 = vector.shape_cast %10 : vector<1x4xf32> to vector<1x1x4xf32>
    %12 = vector.broadcast %11 : vector<1x1x4xf32> to vector<8x16x4xf32>
    %13 = arith.addf %9, %12 : vector<8x16x4xf32>
    %cst_13 = arith.constant 0.000000e+00 : f32
    %14 = vector.broadcast %cst_13 : f32 to vector<8x16x4xf32>
    %15 = arith.maximumf %13, %14 : vector<8x16x4xf32>
    %c1 = arith.constant 1 : index
    %c1_14 = arith.constant 1 : index
    %c0_15 = arith.constant 0 : index
    %16 = vector.load %arg10[%c1, %c1_14, %c0_15] : memref<10x18x4xf32, #tpu.memory_space<vmem>>, vector<8x16x4xf32>
    tpu.vector_store %arg10[%c1, %c1_14, %c0_15], %15 {strides = array<i32>} : memref<10x18x4xf32, #tpu.memory_space<vmem>>, vector<8x16x4xf32>,
    %c0_i32 = arith.constant 0 : i32
    %17 = arith.cmpi sgt, %arg1, %c0_i32 : i32
    %c0_16 = arith.constant 0 : index
    %c0_17 = arith.constant 0 : index
    %c0_18 = arith.constant 0 : index
    %c0_19 = arith.constant 0 : index
    %18 = vector.load %arg3[%c0_16, %c0_17, %c0_18, %c0_19] : memref<1x1x16x4xf32, #tpu.memory_space<vmem>>, vector<1x1x16x4xf32>
    %19 = vector.shape_cast %18 : vector<1x1x16x4xf32> to vector<16x4xf32>
    %c0_20 = arith.constant 0 : index
    %c0_21 = arith.constant 0 : index
    %20 = vector.load %arg5[%c0_20, %c0_21] : memref<1x4xf32, #tpu.memory_space<vmem>>, vector<1x4xf32>
    %21 = vector.broadcast %20 : vector<1x4xf32> to vector<16x4xf32>
    %22 = arith.mulf %19, %21 : vector<16x4xf32>
    %c0_22 = arith.constant 0 : index
    %c0_23 = arith.constant 0 : index
    %23 = vector.load %arg6[%c0_22, %c0_23] : memref<1x4xf32, #tpu.memory_space<vmem>>, vector<1x4xf32>
    %24 = vector.broadcast %23 : vector<1x4xf32> to vector<16x4xf32>
    %25 = arith.addf %22, %24 : vector<16x4xf32>
    %cst_24 = arith.constant 0.000000e+00 : f32
    %26 = vector.broadcast %cst_24 : f32 to vector<16x4xf32>
    %27 = arith.maximumf %25, %26 : vector<16x4xf32>
    %cst_25 = arith.constant 0.000000e+00 : f32
    %28 = vector.broadcast %cst_25 : f32 to vector<16x4xf32>
    %29 = arith.select %17, %27, %28 : vector<16x4xf32>
    %30 = vector.shape_cast %29 : vector<16x4xf32> to vector<1x16x4xf32>
    %c0_26 = arith.constant 0 : index
    %c1_27 = arith.constant 1 : index
    %c0_28 = arith.constant 0 : index
    %31 = vector.load %arg10[%c0_26, %c1_27, %c0_28] : memref<10x18x4xf32, #tpu.memory_space<vmem>>, vector<1x16x4xf32>
    tpu.vector_store %arg10[%c0_26, %c1_27, %c0_28], %30 {strides = array<i32>} : memref<10x18x4xf32, #tpu.memory_space<vmem>>, vector<1x16x4xf32>,
    %c1_i32 = arith.constant 1 : i32
    %32 = arith.cmpi slt, %arg1, %c1_i32 : i32
    %c0_29 = arith.constant 0 : index
    %c0_30 = arith.constant 0 : index
    %c0_31 = arith.constant 0 : index
    %c0_32 = arith.constant 0 : index
    %33 = vector.load %arg4[%c0_29, %c0_30, %c0_31, %c0_32] : memref<1x1x16x4xf32, #tpu.memory_space<vmem>>, vector<1x1x16x4xf32>
    %34 = vector.shape_cast %33 : vector<1x1x16x4xf32> to vector<16x4xf32>
    %c0_33 = arith.constant 0 : index
    %c0_34 = arith.constant 0 : index
    %35 = vector.load %arg5[%c0_33, %c0_34] : memref<1x4xf32, #tpu.memory_space<vmem>>, vector<1x4xf32>
    %36 = vector.broadcast %35 : vector<1x4xf32> to vector<16x4xf32>
    %37 = arith.mulf %34, %36 : vector<16x4xf32>
    %c0_35 = arith.constant 0 : index
    %c0_36 = arith.constant 0 : index
    %38 = vector.load %arg6[%c0_35, %c0_36] : memref<1x4xf32, #tpu.memory_space<vmem>>, vector<1x4xf32>
    %39 = vector.broadcast %38 : vector<1x4xf32> to vector<16x4xf32>
    %40 = arith.addf %37, %39 : vector<16x4xf32>
    %cst_37 = arith.constant 0.000000e+00 : f32
    %41 = vector.broadcast %cst_37 : f32 to vector<16x4xf32>
    %42 = arith.maximumf %40, %41 : vector<16x4xf32>
    %cst_38 = arith.constant 0.000000e+00 : f32
    %43 = vector.broadcast %cst_38 : f32 to vector<16x4xf32>
    %44 = arith.select %32, %42, %43 : vector<16x4xf32>
    %45 = vector.shape_cast %44 : vector<16x4xf32> to vector<1x16x4xf32>
    %c9 = arith.constant 9 : index
    %c1_39 = arith.constant 1 : index
    %c0_40 = arith.constant 0 : index
    %46 = vector.load %arg10[%c9, %c1_39, %c0_40] : memref<10x18x4xf32, #tpu.memory_space<vmem>>, vector<1x16x4xf32>
    tpu.vector_store %arg10[%c9, %c1_39, %c0_40], %45 {strides = array<i32>} : memref<10x18x4xf32, #tpu.memory_space<vmem>>, vector<1x16x4xf32>,
    %cst_41 = arith.constant 0.000000e+00 : f32
    %47 = vector.broadcast %cst_41 : f32 to vector<128x4xf32>
    %c0_42 = arith.constant 0 : index
    %c0_43 = arith.constant 0 : index
    %c0_44 = arith.constant 0 : index
    %48 = vector.load %arg10[%c0_42, %c0_43, %c0_44] : memref<10x18x4xf32, #tpu.memory_space<vmem>>, vector<8x16x4xf32>
    %c0_45 = arith.constant 0 : index
    %c1_46 = arith.constant 1 : index
    %c0_47 = arith.constant 0 : index
    %49 = vector.load %arg10[%c0_45, %c1_46, %c0_47] : memref<10x18x4xf32, #tpu.memory_space<vmem>>, vector<8x16x4xf32>
    %c0_48 = arith.constant 0 : index
    %c2 = arith.constant 2 : index
    %c0_49 = arith.constant 0 : index
    %50 = vector.load %arg10[%c0_48, %c2, %c0_49] : memref<10x18x4xf32, #tpu.memory_space<vmem>>, vector<8x16x4xf32>
    %51 = tpu.concatenate %48, %49, %50 in 2 : vector<8x16x4xf32>, vector<8x16x4xf32>, vector<8x16x4xf32> -> vector<8x16x12xf32>
    %52 = vector.shape_cast %51 : vector<8x16x12xf32> to vector<128x12xf32>
    %53 = arith.truncf %52 : vector<128x12xf32> to vector<128x12xbf16>
    %c0_50 = arith.constant 0 : index
    %c0_51 = arith.constant 0 : index
    %c0_52 = arith.constant 0 : index
    %54 = vector.load %arg7[%c0_50, %c0_51, %c0_52] : memref<3x12x4xbf16, #tpu.memory_space<vmem>>, vector<1x12x4xbf16>
    %55 = vector.shape_cast %54 : vector<1x12x4xbf16> to vector<12x4xbf16>
    %cst_53 = arith.constant dense<0.000000e+00> : vector<128x4xf32>
    %56 = tpu.matmul %53, %55, %cst_53 {dimension_numbers = #tpu.dot_dimension_numbers<[1], [0], [0], [1], [0, 0, 1, 1], [], []>} : vector<128x12xbf16>, vector<12x4xbf16>, vector<128x4xf32> -> vector<128x4xf32>
    %57 = arith.addf %47, %56 : vector<128x4xf32>
    %c1_54 = arith.constant 1 : index
    %c0_55 = arith.constant 0 : index
    %c0_56 = arith.constant 0 : index
    %58 = vector.load %arg10[%c1_54, %c0_55, %c0_56] : memref<10x18x4xf32, #tpu.memory_space<vmem>>, vector<8x16x4xf32>
    %c1_57 = arith.constant 1 : index
    %c1_58 = arith.constant 1 : index
    %c0_59 = arith.constant 0 : index
    %59 = vector.load %arg10[%c1_57, %c1_58, %c0_59] : memref<10x18x4xf32, #tpu.memory_space<vmem>>, vector<8x16x4xf32>
    %c1_60 = arith.constant 1 : index
    %c2_61 = arith.constant 2 : index
    %c0_62 = arith.constant 0 : index
    %60 = vector.load %arg10[%c1_60, %c2_61, %c0_62] : memref<10x18x4xf32, #tpu.memory_space<vmem>>, vector<8x16x4xf32>
    %61 = tpu.concatenate %58, %59, %60 in 2 : vector<8x16x4xf32>, vector<8x16x4xf32>, vector<8x16x4xf32> -> vector<8x16x12xf32>
    %62 = vector.shape_cast %61 : vector<8x16x12xf32> to vector<128x12xf32>
    %63 = arith.truncf %62 : vector<128x12xf32> to vector<128x12xbf16>
    %c1_63 = arith.constant 1 : index
    %c0_64 = arith.constant 0 : index
    %c0_65 = arith.constant 0 : index
    %64 = vector.load %arg7[%c1_63, %c0_64, %c0_65] : memref<3x12x4xbf16, #tpu.memory_space<vmem>>, vector<1x12x4xbf16>
    %65 = vector.shape_cast %64 : vector<1x12x4xbf16> to vector<12x4xbf16>
    %cst_66 = arith.constant dense<0.000000e+00> : vector<128x4xf32>
    %66 = tpu.matmul %63, %65, %cst_66 {dimension_numbers = #tpu.dot_dimension_numbers<[1], [0], [0], [1], [0, 0, 1, 1], [], []>} : vector<128x12xbf16>, vector<12x4xbf16>, vector<128x4xf32> -> vector<128x4xf32>
    %67 = arith.addf %57, %66 : vector<128x4xf32>
    %c2_67 = arith.constant 2 : index
    %c0_68 = arith.constant 0 : index
    %c0_69 = arith.constant 0 : index
    %68 = vector.load %arg10[%c2_67, %c0_68, %c0_69] : memref<10x18x4xf32, #tpu.memory_space<vmem>>, vector<8x16x4xf32>
    %c2_70 = arith.constant 2 : index
    %c1_71 = arith.constant 1 : index
    %c0_72 = arith.constant 0 : index
    %69 = vector.load %arg10[%c2_70, %c1_71, %c0_72] : memref<10x18x4xf32, #tpu.memory_space<vmem>>, vector<8x16x4xf32>
    %c2_73 = arith.constant 2 : index
    %c2_74 = arith.constant 2 : index
    %c0_75 = arith.constant 0 : index
    %70 = vector.load %arg10[%c2_73, %c2_74, %c0_75] : memref<10x18x4xf32, #tpu.memory_space<vmem>>, vector<8x16x4xf32>
    %71 = tpu.concatenate %68, %69, %70 in 2 : vector<8x16x4xf32>, vector<8x16x4xf32>, vector<8x16x4xf32> -> vector<8x16x12xf32>
    %72 = vector.shape_cast %71 : vector<8x16x12xf32> to vector<128x12xf32>
    %73 = arith.truncf %72 : vector<128x12xf32> to vector<128x12xbf16>
    %c2_76 = arith.constant 2 : index
    %c0_77 = arith.constant 0 : index
    %c0_78 = arith.constant 0 : index
    %74 = vector.load %arg7[%c2_76, %c0_77, %c0_78] : memref<3x12x4xbf16, #tpu.memory_space<vmem>>, vector<1x12x4xbf16>
    %75 = vector.shape_cast %74 : vector<1x12x4xbf16> to vector<12x4xbf16>
    %cst_79 = arith.constant dense<0.000000e+00> : vector<128x4xf32>
    %76 = tpu.matmul %73, %75, %cst_79 {dimension_numbers = #tpu.dot_dimension_numbers<[1], [0], [0], [1], [0, 0, 1, 1], [], []>} : vector<128x12xbf16>, vector<12x4xbf16>, vector<128x4xf32> -> vector<128x4xf32>
    %77 = arith.addf %67, %76 : vector<128x4xf32>
    %c0_80 = arith.constant 0 : index
    %c0_81 = arith.constant 0 : index
    %78 = vector.load %arg8[%c0_80, %c0_81] : memref<1x4xf32, #tpu.memory_space<vmem>>, vector<1x4xf32>
    %79 = vector.broadcast %78 : vector<1x4xf32> to vector<128x4xf32>
    %80 = arith.addf %77, %79 : vector<128x4xf32>
    %81 = vector.shape_cast %80 : vector<128x4xf32> to vector<1x8x16x4xf32>
    %c0_82 = arith.constant 0 : index
    %c0_83 = arith.constant 0 : index
    %c0_84 = arith.constant 0 : index
    %c0_85 = arith.constant 0 : index
    %82 = vector.load %arg9[%c0_82, %c0_83, %c0_84, %c0_85] : memref<1x8x16x4xf32, #tpu.memory_space<vmem>>, vector<1x8x16x4xf32>
    tpu.vector_store %arg9[%c0_82, %c0_83, %c0_84, %c0_85], %81 {strides = array<i32>} : memref<1x8x16x4xf32, #tpu.memory_space<vmem>>, vector<1x8x16x4xf32>,
    return
  }
  func.func @transform_0(%arg0: i32, %arg1: i32) -> (i32, i32, i32, i32) {
    %c0_i32 = arith.constant 0 : i32
    %c0_i32_0 = arith.constant 0 : i32
    %c0_i32_1 = arith.constant 0 : i32
    return %arg0, %arg1, %c0_i32, %c0_i32_0 : i32, i32, i32, i32
  }
  func.func @transform_1(%arg0: i32, %arg1: i32) -> (i32, i32, i32, i32) {
    %c8_i32 = arith.constant 8 : i32
    %0 = arith.muli %arg1, %c8_i32 : i32
    %c1_i32 = arith.constant 1 : i32
    %1 = arith.subi %0, %c1_i32 : i32
    %c0_i32 = arith.constant 0 : i32
    %2 = arith.maxsi %1, %c0_i32 : i32
    %c0_i32_0 = arith.constant 0 : i32
    %c0_i32_1 = arith.constant 0 : i32
    %c0_i32_2 = arith.constant 0 : i32
    return %arg0, %2, %c0_i32_0, %c0_i32_1 : i32, i32, i32, i32
  }
  func.func @transform_2(%arg0: i32, %arg1: i32) -> (i32, i32, i32, i32) {
    %c1_i32 = arith.constant 1 : i32
    %0 = arith.addi %arg1, %c1_i32 : i32
    %c8_i32 = arith.constant 8 : i32
    %1 = arith.muli %0, %c8_i32 : i32
    %c15_i32 = arith.constant 15 : i32
    %2 = arith.minsi %1, %c15_i32 : i32
    %c0_i32 = arith.constant 0 : i32
    %c0_i32_0 = arith.constant 0 : i32
    %c0_i32_1 = arith.constant 0 : i32
    return %arg0, %2, %c0_i32, %c0_i32_0 : i32, i32, i32, i32
  }
  func.func @transform_3(%arg0: i32, %arg1: i32) -> (i32, i32) {
    %c0_i32 = arith.constant 0 : i32
    %c0_i32_0 = arith.constant 0 : i32
    %c0_i32_1 = arith.constant 0 : i32
    return %c0_i32, %c0_i32_0 : i32, i32
  }
  func.func @transform_4(%arg0: i32, %arg1: i32) -> (i32, i32) {
    %c0_i32 = arith.constant 0 : i32
    %c0_i32_0 = arith.constant 0 : i32
    %c0_i32_1 = arith.constant 0 : i32
    return %c0_i32, %c0_i32_0 : i32, i32
  }
  func.func @transform_5(%arg0: i32, %arg1: i32) -> (i32, i32, i32) {
    %c0_i32 = arith.constant 0 : i32
    %c0_i32_0 = arith.constant 0 : i32
    %c0_i32_1 = arith.constant 0 : i32
    %c0_i32_2 = arith.constant 0 : i32
    return %c0_i32, %c0_i32_0, %c0_i32_1 : i32, i32, i32
  }
  func.func @transform_6(%arg0: i32, %arg1: i32) -> (i32, i32) {
    %c0_i32 = arith.constant 0 : i32
    %c0_i32_0 = arith.constant 0 : i32
    %c0_i32_1 = arith.constant 0 : i32
    return %c0_i32, %c0_i32_0 : i32, i32
  }
  func.func @transform_7(%arg0: i32, %arg1: i32) -> (i32, i32, i32, i32) {
    %c0_i32 = arith.constant 0 : i32
    %c0_i32_0 = arith.constant 0 : i32
    %c0_i32_1 = arith.constant 0 : i32
    return %arg0, %arg1, %c0_i32, %c0_i32_0 : i32, i32, i32, i32
  }
}

</mosaic_0001>

<llo_original>
// kernel: tile.8
$region0: #{tile.8}
  #allocation0 [shape = 's32[1]{0}', space=sflag, size = 0x4, scoped, tag = 'scoped memory for tile.8']
  %s0 = inlined_call_operand.vmem [shape: f32[2], index: 0, kind: input, shape index: {}]
  %s1 = inlined_call_operand.vmem [shape: f32[4,2], index: 1, kind: output, shape index: {}]
  // Predicated region
  $region2: #{tile.8} parent=0 // pred_check
    _
  $region3: #{tile.8} parent=0 // pred_check_branch
    %3 = sbr.rel (0) target = $region5
  $region4: #{tile.8} parent=0 // pred_region
    _
  $region5: #{tile.8} parent=0 // pred_fallthru
    _
  %v4 = vld [vmem:[%s0] ss:$0 sm:$0xff]
  %5 = vst [vmem:[%s1] sm:$0xf] %v4

// kernel: tile.9
$region0: #{tile.9}
  %s0 = inlined_call_operand.vmem [shape: f32[4,2], index: 0, kind: input, shape index: {}]
  %s1 = inlined_call_operand.vmem [shape: f32[1,8], index: 1, kind: output, shape index: {}]
  $region1: #{tile.9} parent=0
    #allocation0 [shape = 'u8[4096]{0}', space=vmem, size = 0x1000, scoped, tag = 'scoped mem for output reshape']
    #allocation1 [shape = 'u8[4096]{0}', space=vmem, size = 0x1000, scoped, tag = 'scoped mem for input reshape']
    %s3 = sshllo.u32 0, 4
    %v4 = vld [vmem:[%s0] sm:%s3]
    %5 = vst [vmem:[#allocation1] sm:%s3] %v4
    %v6 = vld [vmem:[#allocation1] sm:$0x1]
    %vm7 = vcmask 15360
    %8 = vst.msk [vmem:[#allocation0] sm:$0x1] %vm7, %v6
    %s9 = scalar_lea.vmem [#allocation1], 3
    %v10 = vld [vmem:[%s9] sm:$0x1]
    %11 = vrot.lane.b32.xlu0 %v10, 6
    %v12 = vpop.permute.xlu0 %11
    %vm13 = vcmask 64560
    %14 = vst.msk [vmem:[#allocation0] sm:$0x1] %vm13, %v12
    %s15 = scalar_lea.vmem [#allocation1], 2
    %v16 = vld [vmem:[%s15] sm:$0x1]
    %17 = vrot.lane.b32.xlu0 %v16, 4
    %v18 = vpop.permute.xlu0 %17
    %vm19 = vcmask 48160
    %20 = vst.msk [vmem:[#allocation0] sm:$0x1] %vm19, %v18
    %s21 = scalar_lea.vmem [#allocation1], 1
    %v22 = vld [vmem:[%s21] sm:$0x1]
    %23 = vrot.lane.b32.xlu0 %v22, 2
    %v24 = vpop.permute.xlu0 %23
    %vm25 = vcmask 31760
    %26 = vst.msk [vmem:[#allocation0] sm:$0x1] %vm25, %v24
    %s28 = sshllo.u32 0, 1
    %v30 = vld [vmem:[#allocation0] sm:%s28]
    %s31 = sshllo.u32 0, 1
    %32 = vst [vmem:[%s1] sm:%s31] %v30

// kernel: up_forward.5
$region0: #{up_forward.5}
  #allocation0 [shape = 'u32[]', space=smem, size = 0x4, offset = 0x4, fixed_abs, tag = 'smem constant byte address 0x4 - core index']
  #allocation1 [shape = 'u32[144,128]{1,0:T(1,128)}', space=vmem, size = 0x12000, scoped, tag = 'internal scratch']
  %s0 = inlined_call_operand.vmem [shape: f32[512,2], index: 0, kind: input, shape index: {}]
  %s1 = inlined_call_operand.vmem [shape: f32[2,8,2], index: 1, kind: output, shape index: {0}]
  %s2 = inlined_call_operand.vmem [shape: f32[2,8,2], index: 2, kind: output, shape index: {1}]
  %3 = xla_tuple %s1, %s2
  %s4 = sld [smem:[#allocation0]]
  $region45: #{up_forward.5} parent=0
    _
  %s6 = ssub.s32 1, %s4
  %s7 = scalar_select 0, %s6, %s4
  loop: start=0, step=1, limit=4
  $region2: #{up_forward.5} parent=0 // loop_pre_header
    _
  $region3: #{up_forward.5} parent=0 // loop_header
    %s9 = sphi 0, %s13
    %p10 = scmp.ge.s32.totalorder %s9, 4
    %s19 = sphi 0, %s21
    %s22 = sphi 0, %s19
    %s23 = sphi 0, %s22
    %s39 = sphi 0, %s23
    %s45 = sphi 0, %s47
    %s48 = sphi 0, %s45
    %s49 = sphi 0, %s48
    %s65 = sphi 0, %s49
    %s71 = sphi 0, %s73
    %s74 = sphi 0, %s71
    %s75 = sphi 0, %s74
    %s91 = sphi 0, %s75
  $region4: #{up_forward.5} parent=0 // loop_header_branch
    %12 = sbr.rel (%p10) target = $region8
  $region5: #{up_forward.5} parent=0 // loop_body
    %s14 = ssub.s32 %s9, 1
    %s15 = ssub.s32 %s9, 2
    %s16 = sadd.s32 %s9, 1
    %s17 = ssub.s32 %s9, %s16
    %p18 = scmp.eq.s32.totalorder %s17, 0
    %s20 = sadd.s32 %s19, 1
    %s21 = scalar_select %p18, %s19, %s20
    %p24 = pneg %p18
    %p25 = scmp.eq.s32.totalorder %s9, 1
    %p26 = por %p24, %p25
    %p27 = scmp.ne.s32.totalorder %s19, %s22
    %p28 = scmp.eq.s32.totalorder %s9, 0
    %p29 = por %p27, %p28
    %p30 = scmp.ne.s32.totalorder %s19, %s22
    %p31 = scmp.eq.s32.totalorder %s14, 1
    %p32 = por %p30, %p31
    %p33 = scmp.ne.s32.totalorder %s22, %s23
    %p34 = scmp.eq.s32.totalorder %s14, 0
    %p35 = por %p33, %p34
    %p36 = scmp.ne.s32.totalorder %s22, %s23
    %p37 = scmp.eq.s32.totalorder %s15, 1
    %p38 = por %p36, %p37
    %p40 = scmp.ne.s32.totalorder %s23, %s39
    %p41 = scmp.eq.s32.totalorder %s15, 0
    %p42 = por %p40, %p41
    %s43 = ssub.s32 %s9, %s16
    %p44 = scmp.eq.s32.totalorder %s43, 0
    %s46 = sadd.s32 %s45, 1
    %s47 = scalar_select %p44, %s45, %s46
    %p50 = pneg %p44
    %p51 = scmp.eq.s32.totalorder %s9, 1
    %p52 = por %p50, %p51
    %p53 = scmp.ne.s32.totalorder %s45, %s48
    %p54 = scmp.eq.s32.totalorder %s9, 0
    %p55 = por %p53, %p54
    %p56 = scmp.ne.s32.totalorder %s45, %s48
    %p57 = scmp.eq.s32.totalorder %s14, 1
    %p58 = por %p56, %p57
    %p59 = scmp.ne.s32.totalorder %s48, %s49
    %p60 = scmp.eq.s32.totalorder %s14, 0
    %p61 = por %p59, %p60
    %p62 = scmp.ne.s32.totalorder %s48, %s49
    %p63 = scmp.eq.s32.totalorder %s15, 1
    %p64 = por %p62, %p63
    %p66 = scmp.ne.s32.totalorder %s49, %s65
    %p67 = scmp.eq.s32.totalorder %s15, 0
    %p68 = por %p66, %p67
    %s69 = ssub.s32 %s9, %s16
    %p70 = scmp.eq.s32.totalorder %s69, 0
    %s72 = sadd.s32 %s71, 1
    %s73 = scalar_select %p70, %s71, %s72
    %p76 = pneg %p70
    %p77 = scmp.eq.s32.totalorder %s9, 1
    %p78 = por %p76, %p77
    %p79 = scmp.ne.s32.totalorder %s71, %s74
    %p80 = scmp.eq.s32.totalorder %s9, 0
    %p81 = por %p79, %p80
    %p82 = scmp.ne.s32.totalorder %s71, %s74
    %p83 = scmp.eq.s32.totalorder %s14, 1
    %p84 = por %p82, %p83
    %p85 = scmp.ne.s32.totalorder %s74, %s75
    %p86 = scmp.eq.s32.totalorder %s14, 0
    %p87 = por %p85, %p86
    %p88 = scmp.ne.s32.totalorder %s74, %s75
    %p89 = scmp.eq.s32.totalorder %s15, 1
    %p90 = por %p88, %p89
    %p92 = scmp.ne.s32.totalorder %s75, %s91
    %p93 = scmp.eq.s32.totalorder %s15, 0
    %p94 = por %p92, %p93
    %p95 = scmp.le.s32.totalorder 1, %s9
    %p96 = scmp.lt.s32.totalorder %s9, 3
    %p97 = pnand %p95, %p96
    %p98 = pneg %p97
    // Predicated region
    $region9: #{up_forward.5} parent=5 // pred_check
      _
    $region10: #{up_forward.5} parent=5 // pred_check_branch
      %100 = sbr.rel (%p97) target = $region12
    $region11: #{up_forward.5} parent=5 // pred_region
      %s101 = ssub.s32 %s9, 1
    $region12: #{up_forward.5} parent=5 // pred_fallthru
      _
    %p102 = scmp.lt.s32.totalorder %s9, 2
    // Predicated region
    $region13: #{up_forward.5} parent=5 // pred_check
      %p103 = pneg %p102
    $region14: #{up_forward.5} parent=5 // pred_check_branch
      %105 = sbr.rel (%p103) target = $region16
    $region15: #{up_forward.5} parent=5 // pred_region
      // Predicated region
      $region17: #{up_forward.5} parent=15 // pred_check
        %p106 = pneg %p29
      $region18: #{up_forward.5} parent=15 // pred_check_branch
        %108 = sbr.rel (%p106) target = $region20
      $region19: #{up_forward.5} parent=15 // pred_region
        %s109 = smul.u32 32, %s9
        %p110 = scmp.lt.s32.totalorder %s109, 63
        %s111 = scalar_select %p110, %s109, 63
        %s112 = smul.addr %s111, 8
        %s113 = scalar_lea.vmem %s0, %s112
        %s114 = smul.u32 32, %s9
      $region20: #{up_forward.5} parent=15 // pred_fallthru
        _
    $region16: #{up_forward.5} parent=5 // pred_fallthru
      _
    %p115 = scmp.le.s32.totalorder 1, %s9
    %p116 = scmp.lt.s32.totalorder %s9, 3
    %p117 = pnand %p115, %p116
    %p118 = pneg %p117
    // Predicated region
    $region21: #{up_forward.5} parent=5 // pred_check
      _
    $region22: #{up_forward.5} parent=5 // pred_check_branch
      %120 = sbr.rel (%p117) target = $region24
    $region23: #{up_forward.5} parent=5 // pred_region
      %s121 = ssub.s32 %s9, 1
      %s122 = smul.u32 32, %s14
      %p123 = scmp.lt.s32.totalorder %s122, 63
      %s124 = scalar_select %p123, %s122, 63
      %s125 = smul.addr %s124, 8
      %s126 = scalar_lea.vmem %s0, %s125
      %p127 = pneg %p35
      %p128 = pneg %p32
      %p129 = pneg %p61
      %p130 = pneg %p58
      %p131 = scmp.lt.s32.totalorder %s14, 1
      %s132 = scalar_select %p131, %s14, 1
      %s133 = smul.addr %s132, 8
      %s134 = scalar_lea.vmem %s1, %s133
      %p135 = pneg %p87
      %p136 = pneg %p84
      %p137 = scmp.lt.s32.totalorder %s14, 1
      %s138 = scalar_select %p137, %s14, 1
      %s139 = smul.addr %s138, 8
      %s140 = scalar_lea.vmem %s2, %s139
      %s141 = smul.u32 32, %s14
      %p142 = scmp.lt.s32.totalorder %s141, 63
      %s143 = scalar_select %p142, %s141, 63
      %s144 = smul.addr %s143, 8
      %s145 = scalar_lea.vmem %s0, %s144
      %s146 = smul.u32 32, %s14
      %p147 = scmp.lt.s32.totalorder %s14, 1
      %s148 = scalar_select %p147, %s14, 1
      %s149 = smul.addr %s148, 8
      %s150 = scalar_lea.vmem %s1, %s149
      %p151 = scmp.lt.s32.totalorder %s14, 1
      %s152 = scalar_select %p151, %s14, 1
      %s153 = smul.addr %s152, 8
      %s154 = scalar_lea.vmem %s2, %s153
      %v155 = vld [vmem:[%s145] sm:$0xff]
      %v156 = vld [vmem:[%s145 + $0x8] sm:$0xff]
      %v157 = vld [vmem:[%s145 + $0x10] sm:$0xff]
      %v158 = vld [vmem:[%s145 + $0x18] sm:$0xff]
      %v159 = vld [vmem:[%s145 + $0x20] sm:$0xff]
      %v160 = vld [vmem:[%s145 + $0x28] sm:$0xff]
      %v161 = vld [vmem:[%s145 + $0x30] sm:$0xff]
      %v162 = vld [vmem:[%s145 + $0x38] sm:$0xff]
      %v163 = vld [vmem:[%s145 + $0x40] sm:$0xff]
      %v164 = vld [vmem:[%s145 + $0x48] sm:$0xff]
      %v165 = vld [vmem:[%s145 + $0x50] sm:$0xff]
      %v166 = vld [vmem:[%s145 + $0x58] sm:$0xff]
      %v167 = vld [vmem:[%s145 + $0x60] sm:$0xff]
      %v168 = vld [vmem:[%s145 + $0x68] sm:$0xff]
      %v169 = vld [vmem:[%s145 + $0x70] sm:$0xff]
      %v170 = vld [vmem:[%s145 + $0x78] sm:$0xff]
      %v171 = vld [vmem:[%s145 + $0x80] sm:$0xff]
      %v172 = vld [vmem:[%s145 + $0x88] sm:$0xff]
      %v173 = vld [vmem:[%s145 + $0x90] sm:$0xff]
      %v174 = vld [vmem:[%s145 + $0x98] sm:$0xff]
      %v175 = vld [vmem:[%s145 + $0xa0] sm:$0xff]
      %v176 = vld [vmem:[%s145 + $0xa8] sm:$0xff]
      %v177 = vld [vmem:[%s145 + $0xb0] sm:$0xff]
      %v178 = vld [vmem:[%s145 + $0xb8] sm:$0xff]
      %v179 = vld [vmem:[%s145 + $0xc0] sm:$0xff]
      %v180 = vld [vmem:[%s145 + $0xc8] sm:$0xff]
      %v181 = vld [vmem:[%s145 + $0xd0] sm:$0xff]
      %v182 = vld [vmem:[%s145 + $0xd8] sm:$0xff]
      %v183 = vld [vmem:[%s145 + $0xe0] sm:$0xff]
      %v184 = vld [vmem:[%s145 + $0xe8] sm:$0xff]
      %v185 = vld [vmem:[%s145 + $0xf0] sm:$0xff]
      %v186 = vld [vmem:[%s145 + $0xf8] sm:$0xff]
      %vm187 = vcmask 15360
      %v188 = vsel %vm187, %v155, 0.0
      %v189 = vsel %vm187, %v156, 0.0
      %v190 = vadd.f32 %v188, %v189
      %v191 = vsel %vm187, %v157, 0.0
      %v192 = vadd.f32 %v190, %v191
      %v193 = vsel %vm187, %v158, 0.0
      %v194 = vadd.f32 %v192, %v193
      %v195 = vsel %vm187, %v159, 0.0
      %v196 = vadd.f32 %v194, %v195
      %v197 = vsel %vm187, %v160, 0.0
      %v198 = vadd.f32 %v196, %v197
      %v199 = vsel %vm187, %v161, 0.0
      %v200 = vadd.f32 %v198, %v199
      %v201 = vsel %vm187, %v162, 0.0
      %v202 = vadd.f32 %v200, %v201
      %v203 = vsel %vm187, %v163, 0.0
      %v204 = vadd.f32 %v202, %v203
      %v205 = vsel %vm187, %v164, 0.0
      %v206 = vadd.f32 %v204, %v205
      %v207 = vsel %vm187, %v165, 0.0
      %v208 = vadd.f32 %v206, %v207
      %v209 = vsel %vm187, %v166, 0.0
      %v210 = vadd.f32 %v208, %v209
      %v211 = vsel %vm187, %v167, 0.0
      %v212 = vadd.f32 %v210, %v211
      %v213 = vsel %vm187, %v168, 0.0
      %v214 = vadd.f32 %v212, %v213
      %v215 = vsel %vm187, %v169, 0.0
      %v216 = vadd.f32 %v214, %v215
      %v217 = vsel %vm187, %v170, 0.0
      %v218 = vadd.f32 %v216, %v217
      %v219 = vsel %vm187, %v171, 0.0
      %v220 = vadd.f32 %v218, %v219
      %v221 = vsel %vm187, %v172, 0.0
      %v222 = vadd.f32 %v220, %v221
      %v223 = vsel %vm187, %v173, 0.0
      %v224 = vadd.f32 %v222, %v223
      %v225 = vsel %vm187, %v174, 0.0
      %v226 = vadd.f32 %v224, %v225
      %v227 = vsel %vm187, %v175, 0.0
      %v228 = vadd.f32 %v226, %v227
      %v229 = vsel %vm187, %v176, 0.0
      %v230 = vadd.f32 %v228, %v229
      %v231 = vsel %vm187, %v177, 0.0
      %v232 = vadd.f32 %v230, %v231
      %v233 = vsel %vm187, %v178, 0.0
      %v234 = vadd.f32 %v232, %v233
      %v235 = vsel %vm187, %v179, 0.0
      %v236 = vadd.f32 %v234, %v235
      %v237 = vsel %vm187, %v180, 0.0
      %v238 = vadd.f32 %v236, %v237
      %v239 = vsel %vm187, %v181, 0.0
      %v240 = vadd.f32 %v238, %v239
      %v241 = vsel %vm187, %v182, 0.0
      %v242 = vadd.f32 %v240, %v241
      %v243 = vsel %vm187, %v183, 0.0
      %v244 = vadd.f32 %v242, %v243
      %v245 = vsel %vm187, %v184, 0.0
      %v246 = vadd.f32 %v244, %v245
      %v247 = vsel %vm187, %v185, 0.0
      %v248 = vadd.f32 %v246, %v247
      %v249 = vsel %vm187, %v186, 0.0
      %v250 = vadd.f32 %v248, %v249
      %v251 = vrot.slane %v250, 4
      %v252 = vadd.f32 %v250, %v251
      %v253 = vrot.slane %v252, 2
      %v254 = vadd.f32 %v252, %v253
      %v255 = vrot.slane %v254, 1
      %v256 = vadd.f32 %v254, %v255
      %257 = vst.msk [vmem:[%s150] sm:$0xff] %vm187, %v256
      %v258 = vmul.f32 %v155, %v155
      %v259 = vmul.f32 %v156, %v156
      %v260 = vmul.f32 %v157, %v157
      %v261 = vmul.f32 %v158, %v158
      %v262 = vmul.f32 %v159, %v159
      %v263 = vmul.f32 %v160, %v160
      %v264 = vmul.f32 %v161, %v161
      %v265 = vmul.f32 %v162, %v162
      %v266 = vmul.f32 %v163, %v163
      %v267 = vmul.f32 %v164, %v164
      %v268 = vmul.f32 %v165, %v165
      %v269 = vmul.f32 %v166, %v166
      %v270 = vmul.f32 %v167, %v167
      %v271 = vmul.f32 %v168, %v168
      %v272 = vmul.f32 %v169, %v169
      %v273 = vmul.f32 %v170, %v170
      %v274 = vmul.f32 %v171, %v171
      %v275 = vmul.f32 %v172, %v172
      %v276 = vmul.f32 %v173, %v173
      %v277 = vmul.f32 %v174, %v174
      %v278 = vmul.f32 %v175, %v175
      %v279 = vmul.f32 %v176, %v176
      %v280 = vmul.f32 %v177, %v177
      %v281 = vmul.f32 %v178, %v178
      %v282 = vmul.f32 %v179, %v179
      %v283 = vmul.f32 %v180, %v180
      %v284 = vmul.f32 %v181, %v181
      %v285 = vmul.f32 %v182, %v182
      %v286 = vmul.f32 %v183, %v183
      %v287 = vmul.f32 %v184, %v184
      %v288 = vmul.f32 %v185, %v185
      %v289 = vmul.f32 %v186, %v186
      %v290 = vsel %vm187, %v258, 0.0
      %v291 = vsel %vm187, %v259, 0.0
      %v292 = vadd.f32 %v290, %v291
      %v293 = vsel %vm187, %v260, 0.0
      %v294 = vadd.f32 %v292, %v293
      %v295 = vsel %vm187, %v261, 0.0
      %v296 = vadd.f32 %v294, %v295
      %v297 = vsel %vm187, %v262, 0.0
      %v298 = vadd.f32 %v296, %v297
      %v299 = vsel %vm187, %v263, 0.0
      %v300 = vadd.f32 %v298, %v299
      %v301 = vsel %vm187, %v264, 0.0
      %v302 = vadd.f32 %v300, %v301
      %v303 = vsel %vm187, %v265, 0.0
      %v304 = vadd.f32 %v302, %v303
      %v305 = vsel %vm187, %v266, 0.0
      %v306 = vadd.f32 %v304, %v305
      %v307 = vsel %vm187, %v267, 0.0
      %v308 = vadd.f32 %v306, %v307
      %v309 = vsel %vm187, %v268, 0.0
      %v310 = vadd.f32 %v308, %v309
      %v311 = vsel %vm187, %v269, 0.0
      %v312 = vadd.f32 %v310, %v311
      %v313 = vsel %vm187, %v270, 0.0
      %v314 = vadd.f32 %v312, %v313
      %v315 = vsel %vm187, %v271, 0.0
      %v316 = vadd.f32 %v314, %v315
      %v317 = vsel %vm187, %v272, 0.0
      %v318 = vadd.f32 %v316, %v317
      %v319 = vsel %vm187, %v273, 0.0
      %v320 = vadd.f32 %v318, %v319
      %v321 = vsel %vm187, %v274, 0.0
      %v322 = vadd.f32 %v320, %v321
      %v323 = vsel %vm187, %v275, 0.0
      %v324 = vadd.f32 %v322, %v323
      %v325 = vsel %vm187, %v276, 0.0
      %v326 = vadd.f32 %v324, %v325
      %v327 = vsel %vm187, %v277, 0.0
      %v328 = vadd.f32 %v326, %v327
      %v329 = vsel %vm187, %v278, 0.0
      %v330 = vadd.f32 %v328, %v329
      %v331 = vsel %vm187, %v279, 0.0
      %v332 = vadd.f32 %v330, %v331
      %v333 = vsel %vm187, %v280, 0.0
      %v334 = vadd.f32 %v332, %v333
      %v335 = vsel %vm187, %v281, 0.0
      %v336 = vadd.f32 %v334, %v335
      %v337 = vsel %vm187, %v282, 0.0
      %v338 = vadd.f32 %v336, %v337
      %v339 = vsel %vm187, %v283, 0.0
      %v340 = vadd.f32 %v338, %v339
      %v341 = vsel %vm187, %v284, 0.0
      %v342 = vadd.f32 %v340, %v341
      %v343 = vsel %vm187, %v285, 0.0
      %v344 = vadd.f32 %v342, %v343
      %v345 = vsel %vm187, %v286, 0.0
      %v346 = vadd.f32 %v344, %v345
      %v347 = vsel %vm187, %v287, 0.0
      %v348 = vadd.f32 %v346, %v347
      %v349 = vsel %vm187, %v288, 0.0
      %v350 = vadd.f32 %v348, %v349
      %v351 = vsel %vm187, %v289, 0.0
      %v352 = vadd.f32 %v350, %v351
      %v353 = vrot.slane %v352, 4
      %v354 = vadd.f32 %v352, %v353
      %v355 = vrot.slane %v354, 2
      %v356 = vadd.f32 %v354, %v355
      %v357 = vrot.slane %v356, 1
      %v358 = vadd.f32 %v356, %v357
      %359 = vst.msk [vmem:[%s154] sm:$0xff] %vm187, %v358
      %p360 = scmp.lt.s32.totalorder %s14, 1
      %s361 = scalar_select %p360, %s14, 1
      %s362 = smul.addr %s361, 8
      %s363 = scalar_lea.vmem %s1, %s362
      %p364 = scmp.lt.s32.totalorder %s14, 1
      %s365 = scalar_select %p364, %s14, 1
      %s366 = smul.addr %s365, 8
      %s367 = scalar_lea.vmem %s2, %s366
      // Predicated region
      $region25: #{up_forward.5} parent=23 // pred_check
        %p368 = pneg %p58
      $region26: #{up_forward.5} parent=23 // pred_check_branch
        %370 = sbr.rel (%p368) target = $region28
      $region27: #{up_forward.5} parent=23 // pred_region
        _
      $region28: #{up_forward.5} parent=23 // pred_fallthru
        _
      // Predicated region
      $region29: #{up_forward.5} parent=23 // pred_check
        %p371 = pneg %p84
      $region30: #{up_forward.5} parent=23 // pred_check_branch
        %373 = sbr.rel (%p371) target = $region32
      $region31: #{up_forward.5} parent=23 // pred_region
        _
      $region32: #{up_forward.5} parent=23 // pred_fallthru
        _
    $region24: #{up_forward.5} parent=5 // pred_fallthru
      _
    %p374 = scmp.le.s32.totalorder 2, %s9
    // Predicated region
    $region33: #{up_forward.5} parent=5 // pred_check
      %p375 = pneg %p374
    $region34: #{up_forward.5} parent=5 // pred_check_branch
      %377 = sbr.rel (%p375) target = $region36
    $region35: #{up_forward.5} parent=5 // pred_region
      %s378 = ssub.s32 %s9, 2
      // Predicated region
      $region37: #{up_forward.5} parent=35 // pred_check
        %p379 = pneg %p64
      $region38: #{up_forward.5} parent=35 // pred_check_branch
        %381 = sbr.rel (%p379) target = $region40
      $region39: #{up_forward.5} parent=35 // pred_region
        %p382 = scmp.lt.s32.totalorder %s15, 1
        %s383 = scalar_select %p382, %s15, 1
        %s384 = smul.addr %s383, 8
        %s385 = scalar_lea.vmem %s1, %s384
      $region40: #{up_forward.5} parent=35 // pred_fallthru
        _
      // Predicated region
      $region41: #{up_forward.5} parent=35 // pred_check
        %p386 = pneg %p90
      $region42: #{up_forward.5} parent=35 // pred_check_branch
        %388 = sbr.rel (%p386) target = $region44
      $region43: #{up_forward.5} parent=35 // pred_region
        %p389 = scmp.lt.s32.totalorder %s15, 1
        %s390 = scalar_select %p389, %s15, 1
        %s391 = smul.addr %s390, 8
        %s392 = scalar_lea.vmem %s2, %s391
      $region44: #{up_forward.5} parent=35 // pred_fallthru
        _
    $region36: #{up_forward.5} parent=5 // pred_fallthru
      _
  $region6: #{up_forward.5} parent=0 // loop_footer
    %s13 = sadd.s32 1, %s9
  $region7: #{up_forward.5} parent=0 // loop_footer_branch
    %8 = sbr.rel target = $region3
  $region8: #{up_forward.5} parent=0 // loop_exit
    _

// kernel: up_forward.4
$region0: #{up_forward.4}
  #allocation0 [shape = 'u32[]', space=smem, size = 0x4, offset = 0x4, fixed_abs, tag = 'smem constant byte address 0x4 - core index']
  #allocation1 [shape = 'u32[144,128]{1,0:T(1,128)}', space=vmem, size = 0x12000, scoped, tag = 'internal scratch']
  %s0 = inlined_call_operand.vmem [shape: f32[128,4], index: 0, kind: input, shape index: {}]
  %s1 = inlined_call_operand.vmem [shape: bf16[4,8], index: 1, kind: input, shape index: {}]
  %s2 = inlined_call_operand.vmem [shape: f32[1,8], index: 2, kind: input, shape index: {}]
  %s3 = inlined_call_operand.vmem [shape: f32[128,8], index: 3, kind: output, shape index: {0}]
  %s4 = inlined_call_operand.vmem [shape: f32[2,8,8], index: 4, kind: output, shape index: {1}]
  %s5 = inlined_call_operand.vmem [shape: f32[2,8,8], index: 5, kind: output, shape index: {2}]
  %6 = xla_tuple %s3, %s4, %s5
  %s7 = sld [smem:[#allocation0]]
  $region61: #{up_forward.4} parent=0
    _
  %s9 = ssub.s32 1, %s7
  %s10 = scalar_select 0, %s9, %s7
  loop: start=0, step=1, limit=4
  $region2: #{up_forward.4} parent=0 // loop_pre_header
    _
  $region3: #{up_forward.4} parent=0 // loop_header
    %s12 = sphi 0, %s16
    %p13 = scmp.ge.s32.totalorder %s12, 4
    %s22 = sphi 0, %s24
    %s25 = sphi 0, %s22
    %s26 = sphi 0, %s25
    %s42 = sphi 0, %s26
    %s46 = sphi 0, %s46
    %s48 = sphi 0, %s46
    %s49 = sphi 0, %s48
    %s63 = sphi 0, %s49
    %s67 = sphi 0, %s67
    %s69 = sphi 0, %s67
    %s70 = sphi 0, %s69
    %s84 = sphi 0, %s70
    %s90 = sphi 0, %s92
    %s93 = sphi 0, %s90
    %s94 = sphi 0, %s93
    %s110 = sphi 0, %s94
    %s116 = sphi 0, %s118
    %s119 = sphi 0, %s116
    %s120 = sphi 0, %s119
    %s136 = sphi 0, %s120
    %s142 = sphi 0, %s144
    %s145 = sphi 0, %s142
    %s146 = sphi 0, %s145
    %s162 = sphi 0, %s146
  $region4: #{up_forward.4} parent=0 // loop_header_branch
    %15 = sbr.rel (%p13) target = $region8
  $region5: #{up_forward.4} parent=0 // loop_body
    %s17 = ssub.s32 %s12, 1
    %s18 = ssub.s32 %s12, 2
    %s19 = sadd.s32 %s12, 1
    %s20 = ssub.s32 %s12, %s19
    %p21 = scmp.eq.s32.totalorder %s20, 0
    %s23 = sadd.s32 %s22, 1
    %s24 = scalar_select %p21, %s22, %s23
    %p27 = pneg %p21
    %p28 = scmp.eq.s32.totalorder %s12, 1
    %p29 = por %p27, %p28
    %p30 = scmp.ne.s32.totalorder %s22, %s25
    %p31 = scmp.eq.s32.totalorder %s12, 0
    %p32 = por %p30, %p31
    %p33 = scmp.ne.s32.totalorder %s22, %s25
    %p34 = scmp.eq.s32.totalorder %s17, 1
    %p35 = por %p33, %p34
    %p36 = scmp.ne.s32.totalorder %s25, %s26
    %p37 = scmp.eq.s32.totalorder %s17, 0
    %p38 = por %p36, %p37
    %p39 = scmp.ne.s32.totalorder %s25, %s26
    %p40 = scmp.eq.s32.totalorder %s18, 1
    %p41 = por %p39, %p40
    %p43 = scmp.ne.s32.totalorder %s26, %s42
    %p44 = scmp.eq.s32.totalorder %s18, 0
    %p45 = por %p43, %p44
    %s47 = sadd.s32 %s46, 1
    %p50 = scmp.eq.s32.totalorder %s12, 1
    %p51 = scmp.ne.s32.totalorder %s46, %s48
    %p52 = scmp.eq.s32.totalorder %s12, 0
    %p53 = por %p51, %p52
    %p54 = scmp.ne.s32.totalorder %s46, %s48
    %p55 = scmp.eq.s32.totalorder %s17, 1
    %p56 = por %p54, %p55
    %p57 = scmp.ne.s32.totalorder %s48, %s49
    %p58 = scmp.eq.s32.totalorder %s17, 0
    %p59 = por %p57, %p58
    %p60 = scmp.ne.s32.totalorder %s48, %s49
    %p61 = scmp.eq.s32.totalorder %s18, 1
    %p62 = por %p60, %p61
    %p64 = scmp.ne.s32.totalorder %s49, %s63
    %p65 = scmp.eq.s32.totalorder %s18, 0
    %p66 = por %p64, %p65
    %s68 = sadd.s32 %s67, 1
    %p71 = scmp.eq.s32.totalorder %s12, 1
    %p72 = scmp.ne.s32.totalorder %s67, %s69
    %p73 = scmp.eq.s32.totalorder %s12, 0
    %p74 = por %p72, %p73
    %p75 = scmp.ne.s32.totalorder %s67, %s69
    %p76 = scmp.eq.s32.totalorder %s17, 1
    %p77 = por %p75, %p76
    %p78 = scmp.ne.s32.totalorder %s69, %s70
    %p79 = scmp.eq.s32.totalorder %s17, 0
    %p80 = por %p78, %p79
    %p81 = scmp.ne.s32.totalorder %s69, %s70
    %p82 = scmp.eq.s32.totalorder %s18, 1
    %p83 = por %p81, %p82
    %p85 = scmp.ne.s32.totalorder %s70, %s84
    %p86 = scmp.eq.s32.totalorder %s18, 0
    %p87 = por %p85, %p86
    %s88 = ssub.s32 %s12, %s19
    %p89 = scmp.eq.s32.totalorder %s88, 0
    %s91 = sadd.s32 %s90, 1
    %s92 = scalar_select %p89, %s90, %s91
    %p95 = pneg %p89
    %p96 = scmp.eq.s32.totalorder %s12, 1
    %p97 = por %p95, %p96
    %p98 = scmp.ne.s32.totalorder %s90, %s93
    %p99 = scmp.eq.s32.totalorder %s12, 0
    %p100 = por %p98, %p99
    %p101 = scmp.ne.s32.totalorder %s90, %s93
    %p102 = scmp.eq.s32.totalorder %s17, 1
    %p103 = por %p101, %p102
    %p104 = scmp.ne.s32.totalorder %s93, %s94
    %p105 = scmp.eq.s32.totalorder %s17, 0
    %p106 = por %p104, %p105
    %p107 = scmp.ne.s32.totalorder %s93, %s94
    %p108 = scmp.eq.s32.totalorder %s18, 1
    %p109 = por %p107, %p108
    %p111 = scmp.ne.s32.totalorder %s94, %s110
    %p112 = scmp.eq.s32.totalorder %s18, 0
    %p113 = por %p111, %p112
    %s114 = ssub.s32 %s12, %s19
    %p115 = scmp.eq.s32.totalorder %s114, 0
    %s117 = sadd.s32 %s116, 1
    %s118 = scalar_select %p115, %s116, %s117
    %p121 = pneg %p115
    %p122 = scmp.eq.s32.totalorder %s12, 1
    %p123 = por %p121, %p122
    %p124 = scmp.ne.s32.totalorder %s116, %s119
    %p125 = scmp.eq.s32.totalorder %s12, 0
    %p126 = por %p124, %p125
    %p127 = scmp.ne.s32.totalorder %s116, %s119
    %p128 = scmp.eq.s32.totalorder %s17, 1
    %p129 = por %p127, %p128
    %p130 = scmp.ne.s32.totalorder %s119, %s120
    %p131 = scmp.eq.s32.totalorder %s17, 0
    %p132 = por %p130, %p131
    %p133 = scmp.ne.s32.totalorder %s119, %s120
    %p134 = scmp.eq.s32.totalorder %s18, 1
    %p135 = por %p133, %p134
    %p137 = scmp.ne.s32.totalorder %s120, %s136
    %p138 = scmp.eq.s32.totalorder %s18, 0
    %p139 = por %p137, %p138
    %s140 = ssub.s32 %s12, %s19
    %p141 = scmp.eq.s32.totalorder %s140, 0
    %s143 = sadd.s32 %s142, 1
    %s144 = scalar_select %p141, %s142, %s143
    %p147 = pneg %p141
    %p148 = scmp.eq.s32.totalorder %s12, 1
    %p149 = por %p147, %p148
    %p150 = scmp.ne.s32.totalorder %s142, %s145
    %p151 = scmp.eq.s32.totalorder %s12, 0
    %p152 = por %p150, %p151
    %p153 = scmp.ne.s32.totalorder %s142, %s145
    %p154 = scmp.eq.s32.totalorder %s17, 1
    %p155 = por %p153, %p154
    %p156 = scmp.ne.s32.totalorder %s145, %s146
    %p157 = scmp.eq.s32.totalorder %s17, 0
    %p158 = por %p156, %p157
    %p159 = scmp.ne.s32.totalorder %s145, %s146
    %p160 = scmp.eq.s32.totalorder %s18, 1
    %p161 = por %p159, %p160
    %p163 = scmp.ne.s32.totalorder %s146, %s162
    %p164 = scmp.eq.s32.totalorder %s18, 0
    %p165 = por %p163, %p164
    %p166 = scmp.le.s32.totalorder 1, %s12
    %p167 = scmp.lt.s32.totalorder %s12, 3
    %p168 = pnand %p166, %p167
    %p169 = pneg %p168
    // Predicated region
    $region9: #{up_forward.4} parent=5 // pred_check
      _
    $region10: #{up_forward.4} parent=5 // pred_check_branch
      %171 = sbr.rel (%p168) target = $region12
    $region11: #{up_forward.4} parent=5 // pred_region
      %s172 = ssub.s32 %s12, 1
      // Predicated region
      $region13: #{up_forward.4} parent=11 // pred_check
        %p173 = pneg %p59
      $region14: #{up_forward.4} parent=11 // pred_check_branch
        %175 = sbr.rel (%p173) target = $region16
      $region15: #{up_forward.4} parent=11 // pred_region
        _
      $region16: #{up_forward.4} parent=11 // pred_fallthru
        _
      // Predicated region
      $region17: #{up_forward.4} parent=11 // pred_check
        %p176 = pneg %p80
      $region18: #{up_forward.4} parent=11 // pred_check_branch
        %178 = sbr.rel (%p176) target = $region20
      $region19: #{up_forward.4} parent=11 // pred_region
        _
      $region20: #{up_forward.4} parent=11 // pred_fallthru
        _
    $region12: #{up_forward.4} parent=5 // pred_fallthru
      _
    %p179 = scmp.lt.s32.totalorder %s12, 2
    // Predicated region
    $region21: #{up_forward.4} parent=5 // pred_check
      %p180 = pneg %p179
    $region22: #{up_forward.4} parent=5 // pred_check_branch
      %182 = sbr.rel (%p180) target = $region24
    $region23: #{up_forward.4} parent=5 // pred_region
      // Predicated region
      $region25: #{up_forward.4} parent=23 // pred_check
        %p183 = pneg %p32
      $region26: #{up_forward.4} parent=23 // pred_check_branch
        %185 = sbr.rel (%p183) target = $region28
      $region27: #{up_forward.4} parent=23 // pred_region
        %s186 = smul.u32 8, %s12
        %p187 = scmp.lt.s32.totalorder %s186, 15
        %s188 = scalar_select %p187, %s186, 15
        %s189 = smul.addr %s188, 8
        %s190 = scalar_lea.vmem %s0, %s189
        %s191 = smul.u32 8, %s12
      $region28: #{up_forward.4} parent=23 // pred_fallthru
        _
    $region24: #{up_forward.4} parent=5 // pred_fallthru
      _
    %p192 = scmp.le.s32.totalorder 1, %s12
    %p193 = scmp.lt.s32.totalorder %s12, 3
    %p194 = pnand %p192, %p193
    %p195 = pneg %p194
    // Predicated region
    $region29: #{up_forward.4} parent=5 // pred_check
      _
    $region30: #{up_forward.4} parent=5 // pred_check_branch
      %197 = sbr.rel (%p194) target = $region32
    $region31: #{up_forward.4} parent=5 // pred_region
      %s198 = ssub.s32 %s12, 1
      %s199 = smul.u32 8, %s17
      %p200 = scmp.lt.s32.totalorder %s199, 15
      %s201 = scalar_select %p200, %s199, 15
      %s202 = smul.addr %s201, 8
      %s203 = scalar_lea.vmem %s0, %s202
      %p204 = pneg %p38
      %p205 = pneg %p35
      %p206 = pneg %p59
      %p207 = pneg %p56
      %p208 = pneg %p80
      %p209 = pneg %p77
      %p210 = pneg %p106
      %p211 = pneg %p103
      %s212 = smul.u32 8, %s17
      %p213 = scmp.lt.s32.totalorder %s212, 15
      %s214 = scalar_select %p213, %s212, 15
      %s215 = smul.addr %s214, 8
      %s216 = scalar_lea.vmem %s3, %s215
      %p217 = pneg %p132
      %p218 = pneg %p129
      %p219 = scmp.lt.s32.totalorder %s17, 1
      %s220 = scalar_select %p219, %s17, 1
      %s221 = smul.addr %s220, 8
      %s222 = scalar_lea.vmem %s4, %s221
      %p223 = pneg %p158
      %p224 = pneg %p155
      %p225 = scmp.lt.s32.totalorder %s17, 1
      %s226 = scalar_select %p225, %s17, 1
      %s227 = smul.addr %s226, 8
      %s228 = scalar_lea.vmem %s5, %s227
      %s229 = smul.u32 8, %s17
      %p230 = scmp.lt.s32.totalorder %s229, 15
      %s231 = scalar_select %p230, %s229, 15
      %s232 = smul.addr %s231, 8
      %s233 = scalar_lea.vmem %s0, %s232
      %s234 = smul.u32 8, %s17
      %s235 = smul.u32 8, %s17
      %p236 = scmp.lt.s32.totalorder %s235, 15
      %s237 = scalar_select %p236, %s235, 15
      %s238 = smul.addr %s237, 8
      %s239 = scalar_lea.vmem %s3, %s238
      %s240 = smul.u32 8, %s17
      %p241 = scmp.lt.s32.totalorder %s17, 1
      %s242 = scalar_select %p241, %s17, 1
      %s243 = smul.addr %s242, 8
      %s244 = scalar_lea.vmem %s4, %s243
      %p245 = scmp.lt.s32.totalorder %s17, 1
      %s246 = scalar_select %p245, %s17, 1
      %s247 = smul.addr %s246, 8
      %s248 = scalar_lea.vmem %s5, %s247
      %v250 = vld [vmem:[%s233] sm:$0xff]
      %v251 = vld [vmem:[%s233 + $0x8] sm:$0xff]
      %v252 = vld [vmem:[%s233 + $0x10] sm:$0xff]
      %v253 = vld [vmem:[%s233 + $0x18] sm:$0xff]
      %v254 = vld [vmem:[%s233 + $0x20] sm:$0xff]
      %v255 = vld [vmem:[%s233 + $0x28] sm:$0xff]
      %v256 = vld [vmem:[%s233 + $0x30] sm:$0xff]
      %v257 = vld [vmem:[%s233 + $0x38] sm:$0xff]
      %v258 = vpack.c.bf16 %v251, %v250
      %v259 = vpack.c.bf16 %v253, %v252
      %v260 = vpack.c.bf16 %v255, %v254
      %v261 = vpack.c.bf16 %v257, %v256
      %v262 = vld [vmem:[%s1] sm:$0x3]
      %v263 = vld [vmem:[%s2] sm:$0x1]
      %v265 = vlaneseq
      %v266 = vshrl.u32 %v265, 7
      %v267 = vsub.s32 0, %v266
      %v268 = vrot.slane %v263, %v267
      %vm270 = vcmask 31744
      %v272 = vsel %vm270, %v258, 0
      %v275 = vsel %vm270, %v259, 0
      %v278 = vsel %vm270, %v260, 0
      %v281 = vsel %vm270, %v261, 0
      %vm283 = vcmask 1041408
      %v285 = vsel %vm283, %v262, 0
      %287 = vmatprep.subr.bf16.mxu0 0
      %288 = vmatpush1.bf16.msra.mxu0 %v285
      %289 = vmatprep.subr.bf16.mxu0 0
      %290 = vmatpush1.bf16.msra.mxu0 0
      %291 = vmatprep.subr.bf16.mxu0 0
      %292 = vmatpush1.bf16.msra.mxu0 0
      %293 = vmatprep.subr.bf16.mxu0 0
      %294 = vmatpush1.bf16.msra.mxu0 0
      %295 = vmatprep.subr.bf16.mxu0 0
      %296 = vmatpush1.bf16.msra.mxu0 0
      %297 = vmatprep.subr.bf16.mxu0 0
      %298 = vmatpush1.bf16.msra.mxu0 0
      %299 = vmatprep.subr.bf16.mxu0 0
      %300 = vmatpush1.bf16.msra.mxu0 0
      %301 = vmatprep.subr.bf16.mxu0 0
      %302 = vmatpush1.bf16.msra.mxu0 0
      %303 = vmatprep.subr.bf16.mxu0 0
      %304 = vmatpush1.bf16.msra.mxu0 0
      %305 = vmatprep.subr.bf16.mxu0 0
      %306 = vmatpush1.bf16.msra.mxu0 0
      %307 = vmatprep.subr.bf16.mxu0 0
      %308 = vmatpush1.bf16.msra.mxu0 0
      %309 = vmatprep.subr.bf16.mxu0 0
      %310 = vmatpush1.bf16.msra.mxu0 0
      %311 = vmatprep.subr.bf16.mxu0 0
      %312 = vmatpush1.bf16.msra.mxu0 0
      %313 = vmatprep.subr.bf16.mxu0 0
      %314 = vmatpush1.bf16.msra.mxu0 0
      %315 = vmatprep.subr.bf16.mxu0 0
      %316 = vmatpush1.bf16.msra.mxu0 0
      %317 = vmatprep.subr.bf16.mxu0 0
      %318 = vmatpush1.bf16.msra.mxu0 0
      %319 = vmatprep.mubr.bf16.mxu0 0
      %320 = vmatmul.mubr.bf16.gmra.mrb[0].mxu0 %v272
      %v321 = vpop.f32.mrb[0].mxu0
      %v322 = vadd.f32 %v268, %v321
      %v323 = vpop.f32.mrb[0].mxu0
      %v324 = vpop.f32.mrb[0].mxu0
      %v325 = vadd.f32 %v268, %v324
      %v326 = vpop.f32.mrb[0].mxu0
      %327 = vmatprep.mubr.bf16.mxu0 0
      %328 = vmatmul.mubr.bf16.gmra.mrb[0].mxu0 %v275
      %v329 = vpop.f32.mrb[0].mxu0
      %v330 = vadd.f32 %v268, %v329
      %v331 = vpop.f32.mrb[0].mxu0
      %v332 = vpop.f32.mrb[0].mxu0
      %v333 = vadd.f32 %v268, %v332
      %v334 = vpop.f32.mrb[0].mxu0
      %335 = vmatprep.mubr.bf16.mxu0 0
      %336 = vmatmul.mubr.bf16.gmra.mrb[0].mxu0 %v278
      %v337 = vpop.f32.mrb[0].mxu0
      %v338 = vadd.f32 %v268, %v337
      %v339 = vpop.f32.mrb[0].mxu0
      %v340 = vpop.f32.mrb[0].mxu0
      %v341 = vadd.f32 %v268, %v340
      %v342 = vpop.f32.mrb[0].mxu0
      %343 = vmatprep.mubr.bf16.mxu0 0
      %344 = vmatmul.mubr.bf16.gmra.mrb[0].mxu0 %v281
      %v345 = vpop.f32.mrb[0].mxu0
      %v346 = vadd.f32 %v268, %v345
      %v347 = vpop.f32.mrb[0].mxu0
      %v348 = vpop.f32.mrb[0].mxu0
      %v349 = vadd.f32 %v268, %v348
      %v350 = vpop.f32.mrb[0].mxu0
      %351 = vdwg.mxu0
      %vm352 = vcmask 64512
      %353 = vst.msk [vmem:[%s239] sm:$0xff] %vm352, %v322
      %354 = vst.msk [vmem:[%s239 + $0x8] sm:$0xff] %vm352, %v325
      %355 = vst.msk [vmem:[%s239 + $0x10] sm:$0xff] %vm352, %v330
      %356 = vst.msk [vmem:[%s239 + $0x18] sm:$0xff] %vm352, %v333
      %357 = vst.msk [vmem:[%s239 + $0x20] sm:$0xff] %vm352, %v338
      %358 = vst.msk [vmem:[%s239 + $0x28] sm:$0xff] %vm352, %v341
      %359 = vst.msk [vmem:[%s239 + $0x30] sm:$0xff] %vm352, %v346
      %360 = vst.msk [vmem:[%s239 + $0x38] sm:$0xff] %vm352, %v349
      %v361 = vsel %vm352, %v322, 0.0
      %v362 = vsel %vm352, %v325, 0.0
      %v363 = vadd.f32 %v361, %v362
      %v364 = vsel %vm352, %v330, 0.0
      %v365 = vadd.f32 %v363, %v364
      %v366 = vsel %vm352, %v333, 0.0
      %v367 = vadd.f32 %v365, %v366
      %v368 = vsel %vm352, %v338, 0.0
      %v369 = vadd.f32 %v367, %v368
      %v370 = vsel %vm352, %v341, 0.0
      %v371 = vadd.f32 %v369, %v370
      %v372 = vsel %vm352, %v346, 0.0
      %v373 = vadd.f32 %v371, %v372
      %v374 = vsel %vm352, %v349, 0.0
      %v375 = vadd.f32 %v373, %v374
      %v376 = vrot.slane %v375, 4
      %v377 = vadd.f32 %v375, %v376
      %v378 = vrot.slane %v377, 2
      %v379 = vadd.f32 %v377, %v378
      %v380 = vrot.slane %v379, 1
      %v381 = vadd.f32 %v379, %v380
      %382 = vst.msk [vmem:[%s244] sm:$0xff] %vm352, %v381
      %v383 = vmul.f32 %v322, %v322
      %v384 = vmul.f32 %v325, %v325
      %v385 = vmul.f32 %v330, %v330
      %v386 = vmul.f32 %v333, %v333
      %v387 = vmul.f32 %v338, %v338
      %v388 = vmul.f32 %v341, %v341
      %v389 = vmul.f32 %v346, %v346
      %v390 = vmul.f32 %v349, %v349
      %v391 = vsel %vm352, %v383, 0.0
      %v392 = vsel %vm352, %v384, 0.0
      %v393 = vadd.f32 %v391, %v392
      %v394 = vsel %vm352, %v385, 0.0
      %v395 = vadd.f32 %v393, %v394
      %v396 = vsel %vm352, %v386, 0.0
      %v397 = vadd.f32 %v395, %v396
      %v398 = vsel %vm352, %v387, 0.0
      %v399 = vadd.f32 %v397, %v398
      %v400 = vsel %vm352, %v388, 0.0
      %v401 = vadd.f32 %v399, %v400
      %v402 = vsel %vm352, %v389, 0.0
      %v403 = vadd.f32 %v401, %v402
      %v404 = vsel %vm352, %v390, 0.0
      %v405 = vadd.f32 %v403, %v404
      %v406 = vrot.slane %v405, 4
      %v407 = vadd.f32 %v405, %v406
      %v408 = vrot.slane %v407, 2
      %v409 = vadd.f32 %v407, %v408
      %v410 = vrot.slane %v409, 1
      %v411 = vadd.f32 %v409, %v410
      %412 = vst.msk [vmem:[%s248] sm:$0xff] %vm352, %v411
      %s413 = smul.u32 8, %s17
      %p414 = scmp.lt.s32.totalorder %s413, 15
      %s415 = scalar_select %p414, %s413, 15
      %s416 = smul.addr %s415, 8
      %s417 = scalar_lea.vmem %s3, %s416
      %p418 = scmp.lt.s32.totalorder %s17, 1
      %s419 = scalar_select %p418, %s17, 1
      %s420 = smul.addr %s419, 8
      %s421 = scalar_lea.vmem %s4, %s420
      %p422 = scmp.lt.s32.totalorder %s17, 1
      %s423 = scalar_select %p422, %s17, 1
      %s424 = smul.addr %s423, 8
      %s425 = scalar_lea.vmem %s5, %s424
      // Predicated region
      $region33: #{up_forward.4} parent=31 // pred_check
        %p426 = pneg %p103
      $region34: #{up_forward.4} parent=31 // pred_check_branch
        %428 = sbr.rel (%p426) target = $region36
      $region35: #{up_forward.4} parent=31 // pred_region
        %s429 = smul.u32 8, %s17
      $region36: #{up_forward.4} parent=31 // pred_fallthru
        _
      // Predicated region
      $region37: #{up_forward.4} parent=31 // pred_check
        %p430 = pneg %p129
      $region38: #{up_forward.4} parent=31 // pred_check_branch
        %432 = sbr.rel (%p430) target = $region40
      $region39: #{up_forward.4} parent=31 // pred_region
        _
      $region40: #{up_forward.4} parent=31 // pred_fallthru
        _
      // Predicated region
      $region41: #{up_forward.4} parent=31 // pred_check
        %p433 = pneg %p155
      $region42: #{up_forward.4} parent=31 // pred_check_branch
        %435 = sbr.rel (%p433) target = $region44
      $region43: #{up_forward.4} parent=31 // pred_region
        _
      $region44: #{up_forward.4} parent=31 // pred_fallthru
        _
    $region32: #{up_forward.4} parent=5 // pred_fallthru
      _
    %p436 = scmp.le.s32.totalorder 2, %s12
    // Predicated region
    $region45: #{up_forward.4} parent=5 // pred_check
      %p437 = pneg %p436
    $region46: #{up_forward.4} parent=5 // pred_check_branch
      %439 = sbr.rel (%p437) target = $region48
    $region47: #{up_forward.4} parent=5 // pred_region
      %s440 = ssub.s32 %s12, 2
      // Predicated region
      $region49: #{up_forward.4} parent=47 // pred_check
        %p441 = pneg %p109
      $region50: #{up_forward.4} parent=47 // pred_check_branch
        %443 = sbr.rel (%p441) target = $region52
      $region51: #{up_forward.4} parent=47 // pred_region
        %s444 = smul.u32 8, %s18
        %p445 = scmp.lt.s32.totalorder %s444, 15
        %s446 = scalar_select %p445, %s444, 15
        %s447 = smul.addr %s446, 8
        %s448 = scalar_lea.vmem %s3, %s447
      $region52: #{up_forward.4} parent=47 // pred_fallthru
        _
      // Predicated region
      $region53: #{up_forward.4} parent=47 // pred_check
        %p449 = pneg %p135
      $region54: #{up_forward.4} parent=47 // pred_check_branch
        %451 = sbr.rel (%p449) target = $region56
      $region55: #{up_forward.4} parent=47 // pred_region
        %p452 = scmp.lt.s32.totalorder %s18, 1
        %s453 = scalar_select %p452, %s18, 1
        %s454 = smul.addr %s453, 8
        %s455 = scalar_lea.vmem %s4, %s454
      $region56: #{up_forward.4} parent=47 // pred_fallthru
        _
      // Predicated region
      $region57: #{up_forward.4} parent=47 // pred_check
        %p456 = pneg %p161
      $region58: #{up_forward.4} parent=47 // pred_check_branch
        %458 = sbr.rel (%p456) target = $region60
      $region59: #{up_forward.4} parent=47 // pred_region
        %p459 = scmp.lt.s32.totalorder %s18, 1
        %s460 = scalar_select %p459, %s18, 1
        %s461 = smul.addr %s460, 8
        %s462 = scalar_lea.vmem %s5, %s461
      $region60: #{up_forward.4} parent=47 // pred_fallthru
        _
    $region48: #{up_forward.4} parent=5 // pred_fallthru
      _
  $region6: #{up_forward.4} parent=0 // loop_footer
    %s16 = sadd.s32 1, %s12
  $region7: #{up_forward.4} parent=0 // loop_footer_branch
    %11 = sbr.rel target = $region3
  $region8: #{up_forward.4} parent=0 // loop_exit
    _

// kernel: up_forward.6
$region0: #{up_forward.6}
  #allocation0 [shape = 'u32[]', space=smem, size = 0x4, offset = 0x4, fixed_abs, tag = 'smem constant byte address 0x4 - core index']
  #allocation1 [shape = 'u32[144,128]{1,0:T(1,128)}', space=vmem, size = 0x12000, scoped, tag = 'internal scratch']
  #allocation2 [shape = 'f32[10,18,4]{2,1,0:T(8,128)}', space=vmem, size = 0x1e000, scoped, tag = 'scratch operand']
  %s0 = inlined_call_operand.vmem [shape: f32[2,16,16,2], index: 0, kind: input, shape index: {}, may-alias: {0,1,2}]
  %s1 = inlined_call_operand.vmem [shape: f32[2,16,16,2], index: 1, kind: input, shape index: {}, may-alias: {0,1,2}]
  %s2 = inlined_call_operand.vmem [shape: f32[2,16,16,2], index: 2, kind: input, shape index: {}, may-alias: {0,1,2}]
  %s3 = inlined_call_operand.vmem [shape: f32[2,16,16,2], index: 3, kind: input, shape index: {}, may-alias: {3,4,5}]
  %s4 = inlined_call_operand.vmem [shape: f32[2,16,16,2], index: 4, kind: input, shape index: {}, may-alias: {3,4,5}]
  %s5 = inlined_call_operand.vmem [shape: f32[2,16,16,2], index: 5, kind: input, shape index: {}, may-alias: {3,4,5}]
  %s6 = inlined_call_operand.vmem [shape: f32[1,2], index: 6, kind: input, shape index: {}]
  %s7 = inlined_call_operand.vmem [shape: f32[1,2], index: 7, kind: input, shape index: {}]
  %s8 = inlined_call_operand.vmem [shape: f32[1,2], index: 8, kind: input, shape index: {}]
  %s9 = inlined_call_operand.vmem [shape: f32[1,2], index: 9, kind: input, shape index: {}]
  %s10 = inlined_call_operand.vmem [shape: bf16[3,12,4], index: 10, kind: input, shape index: {}]
  %s11 = inlined_call_operand.vmem [shape: f32[1,4], index: 11, kind: input, shape index: {}]
  %s12 = inlined_call_operand.vmem [shape: f32[2,16,16,4], index: 12, kind: output, shape index: {0}]
  %s13 = inlined_call_operand.vmem [shape: f32[2,2,8,4], index: 13, kind: output, shape index: {1}]
  %s14 = inlined_call_operand.vmem [shape: f32[2,2,8,4], index: 14, kind: output, shape index: {2}]
  %15 = xla_tuple %s12, %s13, %s14
  %s16 = sld [smem:[#allocation0]]
  $region97: #{up_forward.6} parent=0
    _
  %s18 = ssub.s32 1, %s16
  %s19 = scalar_select 0, %s18, %s16
  loop: start=0, step=1, limit=6
  $region2: #{up_forward.6} parent=0 // loop_pre_header
    _
  $region3: #{up_forward.6} parent=0 // loop_header
    %s21 = sphi 0, %s25
    %p22 = scmp.ge.s32.totalorder %s21, 6
    %s28 = sphi 0, %s40
    %s29 = sphi 0, %s36
    %s30 = sphi 0, %s28
    %s31 = sphi 0, %s29
    %s32 = sphi 0, %s30
    %s33 = sphi 0, %s31
    %s45 = sphi 0, %s47
    %s48 = sphi 0, %s45
    %s49 = sphi 0, %s48
    %s65 = sphi 0, %s49
    %s81 = sphi 0, %s83
    %s84 = sphi 0, %s81
    %s85 = sphi 0, %s84
    %s101 = sphi 0, %s85
    %s117 = sphi 0, %s119
    %s120 = sphi 0, %s117
    %s121 = sphi 0, %s120
    %s137 = sphi 0, %s121
    %s145 = sphi 0, %s147
    %s148 = sphi 0, %s145
    %s149 = sphi 0, %s148
    %s165 = sphi 0, %s149
    %s181 = sphi 0, %s183
    %s184 = sphi 0, %s181
    %s185 = sphi 0, %s184
    %s201 = sphi 0, %s185
    %s217 = sphi 0, %s219
    %s220 = sphi 0, %s217
    %s221 = sphi 0, %s220
    %s237 = sphi 0, %s221
    %s241 = sphi 0, %s241
    %s243 = sphi 0, %s241
    %s244 = sphi 0, %s243
    %s258 = sphi 0, %s244
    %s262 = sphi 0, %s262
    %s264 = sphi 0, %s262
    %s265 = sphi 0, %s264
    %s279 = sphi 0, %s265
    %s283 = sphi 0, %s283
    %s285 = sphi 0, %s283
    %s286 = sphi 0, %s285
    %s300 = sphi 0, %s286
    %s304 = sphi 0, %s304
    %s306 = sphi 0, %s304
    %s307 = sphi 0, %s306
    %s321 = sphi 0, %s307
    %s325 = sphi 0, %s325
    %s327 = sphi 0, %s325
    %s328 = sphi 0, %s327
    %s342 = sphi 0, %s328
    %s346 = sphi 0, %s346
    %s348 = sphi 0, %s346
    %s349 = sphi 0, %s348
    %s363 = sphi 0, %s349
    %s371 = sphi 0, %s373
    %s374 = sphi 0, %s371
    %s375 = sphi 0, %s374
    %s391 = sphi 0, %s375
    %s399 = sphi 0, %s401
    %s402 = sphi 0, %s399
    %s403 = sphi 0, %s402
    %s419 = sphi 0, %s403
    %s427 = sphi 0, %s429
    %s430 = sphi 0, %s427
    %s431 = sphi 0, %s430
    %s447 = sphi 0, %s431
  $region4: #{up_forward.6} parent=0 // loop_header_branch
    %24 = sbr.rel (%p22) target = $region8
  $region5: #{up_forward.6} parent=0 // loop_body
    %s26 = ssub.s32 %s21, 1
    %s27 = ssub.s32 %s21, 2
    %s34 = sadd.s32 1, %s29
    %p35 = scmp.ge.s32.totalorder %s34, 2
    %s36 = scalar_select %p35, 0, %s34
    %s37 = sadd.s32 1, %s28
    %s38 = scalar_select %p35, %s37, %s28
    %p39 = scmp.ge.s32.totalorder %s38, 2
    %s40 = scalar_select %p39, 0, %s38
    %s41 = ssub.s32 %s28, %s40
    %s42 = ssub.s32 %s29, %s36
    %s43 = sor.u32 %s41, %s42
    %p44 = scmp.eq.s32.totalorder %s43, 0
    %s46 = sadd.s32 %s45, 1
    %s47 = scalar_select %p44, %s45, %s46
    %p50 = pneg %p44
    %p51 = scmp.eq.s32.totalorder %s21, 3
    %p52 = por %p50, %p51
    %p53 = scmp.ne.s32.totalorder %s45, %s48
    %p54 = scmp.eq.s32.totalorder %s21, 0
    %p55 = por %p53, %p54
    %p56 = scmp.ne.s32.totalorder %s45, %s48
    %p57 = scmp.eq.s32.totalorder %s26, 3
    %p58 = por %p56, %p57
    %p59 = scmp.ne.s32.totalorder %s48, %s49
    %p60 = scmp.eq.s32.totalorder %s26, 0
    %p61 = por %p59, %p60
    %p62 = scmp.ne.s32.totalorder %s48, %s49
    %p63 = scmp.eq.s32.totalorder %s27, 3
    %p64 = por %p62, %p63
    %p66 = scmp.ne.s32.totalorder %s49, %s65
    %p67 = scmp.eq.s32.totalorder %s27, 0
    %p68 = por %p66, %p67
    %s69 = smul.u32 %s29, 8
    %s70 = ssub.s32 %s69, 1
    %p71 = scmp.gt.s32.totalorder %s70, 0
    %s72 = scalar_select %p71, %s70, 0
    %s73 = smul.u32 %s36, 8
    %s74 = ssub.s32 %s73, 1
    %p75 = scmp.gt.s32.totalorder %s74, 0
    %s76 = scalar_select %p75, %s74, 0
    %s77 = ssub.s32 %s28, %s40
    %s78 = ssub.s32 %s72, %s76
    %s79 = sor.u32 %s77, %s78
    %p80 = scmp.eq.s32.totalorder %s79, 0
    %s82 = sadd.s32 %s81, 1
    %s83 = scalar_select %p80, %s81, %s82
    %p86 = pneg %p80
    %p87 = scmp.eq.s32.totalorder %s21, 3
    %p88 = por %p86, %p87
    %p89 = scmp.ne.s32.totalorder %s81, %s84
    %p90 = scmp.eq.s32.totalorder %s21, 0
    %p91 = por %p89, %p90
    %p92 = scmp.ne.s32.totalorder %s81, %s84
    %p93 = scmp.eq.s32.totalorder %s26, 3
    %p94 = por %p92, %p93
    %p95 = scmp.ne.s32.totalorder %s84, %s85
    %p96 = scmp.eq.s32.totalorder %s26, 0
    %p97 = por %p95, %p96
    %p98 = scmp.ne.s32.totalorder %s84, %s85
    %p99 = scmp.eq.s32.totalorder %s27, 3
    %p100 = por %p98, %p99
    %p102 = scmp.ne.s32.totalorder %s85, %s101
    %p103 = scmp.eq.s32.totalorder %s27, 0
    %p104 = por %p102, %p103
    %s105 = sadd.s32 %s29, 1
    %s106 = smul.u32 %s105, 8
    %p107 = scmp.lt.s32.totalorder %s106, 15
    %s108 = scalar_select %p107, %s106, 15
    %s109 = sadd.s32 %s36, 1
    %s110 = smul.u32 %s109, 8
    %p111 = scmp.lt.s32.totalorder %s110, 15
    %s112 = scalar_select %p111, %s110, 15
    %s113 = ssub.s32 %s28, %s40
    %s114 = ssub.s32 %s108, %s112
    %s115 = sor.u32 %s113, %s114
    %p116 = scmp.eq.s32.totalorder %s115, 0
    %s118 = sadd.s32 %s117, 1
    %s119 = scalar_select %p116, %s117, %s118
    %p122 = pneg %p116
    %p123 = scmp.eq.s32.totalorder %s21, 3
    %p124 = por %p122, %p123
    %p125 = scmp.ne.s32.totalorder %s117, %s120
    %p126 = scmp.eq.s32.totalorder %s21, 0
    %p127 = por %p125, %p126
    %p128 = scmp.ne.s32.totalorder %s117, %s120
    %p129 = scmp.eq.s32.totalorder %s26, 3
    %p130 = por %p128, %p129
    %p131 = scmp.ne.s32.totalorder %s120, %s121
    %p132 = scmp.eq.s32.totalorder %s26, 0
    %p133 = por %p131, %p132
    %p134 = scmp.ne.s32.totalorder %s120, %s121
    %p135 = scmp.eq.s32.totalorder %s27, 3
    %p136 = por %p134, %p135
    %p138 = scmp.ne.s32.totalorder %s121, %s137
    %p139 = scmp.eq.s32.totalorder %s27, 0
    %p140 = por %p138, %p139
    %s141 = ssub.s32 %s28, %s40
    %s142 = ssub.s32 %s29, %s36
    %s143 = sor.u32 %s141, %s142
    %p144 = scmp.eq.s32.totalorder %s143, 0
    %s146 = sadd.s32 %s145, 1
    %s147 = scalar_select %p144, %s145, %s146
    %p150 = pneg %p144
    %p151 = scmp.eq.s32.totalorder %s21, 3
    %p152 = por %p150, %p151
    %p153 = scmp.ne.s32.totalorder %s145, %s148
    %p154 = scmp.eq.s32.totalorder %s21, 0
    %p155 = por %p153, %p154
    %p156 = scmp.ne.s32.totalorder %s145, %s148
    %p157 = scmp.eq.s32.totalorder %s26, 3
    %p158 = por %p156, %p157
    %p159 = scmp.ne.s32.totalorder %s148, %s149
    %p160 = scmp.eq.s32.totalorder %s26, 0
    %p161 = por %p159, %p160
    %p162 = scmp.ne.s32.totalorder %s148, %s149
    %p163 = scmp.eq.s32.totalorder %s27, 3
    %p164 = por %p162, %p163
    %p166 = scmp.ne.s32.totalorder %s149, %s165
    %p167 = scmp.eq.s32.totalorder %s27, 0
    %p168 = por %p166, %p167
    %s169 = smul.u32 %s29, 8
    %s170 = ssub.s32 %s169, 1
    %p171 = scmp.gt.s32.totalorder %s170, 0
    %s172 = scalar_select %p171, %s170, 0
    %s173 = smul.u32 %s36, 8
    %s174 = ssub.s32 %s173, 1
    %p175 = scmp.gt.s32.totalorder %s174, 0
    %s176 = scalar_select %p175, %s174, 0
    %s177 = ssub.s32 %s28, %s40
    %s178 = ssub.s32 %s172, %s176
    %s179 = sor.u32 %s177, %s178
    %p180 = scmp.eq.s32.totalorder %s179, 0
    %s182 = sadd.s32 %s181, 1
    %s183 = scalar_select %p180, %s181, %s182
    %p186 = pneg %p180
    %p187 = scmp.eq.s32.totalorder %s21, 3
    %p188 = por %p186, %p187
    %p189 = scmp.ne.s32.totalorder %s181, %s184
    %p190 = scmp.eq.s32.totalorder %s21, 0
    %p191 = por %p189, %p190
    %p192 = scmp.ne.s32.totalorder %s181, %s184
    %p193 = scmp.eq.s32.totalorder %s26, 3
    %p194 = por %p192, %p193
    %p195 = scmp.ne.s32.totalorder %s184, %s185
    %p196 = scmp.eq.s32.totalorder %s26, 0
    %p197 = por %p195, %p196
    %p198 = scmp.ne.s32.totalorder %s184, %s185
    %p199 = scmp.eq.s32.totalorder %s27, 3
    %p200 = por %p198, %p199
    %p202 = scmp.ne.s32.totalorder %s185, %s201
    %p203 = scmp.eq.s32.totalorder %s27, 0
    %p204 = por %p202, %p203
    %s205 = sadd.s32 %s29, 1
    %s206 = smul.u32 %s205, 8
    %p207 = scmp.lt.s32.totalorder %s206, 15
    %s208 = scalar_select %p207, %s206, 15
    %s209 = sadd.s32 %s36, 1
    %s210 = smul.u32 %s209, 8
    %p211 = scmp.lt.s32.totalorder %s210, 15
    %s212 = scalar_select %p211, %s210, 15
    %s213 = ssub.s32 %s28, %s40
    %s214 = ssub.s32 %s208, %s212
    %s215 = sor.u32 %s213, %s214
    %p216 = scmp.eq.s32.totalorder %s215, 0
    %s218 = sadd.s32 %s217, 1
    %s219 = scalar_select %p216, %s217, %s218
    %p222 = pneg %p216
    %p223 = scmp.eq.s32.totalorder %s21, 3
    %p224 = por %p222, %p223
    %p225 = scmp.ne.s32.totalorder %s217, %s220
    %p226 = scmp.eq.s32.totalorder %s21, 0
    %p227 = por %p225, %p226
    %p228 = scmp.ne.s32.totalorder %s217, %s220
    %p229 = scmp.eq.s32.totalorder %s26, 3
    %p230 = por %p228, %p229
    %p231 = scmp.ne.s32.totalorder %s220, %s221
    %p232 = scmp.eq.s32.totalorder %s26, 0
    %p233 = por %p231, %p232
    %p234 = scmp.ne.s32.totalorder %s220, %s221
    %p235 = scmp.eq.s32.totalorder %s27, 3
    %p236 = por %p234, %p235
    %p238 = scmp.ne.s32.totalorder %s221, %s237
    %p239 = scmp.eq.s32.totalorder %s27, 0
    %p240 = por %p238, %p239
    %s242 = sadd.s32 %s241, 1
    %p245 = scmp.eq.s32.totalorder %s21, 3
    %p246 = scmp.ne.s32.totalorder %s241, %s243
    %p247 = scmp.eq.s32.totalorder %s21, 0
    %p248 = por %p246, %p247
    %p249 = scmp.ne.s32.totalorder %s241, %s243
    %p250 = scmp.eq.s32.totalorder %s26, 3
    %p251 = por %p249, %p250
    %p252 = scmp.ne.s32.totalorder %s243, %s244
    %p253 = scmp.eq.s32.totalorder %s26, 0
    %p254 = por %p252, %p253
    %p255 = scmp.ne.s32.totalorder %s243, %s244
    %p256 = scmp.eq.s32.totalorder %s27, 3
    %p257 = por %p255, %p256
    %p259 = scmp.ne.s32.totalorder %s244, %s258
    %p260 = scmp.eq.s32.totalorder %s27, 0
    %p261 = por %p259, %p260
    %s263 = sadd.s32 %s262, 1
    %p266 = scmp.eq.s32.totalorder %s21, 3
    %p267 = scmp.ne.s32.totalorder %s262, %s264
    %p268 = scmp.eq.s32.totalorder %s21, 0
    %p269 = por %p267, %p268
    %p270 = scmp.ne.s32.totalorder %s262, %s264
    %p271 = scmp.eq.s32.totalorder %s26, 3
    %p272 = por %p270, %p271
    %p273 = scmp.ne.s32.totalorder %s264, %s265
    %p274 = scmp.eq.s32.totalorder %s26, 0
    %p275 = por %p273, %p274
    %p276 = scmp.ne.s32.totalorder %s264, %s265
    %p277 = scmp.eq.s32.totalorder %s27, 3
    %p278 = por %p276, %p277
    %p280 = scmp.ne.s32.totalorder %s265, %s279
    %p281 = scmp.eq.s32.totalorder %s27, 0
    %p282 = por %p280, %p281
    %s284 = sadd.s32 %s283, 1
    %p287 = scmp.eq.s32.totalorder %s21, 3
    %p288 = scmp.ne.s32.totalorder %s283, %s285
    %p289 = scmp.eq.s32.totalorder %s21, 0
    %p290 = por %p288, %p289
    %p291 = scmp.ne.s32.totalorder %s283, %s285
    %p292 = scmp.eq.s32.totalorder %s26, 3
    %p293 = por %p291, %p292
    %p294 = scmp.ne.s32.totalorder %s285, %s286
    %p295 = scmp.eq.s32.totalorder %s26, 0
    %p296 = por %p294, %p295
    %p297 = scmp.ne.s32.totalorder %s285, %s286
    %p298 = scmp.eq.s32.totalorder %s27, 3
    %p299 = por %p297, %p298
    %p301 = scmp.ne.s32.totalorder %s286, %s300
    %p302 = scmp.eq.s32.totalorder %s27, 0
    %p303 = por %p301, %p302
    %s305 = sadd.s32 %s304, 1
    %p308 = scmp.eq.s32.totalorder %s21, 3
    %p309 = scmp.ne.s32.totalorder %s304, %s306
    %p310 = scmp.eq.s32.totalorder %s21, 0
    %p311 = por %p309, %p310
    %p312 = scmp.ne.s32.totalorder %s304, %s306
    %p313 = scmp.eq.s32.totalorder %s26, 3
    %p314 = por %p312, %p313
    %p315 = scmp.ne.s32.totalorder %s306, %s307
    %p316 = scmp.eq.s32.totalorder %s26, 0
    %p317 = por %p315, %p316
    %p318 = scmp.ne.s32.totalorder %s306, %s307
    %p319 = scmp.eq.s32.totalorder %s27, 3
    %p320 = por %p318, %p319
    %p322 = scmp.ne.s32.totalorder %s307, %s321
    %p323 = scmp.eq.s32.totalorder %s27, 0
    %p324 = por %p322, %p323
    %s326 = sadd.s32 %s325, 1
    %p329 = scmp.eq.s32.totalorder %s21, 3
    %p330 = scmp.ne.s32.totalorder %s325, %s327
    %p331 = scmp.eq.s32.totalorder %s21, 0
    %p332 = por %p330, %p331
    %p333 = scmp.ne.s32.totalorder %s325, %s327
    %p334 = scmp.eq.s32.totalorder %s26, 3
    %p335 = por %p333, %p334
    %p336 = scmp.ne.s32.totalorder %s327, %s328
    %p337 = scmp.eq.s32.totalorder %s26, 0
    %p338 = por %p336, %p337
    %p339 = scmp.ne.s32.totalorder %s327, %s328
    %p340 = scmp.eq.s32.totalorder %s27, 3
    %p341 = por %p339, %p340
    %p343 = scmp.ne.s32.totalorder %s328, %s342
    %p344 = scmp.eq.s32.totalorder %s27, 0
    %p345 = por %p343, %p344
    %s347 = sadd.s32 %s346, 1
    %p350 = scmp.eq.s32.totalorder %s21, 3
    %p351 = scmp.ne.s32.totalorder %s346, %s348
    %p352 = scmp.eq.s32.totalorder %s21, 0
    %p353 = por %p351, %p352
    %p354 = scmp.ne.s32.totalorder %s346, %s348
    %p355 = scmp.eq.s32.totalorder %s26, 3
    %p356 = por %p354, %p355
    %p357 = scmp.ne.s32.totalorder %s348, %s349
    %p358 = scmp.eq.s32.totalorder %s26, 0
    %p359 = por %p357, %p358
    %p360 = scmp.ne.s32.totalorder %s348, %s349
    %p361 = scmp.eq.s32.totalorder %s27, 3
    %p362 = por %p360, %p361
    %p364 = scmp.ne.s32.totalorder %s349, %s363
    %p365 = scmp.eq.s32.totalorder %s27, 0
    %p366 = por %p364, %p365
    %s367 = ssub.s32 %s28, %s40
    %s368 = ssub.s32 %s29, %s36
    %s369 = sor.u32 %s367, %s368
    %p370 = scmp.eq.s32.totalorder %s369, 0
    %s372 = sadd.s32 %s371, 1
    %s373 = scalar_select %p370, %s371, %s372
    %p376 = pneg %p370
    %p377 = scmp.eq.s32.totalorder %s21, 3
    %p378 = por %p376, %p377
    %p379 = scmp.ne.s32.totalorder %s371, %s374
    %p380 = scmp.eq.s32.totalorder %s21, 0
    %p381 = por %p379, %p380
    %p382 = scmp.ne.s32.totalorder %s371, %s374
    %p383 = scmp.eq.s32.totalorder %s26, 3
    %p384 = por %p382, %p383
    %p385 = scmp.ne.s32.totalorder %s374, %s375
    %p386 = scmp.eq.s32.totalorder %s26, 0
    %p387 = por %p385, %p386
    %p388 = scmp.ne.s32.totalorder %s374, %s375
    %p389 = scmp.eq.s32.totalorder %s27, 3
    %p390 = por %p388, %p389
    %p392 = scmp.ne.s32.totalorder %s375, %s391
    %p393 = scmp.eq.s32.totalorder %s27, 0
    %p394 = por %p392, %p393
    %s395 = ssub.s32 %s28, %s40
    %s396 = ssub.s32 %s29, %s36
    %s397 = sor.u32 %s395, %s396
    %p398 = scmp.eq.s32.totalorder %s397, 0
    %s400 = sadd.s32 %s399, 1
    %s401 = scalar_select %p398, %s399, %s400
    %p404 = pneg %p398
    %p405 = scmp.eq.s32.totalorder %s21, 3
    %p406 = por %p404, %p405
    %p407 = scmp.ne.s32.totalorder %s399, %s402
    %p408 = scmp.eq.s32.totalorder %s21, 0
    %p409 = por %p407, %p408
    %p410 = scmp.ne.s32.totalorder %s399, %s402
    %p411 = scmp.eq.s32.totalorder %s26, 3
    %p412 = por %p410, %p411
    %p413 = scmp.ne.s32.totalorder %s402, %s403
    %p414 = scmp.eq.s32.totalorder %s26, 0
    %p415 = por %p413, %p414
    %p416 = scmp.ne.s32.totalorder %s402, %s403
    %p417 = scmp.eq.s32.totalorder %s27, 3
    %p418 = por %p416, %p417
    %p420 = scmp.ne.s32.totalorder %s403, %s419
    %p421 = scmp.eq.s32.totalorder %s27, 0
    %p422 = por %p420, %p421
    %s423 = ssub.s32 %s28, %s40
    %s424 = ssub.s32 %s29, %s36
    %s425 = sor.u32 %s423, %s424
    %p426 = scmp.eq.s32.totalorder %s425, 0
    %s428 = sadd.s32 %s427, 1
    %s429 = scalar_select %p426, %s427, %s428
    %p432 = pneg %p426
    %p433 = scmp.eq.s32.totalorder %s21, 3
    %p434 = por %p432, %p433
    %p435 = scmp.ne.s32.totalorder %s427, %s430
    %p436 = scmp.eq.s32.totalorder %s21, 0
    %p437 = por %p435, %p436
    %p438 = scmp.ne.s32.totalorder %s427, %s430
    %p439 = scmp.eq.s32.totalorder %s26, 3
    %p440 = por %p438, %p439
    %p441 = scmp.ne.s32.totalorder %s430, %s431
    %p442 = scmp.eq.s32.totalorder %s26, 0
    %p443 = por %p441, %p442
    %p444 = scmp.ne.s32.totalorder %s430, %s431
    %p445 = scmp.eq.s32.totalorder %s27, 3
    %p446 = por %p444, %p445
    %p448 = scmp.ne.s32.totalorder %s431, %s447
    %p449 = scmp.eq.s32.totalorder %s27, 0
    %p450 = por %p448, %p449
    %p451 = scmp.le.s32.totalorder 1, %s21
    %p452 = scmp.lt.s32.totalorder %s21, 5
    %p453 = pnand %p451, %p452
    %p454 = pneg %p453
    // Predicated region
    $region9: #{up_forward.6} parent=5 // pred_check
      _
    $region10: #{up_forward.6} parent=5 // pred_check_branch
      %456 = sbr.rel (%p453) target = $region12
    $region11: #{up_forward.6} parent=5 // pred_region
      %s457 = ssub.s32 %s21, 1
      // Predicated region
      $region13: #{up_forward.6} parent=11 // pred_check
        %p458 = pneg %p254
      $region14: #{up_forward.6} parent=11 // pred_check_branch
        %460 = sbr.rel (%p458) target = $region16
      $region15: #{up_forward.6} parent=11 // pred_region
        _
      $region16: #{up_forward.6} parent=11 // pred_fallthru
        _
      // Predicated region
      $region17: #{up_forward.6} parent=11 // pred_check
        %p461 = pneg %p275
      $region18: #{up_forward.6} parent=11 // pred_check_branch
        %463 = sbr.rel (%p461) target = $region20
      $region19: #{up_forward.6} parent=11 // pred_region
        _
      $region20: #{up_forward.6} parent=11 // pred_fallthru
        _
      // Predicated region
      $region21: #{up_forward.6} parent=11 // pred_check
        %p464 = pneg %p296
      $region22: #{up_forward.6} parent=11 // pred_check_branch
        %466 = sbr.rel (%p464) target = $region24
      $region23: #{up_forward.6} parent=11 // pred_region
        _
      $region24: #{up_forward.6} parent=11 // pred_fallthru
        _
      // Predicated region
      $region25: #{up_forward.6} parent=11 // pred_check
        %p467 = pneg %p317
      $region26: #{up_forward.6} parent=11 // pred_check_branch
        %469 = sbr.rel (%p467) target = $region28
      $region27: #{up_forward.6} parent=11 // pred_region
        _
      $region28: #{up_forward.6} parent=11 // pred_fallthru
        _
      // Predicated region
      $region29: #{up_forward.6} parent=11 // pred_check
        %p470 = pneg %p338
      $region30: #{up_forward.6} parent=11 // pred_check_branch
        %472 = sbr.rel (%p470) target = $region32
      $region31: #{up_forward.6} parent=11 // pred_region
        _
      $region32: #{up_forward.6} parent=11 // pred_fallthru
        _
      // Predicated region
      $region33: #{up_forward.6} parent=11 // pred_check
        %p473 = pneg %p359
      $region34: #{up_forward.6} parent=11 // pred_check_branch
        %475 = sbr.rel (%p473) target = $region36
      $region35: #{up_forward.6} parent=11 // pred_region
        _
      $region36: #{up_forward.6} parent=11 // pred_fallthru
        _
    $region12: #{up_forward.6} parent=5 // pred_fallthru
      _
    %p476 = scmp.lt.s32.totalorder %s21, 4
    // Predicated region
    $region37: #{up_forward.6} parent=5 // pred_check
      %p477 = pneg %p476
    $region38: #{up_forward.6} parent=5 // pred_check_branch
      %479 = sbr.rel (%p477) target = $region40
    $region39: #{up_forward.6} parent=5 // pred_region
      // Predicated region
      $region41: #{up_forward.6} parent=39 // pred_check
        %p480 = pneg %p55
      $region42: #{up_forward.6} parent=39 // pred_check_branch
        %482 = sbr.rel (%p480) target = $region44
      $region43: #{up_forward.6} parent=39 // pred_region
        %s483 = smul.u32 8, %s29
        %p484 = scmp.lt.s32.totalorder %s28, 1
        %s485 = scalar_select %p484, %s28, 1
        %p486 = scmp.lt.s32.totalorder %s483, 15
        %s487 = scalar_select %p486, %s483, 15
        %s488 = smul.addr %s487, 2
        %s489 = smul.addr %s485, 32
        %s490 = sadd.s32 %s488, %s489
        %s491 = smul.addr %s490, 8
        %s492 = scalar_lea.vmem %s0, %s491
        %s493 = smul.u32 8, %s29
      $region44: #{up_forward.6} parent=39 // pred_fallthru
        _
      // Predicated region
      $region45: #{up_forward.6} parent=39 // pred_check
        %p494 = pneg %p91
      $region46: #{up_forward.6} parent=39 // pred_check_branch
        %496 = sbr.rel (%p494) target = $region48
      $region47: #{up_forward.6} parent=39 // pred_region
        %s497 = smul.u32 %s29, 8
        %s498 = ssub.s32 %s497, 1
        %p499 = scmp.gt.s32.totalorder %s498, 0
        %s500 = scalar_select %p499, %s498, 0
        %p501 = scmp.lt.s32.totalorder %s28, 1
        %s502 = scalar_select %p501, %s28, 1
        %p503 = scmp.lt.s32.totalorder %s500, 15
        %s504 = scalar_select %p503, %s500, 15
        %s505 = smul.addr %s504, 2
        %s506 = smul.addr %s502, 32
        %s507 = sadd.s32 %s505, %s506
        %s508 = smul.addr %s507, 8
        %s509 = scalar_lea.vmem %s1, %s508
        %s510 = smul.u32 %s29, 8
        %s511 = ssub.s32 %s510, 1
        %p512 = scmp.gt.s32.totalorder %s511, 0
        %s513 = scalar_select %p512, %s511, 0
      $region48: #{up_forward.6} parent=39 // pred_fallthru
        _
      // Predicated region
      $region49: #{up_forward.6} parent=39 // pred_check
        %p514 = pneg %p127
      $region50: #{up_forward.6} parent=39 // pred_check_branch
        %516 = sbr.rel (%p514) target = $region52
      $region51: #{up_forward.6} parent=39 // pred_region
        %s517 = sadd.s32 %s29, 1
        %s518 = smul.u32 %s517, 8
        %p519 = scmp.lt.s32.totalorder %s518, 15
        %s520 = scalar_select %p519, %s518, 15
        %p521 = scmp.lt.s32.totalorder %s28, 1
        %s522 = scalar_select %p521, %s28, 1
        %p523 = scmp.lt.s32.totalorder %s520, 15
        %s524 = scalar_select %p523, %s520, 15
        %s525 = smul.addr %s524, 2
        %s526 = smul.addr %s522, 32
        %s527 = sadd.s32 %s525, %s526
        %s528 = smul.addr %s527, 8
        %s529 = scalar_lea.vmem %s2, %s528
        %s530 = sadd.s32 %s29, 1
        %s531 = smul.u32 %s530, 8
        %p532 = scmp.lt.s32.totalorder %s531, 15
        %s533 = scalar_select %p532, %s531, 15
      $region52: #{up_forward.6} parent=39 // pred_fallthru
        _
      // Predicated region
      $region53: #{up_forward.6} parent=39 // pred_check
        %p534 = pneg %p155
      $region54: #{up_forward.6} parent=39 // pred_check_branch
        %536 = sbr.rel (%p534) target = $region56
      $region55: #{up_forward.6} parent=39 // pred_region
        %s537 = smul.u32 8, %s29
        %p538 = scmp.lt.s32.totalorder %s28, 1
        %s539 = scalar_select %p538, %s28, 1
        %p540 = scmp.lt.s32.totalorder %s537, 15
        %s541 = scalar_select %p540, %s537, 15
        %s542 = smul.addr %s541, 2
        %s543 = smul.addr %s539, 32
        %s544 = sadd.s32 %s542, %s543
        %s545 = smul.addr %s544, 8
        %s546 = scalar_lea.vmem %s3, %s545
        %s547 = smul.u32 8, %s29
      $region56: #{up_forward.6} parent=39 // pred_fallthru
        _
      // Predicated region
      $region57: #{up_forward.6} parent=39 // pred_check
        %p548 = pneg %p191
      $region58: #{up_forward.6} parent=39 // pred_check_branch
        %550 = sbr.rel (%p548) target = $region60
      $region59: #{up_forward.6} parent=39 // pred_region
        %s551 = smul.u32 %s29, 8
        %s552 = ssub.s32 %s551, 1
        %p553 = scmp.gt.s32.totalorder %s552, 0
        %s554 = scalar_select %p553, %s552, 0
        %p555 = scmp.lt.s32.totalorder %s28, 1
        %s556 = scalar_select %p555, %s28, 1
        %p557 = scmp.lt.s32.totalorder %s554, 15
        %s558 = scalar_select %p557, %s554, 15
        %s559 = smul.addr %s558, 2
        %s560 = smul.addr %s556, 32
        %s561 = sadd.s32 %s559, %s560
        %s562 = smul.addr %s561, 8
        %s563 = scalar_lea.vmem %s4, %s562
        %s564 = smul.u32 %s29, 8
        %s565 = ssub.s32 %s564, 1
        %p566 = scmp.gt.s32.totalorder %s565, 0
        %s567 = scalar_select %p566, %s565, 0
      $region60: #{up_forward.6} parent=39 // pred_fallthru
        _
      // Predicated region
      $region61: #{up_forward.6} parent=39 // pred_check
        %p568 = pneg %p227
      $region62: #{up_forward.6} parent=39 // pred_check_branch
        %570 = sbr.rel (%p568) target = $region64
      $region63: #{up_forward.6} parent=39 // pred_region
        %s571 = sadd.s32 %s29, 1
        %s572 = smul.u32 %s571, 8
        %p573 = scmp.lt.s32.totalorder %s572, 15
        %s574 = scalar_select %p573, %s572, 15
        %p575 = scmp.lt.s32.totalorder %s28, 1
        %s576 = scalar_select %p575, %s28, 1
        %p577 = scmp.lt.s32.totalorder %s574, 15
        %s578 = scalar_select %p577, %s574, 15
        %s579 = smul.addr %s578, 2
        %s580 = smul.addr %s576, 32
        %s581 = sadd.s32 %s579, %s580
        %s582 = smul.addr %s581, 8
        %s583 = scalar_lea.vmem %s5, %s582
        %s584 = sadd.s32 %s29, 1
        %s585 = smul.u32 %s584, 8
        %p586 = scmp.lt.s32.totalorder %s585, 15
        %s587 = scalar_select %p586, %s585, 15
      $region64: #{up_forward.6} parent=39 // pred_fallthru
        _
    $region40: #{up_forward.6} parent=5 // pred_fallthru
      _
    %p588 = scmp.le.s32.totalorder 1, %s21
    %p589 = scmp.lt.s32.totalorder %s21, 5
    %p590 = pnand %p588, %p589
    %p591 = pneg %p590
    // Predicated region
    $region65: #{up_forward.6} parent=5 // pred_check
      _
    $region66: #{up_forward.6} parent=5 // pred_check_branch
      %593 = sbr.rel (%p590) target = $region68
    $region67: #{up_forward.6} parent=5 // pred_region
      %s594 = ssub.s32 %s21, 1
      %s595 = smul.u32 8, %s31
      %p596 = scmp.lt.s32.totalorder %s30, 1
      %s597 = scalar_select %p596, %s30, 1
      %p598 = scmp.lt.s32.totalorder %s595, 15
      %s599 = scalar_select %p598, %s595, 15
      %s600 = smul.addr %s599, 2
      %s601 = smul.addr %s597, 32
      %s602 = sadd.s32 %s600, %s601
      %s603 = smul.addr %s602, 8
      %s604 = scalar_lea.vmem %s0, %s603
      %p605 = pneg %p61
      %p606 = pneg %p58
      %s607 = smul.u32 %s31, 8
      %s608 = ssub.s32 %s607, 1
      %p609 = scmp.gt.s32.totalorder %s608, 0
      %s610 = scalar_select %p609, %s608, 0
      %p611 = scmp.lt.s32.totalorder %s30, 1
      %s612 = scalar_select %p611, %s30, 1
      %p613 = scmp.lt.s32.totalorder %s610, 15
      %s614 = scalar_select %p613, %s610, 15
      %s615 = smul.addr %s614, 2
      %s616 = smul.addr %s612, 32
      %s617 = sadd.s32 %s615, %s616
      %s618 = smul.addr %s617, 8
      %s619 = scalar_lea.vmem %s1, %s618
      %p620 = pneg %p97
      %p621 = pneg %p94
      %s622 = sadd.s32 %s31, 1
      %s623 = smul.u32 %s622, 8
      %p624 = scmp.lt.s32.totalorder %s623, 15
      %s625 = scalar_select %p624, %s623, 15
      %p626 = scmp.lt.s32.totalorder %s30, 1
      %s627 = scalar_select %p626, %s30, 1
      %p628 = scmp.lt.s32.totalorder %s625, 15
      %s629 = scalar_select %p628, %s625, 15
      %s630 = smul.addr %s629, 2
      %s631 = smul.addr %s627, 32
      %s632 = sadd.s32 %s630, %s631
      %s633 = smul.addr %s632, 8
      %s634 = scalar_lea.vmem %s2, %s633
      %p635 = pneg %p133
      %p636 = pneg %p130
      %s637 = smul.u32 8, %s31
      %p638 = scmp.lt.s32.totalorder %s30, 1
      %s639 = scalar_select %p638, %s30, 1
      %p640 = scmp.lt.s32.totalorder %s637, 15
      %s641 = scalar_select %p640, %s637, 15
      %s642 = smul.addr %s641, 2
      %s643 = smul.addr %s639, 32
      %s644 = sadd.s32 %s642, %s643
      %s645 = smul.addr %s644, 8
      %s646 = scalar_lea.vmem %s3, %s645
      %p647 = pneg %p161
      %p648 = pneg %p158
      %s649 = smul.u32 %s31, 8
      %s650 = ssub.s32 %s649, 1
      %p651 = scmp.gt.s32.totalorder %s650, 0
      %s652 = scalar_select %p651, %s650, 0
      %p653 = scmp.lt.s32.totalorder %s30, 1
      %s654 = scalar_select %p653, %s30, 1
      %p655 = scmp.lt.s32.totalorder %s652, 15
      %s656 = scalar_select %p655, %s652, 15
      %s657 = smul.addr %s656, 2
      %s658 = smul.addr %s654, 32
      %s659 = sadd.s32 %s657, %s658
      %s660 = smul.addr %s659, 8
      %s661 = scalar_lea.vmem %s4, %s660
      %p662 = pneg %p197
      %p663 = pneg %p194
      %s664 = sadd.s32 %s31, 1
      %s665 = smul.u32 %s664, 8
      %p666 = scmp.lt.s32.totalorder %s665, 15
      %s667 = scalar_select %p666, %s665, 15
      %p668 = scmp.lt.s32.totalorder %s30, 1
      %s669 = scalar_select %p668, %s30, 1
      %p670 = scmp.lt.s32.totalorder %s667, 15
      %s671 = scalar_select %p670, %s667, 15
      %s672 = smul.addr %s671, 2
      %s673 = smul.addr %s669, 32
      %s674 = sadd.s32 %s672, %s673
      %s675 = smul.addr %s674, 8
      %s676 = scalar_lea.vmem %s5, %s675
      %p677 = pneg %p233
      %p678 = pneg %p230
      %p679 = pneg %p254
      %p680 = pneg %p251
      %p681 = pneg %p275
      %p682 = pneg %p272
      %p683 = pneg %p296
      %p684 = pneg %p293
      %p685 = pneg %p317
      %p686 = pneg %p314
      %p687 = pneg %p338
      %p688 = pneg %p335
      %p689 = pneg %p359
      %p690 = pneg %p356
      %p691 = pneg %p387
      %p692 = pneg %p384
      %s693 = smul.u32 8, %s31
      %p694 = scmp.lt.s32.totalorder %s30, 1
      %s695 = scalar_select %p694, %s30, 1
      %p696 = scmp.lt.s32.totalorder %s693, 15
      %s697 = scalar_select %p696, %s693, 15
      %s698 = smul.addr %s697, 2
      %s699 = smul.addr %s695, 32
      %s700 = sadd.s32 %s698, %s699
      %s701 = smul.addr %s700, 8
      %s702 = scalar_lea.vmem %s12, %s701
      %p703 = pneg %p415
      %p704 = pneg %p412
      %p705 = scmp.lt.s32.totalorder %s30, 1
      %s706 = scalar_select %p705, %s30, 1
      %p707 = scmp.lt.s32.totalorder %s31, 1
      %s708 = scalar_select %p707, %s31, 1
      %s709 = smul.addr %s706, 2
      %s710 = sadd.s32 %s708, %s709
      %s711 = smul.addr %s710, 8
      %s712 = scalar_lea.vmem %s13, %s711
      %p713 = pneg %p443
      %p714 = pneg %p440
      %p715 = scmp.lt.s32.totalorder %s30, 1
      %s716 = scalar_select %p715, %s30, 1
      %p717 = scmp.lt.s32.totalorder %s31, 1
      %s718 = scalar_select %p717, %s31, 1
      %s719 = smul.addr %s716, 2
      %s720 = sadd.s32 %s718, %s719
      %s721 = smul.addr %s720, 8
      %s722 = scalar_lea.vmem %s14, %s721
      %s723 = smul.u32 8, %s31
      %p724 = scmp.lt.s32.totalorder %s30, 1
      %s725 = scalar_select %p724, %s30, 1
      %p726 = scmp.lt.s32.totalorder %s723, 15
      %s727 = scalar_select %p726, %s723, 15
      %s728 = smul.addr %s727, 2
      %s729 = smul.addr %s725, 32
      %s730 = sadd.s32 %s728, %s729
      %s731 = smul.addr %s730, 8
      %s732 = scalar_lea.vmem %s0, %s731
      %s733 = smul.u32 8, %s31
      %s734 = smul.u32 %s31, 8
      %s735 = ssub.s32 %s734, 1
      %p736 = scmp.gt.s32.totalorder %s735, 0
      %s737 = scalar_select %p736, %s735, 0
      %p738 = scmp.lt.s32.totalorder %s30, 1
      %s739 = scalar_select %p738, %s30, 1
      %p740 = scmp.lt.s32.totalorder %s737, 15
      %s741 = scalar_select %p740, %s737, 15
      %s742 = smul.addr %s741, 2
      %s743 = smul.addr %s739, 32
      %s744 = sadd.s32 %s742, %s743
      %s745 = smul.addr %s744, 8
      %s746 = scalar_lea.vmem %s1, %s745
      %s747 = smul.u32 %s31, 8
      %s748 = ssub.s32 %s747, 1
      %p749 = scmp.gt.s32.totalorder %s748, 0
      %s750 = scalar_select %p749, %s748, 0
      %s751 = sadd.s32 %s31, 1
      %s752 = smul.u32 %s751, 8
      %p753 = scmp.lt.s32.totalorder %s752, 15
      %s754 = scalar_select %p753, %s752, 15
      %p755 = scmp.lt.s32.totalorder %s30, 1
      %s756 = scalar_select %p755, %s30, 1
      %p757 = scmp.lt.s32.totalorder %s754, 15
      %s758 = scalar_select %p757, %s754, 15
      %s759 = smul.addr %s758, 2
      %s760 = smul.addr %s756, 32
      %s761 = sadd.s32 %s759, %s760
      %s762 = smul.addr %s761, 8
      %s763 = scalar_lea.vmem %s2, %s762
      %s764 = sadd.s32 %s31, 1
      %s765 = smul.u32 %s764, 8
      %p766 = scmp.lt.s32.totalorder %s765, 15
      %s767 = scalar_select %p766, %s765, 15
      %s768 = smul.u32 8, %s31
      %p769 = scmp.lt.s32.totalorder %s30, 1
      %s770 = scalar_select %p769, %s30, 1
      %p771 = scmp.lt.s32.totalorder %s768, 15
      %s772 = scalar_select %p771, %s768, 15
      %s773 = smul.addr %s772, 2
      %s774 = smul.addr %s770, 32
      %s775 = sadd.s32 %s773, %s774
      %s776 = smul.addr %s775, 8
      %s777 = scalar_lea.vmem %s3, %s776
      %s778 = smul.u32 8, %s31
      %s779 = smul.u32 %s31, 8
      %s780 = ssub.s32 %s779, 1
      %p781 = scmp.gt.s32.totalorder %s780, 0
      %s782 = scalar_select %p781, %s780, 0
      %p783 = scmp.lt.s32.totalorder %s30, 1
      %s784 = scalar_select %p783, %s30, 1
      %p785 = scmp.lt.s32.totalorder %s782, 15
      %s786 = scalar_select %p785, %s782, 15
      %s787 = smul.addr %s786, 2
      %s788 = smul.addr %s784, 32
      %s789 = sadd.s32 %s787, %s788
      %s790 = smul.addr %s789, 8
      %s791 = scalar_lea.vmem %s4, %s790
      %s792 = smul.u32 %s31, 8
      %s793 = ssub.s32 %s792, 1
      %p794 = scmp.gt.s32.totalorder %s793, 0
      %s795 = scalar_select %p794, %s793, 0
      %s796 = sadd.s32 %s31, 1
      %s797 = smul.u32 %s796, 8
      %p798 = scmp.lt.s32.totalorder %s797, 15
      %s799 = scalar_select %p798, %s797, 15
      %p800 = scmp.lt.s32.totalorder %s30, 1
      %s801 = scalar_select %p800, %s30, 1
      %p802 = scmp.lt.s32.totalorder %s799, 15
      %s803 = scalar_select %p802, %s799, 15
      %s804 = smul.addr %s803, 2
      %s805 = smul.addr %s801, 32
      %s806 = sadd.s32 %s804, %s805
      %s807 = smul.addr %s806, 8
      %s808 = scalar_lea.vmem %s5, %s807
      %s809 = sadd.s32 %s31, 1
      %s810 = smul.u32 %s809, 8
      %p811 = scmp.lt.s32.totalorder %s810, 15
      %s812 = scalar_select %p811, %s810, 15
      %s813 = smul.u32 8, %s31
      %p814 = scmp.lt.s32.totalorder %s30, 1
      %s815 = scalar_select %p814, %s30, 1
      %p816 = scmp.lt.s32.totalorder %s813, 15
      %s817 = scalar_select %p816, %s813, 15
      %s818 = smul.addr %s817, 2
      %s819 = smul.addr %s815, 32
      %s820 = sadd.s32 %s818, %s819
      %s821 = smul.addr %s820, 8
      %s822 = scalar_lea.vmem %s12, %s821
      %s823 = smul.u32 8, %s31
      %p824 = scmp.lt.s32.totalorder %s30, 1
      %s825 = scalar_select %p824, %s30, 1
      %p826 = scmp.lt.s32.totalorder %s31, 1
      %s827 = scalar_select %p826, %s31, 1
      %s828 = smul.addr %s825, 2
      %s829 = sadd.s32 %s827, %s828
      %s830 = smul.addr %s829, 8
      %s831 = scalar_lea.vmem %s13, %s830
      %p832 = scmp.lt.s32.totalorder %s30, 1
      %s833 = scalar_select %p832, %s30, 1
      %p834 = scmp.lt.s32.totalorder %s31, 1
      %s835 = scalar_select %p834, %s31, 1
      %s836 = smul.addr %s833, 2
      %s837 = sadd.s32 %s835, %s836
      %s838 = smul.addr %s837, 8
      %s839 = scalar_lea.vmem %s14, %s838
      %vm841 = vcmask 24576
      %842 = vst.msk [vmem:[#allocation2] sm:$0x1] %vm841, 0.0
      %843 = vst.msk [vmem:[#allocation2 + $0x18] sm:$0x1] %vm841, 0.0
      %844 = vst.msk [vmem:[#allocation2 + $0x30] sm:$0x1] %vm841, 0.0
      %845 = vst.msk [vmem:[#allocation2 + $0x48] sm:$0x1] %vm841, 0.0
      %846 = vst.msk [vmem:[#allocation2 + $0x60] sm:$0x1] %vm841, 0.0
      %847 = vst.msk [vmem:[#allocation2 + $0x78] sm:$0x1] %vm841, 0.0
      %848 = vst.msk [vmem:[#allocation2 + $0x90] sm:$0x1] %vm841, 0.0
      %849 = vst.msk [vmem:[#allocation2 + $0xa8] sm:$0x1] %vm841, 0.0
      %850 = vst.msk [vmem:[#allocation2 + $0xc0] sm:$0x1] %vm841, 0.0
      %851 = vst.msk [vmem:[#allocation2 + $0xd8] sm:$0x1] %vm841, 0.0
      %852 = vst.msk [vmem:[#allocation2 + $0x11] sm:$0x1] %vm841, 0.0
      %853 = vst.msk [vmem:[#allocation2 + $0x29] sm:$0x1] %vm841, 0.0
      %854 = vst.msk [vmem:[#allocation2 + $0x41] sm:$0x1] %vm841, 0.0
      %855 = vst.msk [vmem:[#allocation2 + $0x59] sm:$0x1] %vm841, 0.0
      %856 = vst.msk [vmem:[#allocation2 + $0x71] sm:$0x1] %vm841, 0.0
      %857 = vst.msk [vmem:[#allocation2 + $0x89] sm:$0x1] %vm841, 0.0
      %858 = vst.msk [vmem:[#allocation2 + $0xa1] sm:$0x1] %vm841, 0.0
      %859 = vst.msk [vmem:[#allocation2 + $0xb9] sm:$0x1] %vm841, 0.0
      %860 = vst.msk [vmem:[#allocation2 + $0xd1] sm:$0x1] %vm841, 0.0
      %861 = vst.msk [vmem:[#allocation2 + $0xe9] sm:$0x1] %vm841, 0.0
      %v862 = vld [vmem:[%s732] sm:$0xff]
      %v863 = vld [vmem:[%s732 + $0x8] sm:$0xff]
      %v864 = vld [vmem:[%s732 + $0x10] sm:$0xff]
      %v865 = vld [vmem:[%s732 + $0x18] sm:$0xff]
      %v866 = vld [vmem:[%s732 + $0x20] sm:$0xff]
      %v867 = vld [vmem:[%s732 + $0x28] sm:$0xff]
      %v868 = vld [vmem:[%s732 + $0x30] sm:$0xff]
      %v869 = vld [vmem:[%s732 + $0x38] sm:$0xff]
      %v870 = vld [vmem:[%s732 + $0x40] sm:$0xff]
      %v871 = vld [vmem:[%s732 + $0x48] sm:$0xff]
      %v872 = vld [vmem:[%s732 + $0x50] sm:$0xff]
      %v873 = vld [vmem:[%s732 + $0x58] sm:$0xff]
      %v874 = vld [vmem:[%s732 + $0x60] sm:$0xff]
      %v875 = vld [vmem:[%s732 + $0x68] sm:$0xff]
      %v876 = vld [vmem:[%s732 + $0x70] sm:$0xff]
      %v877 = vld [vmem:[%s732 + $0x78] sm:$0xff]
      %v878 = vld [vmem:[%s6] sm:$0x1]
      %v879 = vld [vmem:[%s7] sm:$0x1]
      %v881 = vlaneseq
      %v882 = vshrl.u32 %v881, 7
      %v883 = vsub.s32 0, %v882
      %v884 = vrot.slane %v878, %v883
      %v886 = vmul.f32 %v862, %v884
      %v887 = vmul.f32 %v863, %v884
      %v888 = vmul.f32 %v864, %v884
      %v889 = vmul.f32 %v865, %v884
      %v890 = vmul.f32 %v866, %v884
      %v891 = vmul.f32 %v867, %v884
      %v892 = vmul.f32 %v868, %v884
      %v893 = vmul.f32 %v869, %v884
      %v894 = vmul.f32 %v870, %v884
      %v895 = vmul.f32 %v871, %v884
      %v896 = vmul.f32 %v872, %v884
      %v897 = vmul.f32 %v873, %v884
      %v898 = vmul.f32 %v874, %v884
      %v899 = vmul.f32 %v875, %v884
      %v900 = vmul.f32 %v876, %v884
      %v901 = vmul.f32 %v877, %v884
      %v903 = vlaneseq
      %v904 = vshrl.u32 %v903, 7
      %v905 = vsub.s32 0, %v904
      %v906 = vrot.slane %v879, %v905
      %v908 = vadd.f32 %v886, %v906
      %v909 = vadd.f32 %v887, %v906
      %v910 = vadd.f32 %v888, %v906
      %v911 = vadd.f32 %v889, %v906
      %v912 = vadd.f32 %v890, %v906
      %v913 = vadd.f32 %v891, %v906
      %v914 = vadd.f32 %v892, %v906
      %v915 = vadd.f32 %v893, %v906
      %v916 = vadd.f32 %v894, %v906
      %v917 = vadd.f32 %v895, %v906
      %v918 = vadd.f32 %v896, %v906
      %v919 = vadd.f32 %v897, %v906
      %v920 = vadd.f32 %v898, %v906
      %v921 = vadd.f32 %v899, %v906
      %v922 = vadd.f32 %v900, %v906
      %v923 = vadd.f32 %v901, %v906
      %v924 = vmax.f32 %v908, 0.0
      %v925 = vmax.f32 %v909, 0.0
      %v926 = vmax.f32 %v910, 0.0
      %v927 = vmax.f32 %v911, 0.0
      %v928 = vmax.f32 %v912, 0.0
      %v929 = vmax.f32 %v913, 0.0
      %v930 = vmax.f32 %v914, 0.0
      %v931 = vmax.f32 %v915, 0.0
      %v932 = vmax.f32 %v916, 0.0
      %v933 = vmax.f32 %v917, 0.0
      %v934 = vmax.f32 %v918, 0.0
      %v935 = vmax.f32 %v919, 0.0
      %v936 = vmax.f32 %v920, 0.0
      %v937 = vmax.f32 %v921, 0.0
      %v938 = vmax.f32 %v922, 0.0
      %v939 = vmax.f32 %v923, 0.0
      %v940 = vld [vmem:[%s777] sm:$0xff]
      %v941 = vld [vmem:[%s777 + $0x8] sm:$0xff]
      %v942 = vld [vmem:[%s777 + $0x10] sm:$0xff]
      %v943 = vld [vmem:[%s777 + $0x18] sm:$0xff]
      %v944 = vld [vmem:[%s777 + $0x20] sm:$0xff]
      %v945 = vld [vmem:[%s777 + $0x28] sm:$0xff]
      %v946 = vld [vmem:[%s777 + $0x30] sm:$0xff]
      %v947 = vld [vmem:[%s777 + $0x38] sm:$0xff]
      %v948 = vld [vmem:[%s777 + $0x40] sm:$0xff]
      %v949 = vld [vmem:[%s777 + $0x48] sm:$0xff]
      %v950 = vld [vmem:[%s777 + $0x50] sm:$0xff]
      %v951 = vld [vmem:[%s777 + $0x58] sm:$0xff]
      %v952 = vld [vmem:[%s777 + $0x60] sm:$0xff]
      %v953 = vld [vmem:[%s777 + $0x68] sm:$0xff]
      %v954 = vld [vmem:[%s777 + $0x70] sm:$0xff]
      %v955 = vld [vmem:[%s777 + $0x78] sm:$0xff]
      %v956 = vld [vmem:[%s8] sm:$0x1]
      %v957 = vld [vmem:[%s9] sm:$0x1]
      %v959 = vlaneseq
      %v960 = vshrl.u32 %v959, 7
      %v961 = vsub.s32 0, %v960
      %v962 = vrot.slane %v956, %v961
      %v964 = vmul.f32 %v940, %v962
      %v965 = vmul.f32 %v941, %v962
      %v966 = vmul.f32 %v942, %v962
      %v967 = vmul.f32 %v943, %v962
      %v968 = vmul.f32 %v944, %v962
      %v969 = vmul.f32 %v945, %v962
      %v970 = vmul.f32 %v946, %v962
      %v971 = vmul.f32 %v947, %v962
      %v972 = vmul.f32 %v948, %v962
      %v973 = vmul.f32 %v949, %v962
      %v974 = vmul.f32 %v950, %v962
      %v975 = vmul.f32 %v951, %v962
      %v976 = vmul.f32 %v952, %v962
      %v977 = vmul.f32 %v953, %v962
      %v978 = vmul.f32 %v954, %v962
      %v979 = vmul.f32 %v955, %v962
      %v981 = vlaneseq
      %v982 = vshrl.u32 %v981, 7
      %v983 = vsub.s32 0, %v982
      %v984 = vrot.slane %v957, %v983
      %v986 = vadd.f32 %v964, %v984
      %v987 = vadd.f32 %v965, %v984
      %v988 = vadd.f32 %v966, %v984
      %v989 = vadd.f32 %v967, %v984
      %v990 = vadd.f32 %v968, %v984
      %v991 = vadd.f32 %v969, %v984
      %v992 = vadd.f32 %v970, %v984
      %v993 = vadd.f32 %v971, %v984
      %v994 = vadd.f32 %v972, %v984
      %v995 = vadd.f32 %v973, %v984
      %v996 = vadd.f32 %v974, %v984
      %v997 = vadd.f32 %v975, %v984
      %v998 = vadd.f32 %v976, %v984
      %v999 = vadd.f32 %v977, %v984
      %v1000 = vadd.f32 %v978, %v984
      %v1001 = vadd.f32 %v979, %v984
      %v1002 = vmax.f32 %v986, 0.0
      %v1003 = vmax.f32 %v987, 0.0
      %v1004 = vmax.f32 %v988, 0.0
      %v1005 = vmax.f32 %v989, 0.0
      %v1006 = vmax.f32 %v990, 0.0
      %v1007 = vmax.f32 %v991, 0.0
      %v1008 = vmax.f32 %v992, 0.0
      %v1009 = vmax.f32 %v993, 0.0
      %v1010 = vmax.f32 %v994, 0.0
      %v1011 = vmax.f32 %v995, 0.0
      %v1012 = vmax.f32 %v996, 0.0
      %v1013 = vmax.f32 %v997, 0.0
      %v1014 = vmax.f32 %v998, 0.0
      %v1015 = vmax.f32 %v999, 0.0
      %v1016 = vmax.f32 %v1000, 0.0
      %v1017 = vmax.f32 %v1001, 0.0
      %1034 = vrot.lane.b32.xlu0 %v1002, 2
      %v1035 = vpop.permute.xlu0 %1034
      %1036 = vrot.lane.b32.xlu0 %v1003, 2
      %v1037 = vpop.permute.xlu0 %1036
      %1038 = vrot.lane.b32.xlu0 %v1004, 2
      %v1039 = vpop.permute.xlu0 %1038
      %1040 = vrot.lane.b32.xlu0 %v1005, 2
      %v1041 = vpop.permute.xlu0 %1040
      %1042 = vrot.lane.b32.xlu0 %v1006, 2
      %v1043 = vpop.permute.xlu0 %1042
      %1044 = vrot.lane.b32.xlu0 %v1007, 2
      %v1045 = vpop.permute.xlu0 %1044
      %1046 = vrot.lane.b32.xlu0 %v1008, 2
      %v1047 = vpop.permute.xlu0 %1046
      %1048 = vrot.lane.b32.xlu0 %v1009, 2
      %v1049 = vpop.permute.xlu0 %1048
      %1050 = vrot.lane.b32.xlu0 %v1010, 2
      %v1051 = vpop.permute.xlu0 %1050
      %1052 = vrot.lane.b32.xlu0 %v1011, 2
      %v1053 = vpop.permute.xlu0 %1052
      %1054 = vrot.lane.b32.xlu0 %v1012, 2
      %v1055 = vpop.permute.xlu0 %1054
      %1056 = vrot.lane.b32.xlu0 %v1013, 2
      %v1057 = vpop.permute.xlu0 %1056
      %1058 = vrot.lane.b32.xlu0 %v1014, 2
      %v1059 = vpop.permute.xlu0 %1058
      %1060 = vrot.lane.b32.xlu0 %v1015, 2
      %v1061 = vpop.permute.xlu0 %1060
      %1062 = vrot.lane.b32.xlu0 %v1016, 2
      %v1063 = vpop.permute.xlu0 %1062
      %1064 = vrot.lane.b32.xlu0 %v1017, 2
      %v1065 = vpop.permute.xlu0 %1064
      %vm1082 = vcmask 15360
      %v1083 = vsel %vm1082, %v924, %v1035
      %v1084 = vsel %vm1082, %v925, %v1037
      %v1085 = vsel %vm1082, %v926, %v1039
      %v1086 = vsel %vm1082, %v927, %v1041
      %v1087 = vsel %vm1082, %v928, %v1043
      %v1088 = vsel %vm1082, %v929, %v1045
      %v1089 = vsel %vm1082, %v930, %v1047
      %v1090 = vsel %vm1082, %v931, %v1049
      %v1091 = vsel %vm1082, %v932, %v1051
      %v1092 = vsel %vm1082, %v933, %v1053
      %v1093 = vsel %vm1082, %v934, %v1055
      %v1094 = vsel %vm1082, %v935, %v1057
      %v1095 = vsel %vm1082, %v936, %v1059
      %v1096 = vsel %vm1082, %v937, %v1061
      %v1097 = vsel %vm1082, %v938, %v1063
      %v1098 = vsel %vm1082, %v939, %v1065
      %s1099 = scalar_lea.vmem [#allocation2], 24
      %vm1100 = vcmask 31744
      %1101 = vst.msk [vmem:[%s1099 + $0x1] sm:$0xff] %vm1100, %v1083
      %1102 = vst.msk [vmem:[%s1099 + $0x9] sm:$0xff] %vm1100, %v1084
      %1103 = vst.msk [vmem:[%s1099 + $0x19] sm:$0xff] %vm1100, %v1085
      %1104 = vst.msk [vmem:[%s1099 + $0x21] sm:$0xff] %vm1100, %v1086
      %1105 = vst.msk [vmem:[%s1099 + $0x31] sm:$0xff] %vm1100, %v1087
      %1106 = vst.msk [vmem:[%s1099 + $0x39] sm:$0xff] %vm1100, %v1088
      %1107 = vst.msk [vmem:[%s1099 + $0x49] sm:$0xff] %vm1100, %v1089
      %1108 = vst.msk [vmem:[%s1099 + $0x51] sm:$0xff] %vm1100, %v1090
      %1109 = vst.msk [vmem:[%s1099 + $0x61] sm:$0xff] %vm1100, %v1091
      %1110 = vst.msk [vmem:[%s1099 + $0x69] sm:$0xff] %vm1100, %v1092
      %1111 = vst.msk [vmem:[%s1099 + $0x79] sm:$0xff] %vm1100, %v1093
      %1112 = vst.msk [vmem:[%s1099 + $0x81] sm:$0xff] %vm1100, %v1094
      %1113 = vst.msk [vmem:[%s1099 + $0x91] sm:$0xff] %vm1100, %v1095
      %1114 = vst.msk [vmem:[%s1099 + $0x99] sm:$0xff] %vm1100, %v1096
      %1115 = vst.msk [vmem:[%s1099 + $0xa9] sm:$0xff] %vm1100, %v1097
      %1116 = vst.msk [vmem:[%s1099 + $0xb1] sm:$0xff] %vm1100, %v1098
      %v1117 = vld [vmem:[%s746] sm:$0xff]
      %v1118 = vld [vmem:[%s746 + $0x8] sm:$0xff]
      %v1119 = vld [vmem:[%s6] sm:$0x1]
      %v1120 = vld [vmem:[%s7] sm:$0x1]
      %v1122 = vlaneseq
      %v1123 = vshrl.u32 %v1122, 7
      %v1124 = vsub.s32 0, %v1123
      %v1125 = vrot.slane %v1119, %v1124
      %v1127 = vmul.f32 %v1117, %v1125
      %v1128 = vmul.f32 %v1118, %v1125
      %v1130 = vlaneseq
      %v1131 = vshrl.u32 %v1130, 7
      %v1132 = vsub.s32 0, %v1131
      %v1133 = vrot.slane %v1120, %v1132
      %v1135 = vadd.f32 %v1127, %v1133
      %v1136 = vadd.f32 %v1128, %v1133
      %v1137 = vmax.f32 %v1135, 0.0
      %v1138 = vmax.f32 %v1136, 0.0
      %v1139 = vld [vmem:[%s791] sm:$0xff]
      %v1140 = vld [vmem:[%s791 + $0x8] sm:$0xff]
      %v1141 = vld [vmem:[%s8] sm:$0x1]
      %v1142 = vld [vmem:[%s9] sm:$0x1]
      %v1144 = vlaneseq
      %v1145 = vshrl.u32 %v1144, 7
      %v1146 = vsub.s32 0, %v1145
      %v1147 = vrot.slane %v1141, %v1146
      %v1149 = vmul.f32 %v1139, %v1147
      %v1150 = vmul.f32 %v1140, %v1147
      %v1152 = vlaneseq
      %v1153 = vshrl.u32 %v1152, 7
      %v1154 = vsub.s32 0, %v1153
      %v1155 = vrot.slane %v1142, %v1154
      %v1157 = vadd.f32 %v1149, %v1155
      %v1158 = vadd.f32 %v1150, %v1155
      %v1159 = vmax.f32 %v1157, 0.0
      %v1160 = vmax.f32 %v1158, 0.0
      %1163 = vrot.lane.b32.xlu0 %v1159, 2
      %v1164 = vpop.permute.xlu0 %1163
      %1165 = vrot.lane.b32.xlu0 %v1160, 2
      %v1166 = vpop.permute.xlu0 %1165
      %v1169 = vsel %vm1082, %v1137, %v1164
      %v1170 = vsel %vm1082, %v1138, %v1166
      %p1171 = scmp.gt.s32.totalorder %s31, 0
      %s1172 = scalar_select %p1171, 1, 0
      %v1173 = vstv %s1172
      %vm1174 = vcmp.eq.s32.totalorder %v1173, 1
      %v1175 = vsel %vm1174, %v1169, 0.0
      %v1176 = vsel %vm1174, %v1170, 0.0
      %1177 = vst.msk [vmem:[#allocation2 + $0x1] sm:$0xff] %vm1100, %v1175
      %1178 = vst.msk [vmem:[#allocation2 + $0x9] sm:$0xff] %vm1100, %v1176
      %v1179 = vld [vmem:[%s763] sm:$0xff]
      %v1180 = vld [vmem:[%s763 + $0x8] sm:$0xff]
      %v1181 = vld [vmem:[%s6] sm:$0x1]
      %v1182 = vld [vmem:[%s7] sm:$0x1]
      %v1184 = vlaneseq
      %v1185 = vshrl.u32 %v1184, 7
      %v1186 = vsub.s32 0, %v1185
      %v1187 = vrot.slane %v1181, %v1186
      %v1189 = vmul.f32 %v1179, %v1187
      %v1190 = vmul.f32 %v1180, %v1187
      %v1192 = vlaneseq
      %v1193 = vshrl.u32 %v1192, 7
      %v1194 = vsub.s32 0, %v1193
      %v1195 = vrot.slane %v1182, %v1194
      %v1197 = vadd.f32 %v1189, %v1195
      %v1198 = vadd.f32 %v1190, %v1195
      %v1199 = vmax.f32 %v1197, 0.0
      %v1200 = vmax.f32 %v1198, 0.0
      %v1201 = vld [vmem:[%s808] sm:$0xff]
      %v1202 = vld [vmem:[%s808 + $0x8] sm:$0xff]
      %v1203 = vld [vmem:[%s8] sm:$0x1]
      %v1204 = vld [vmem:[%s9] sm:$0x1]
      %v1206 = vlaneseq
      %v1207 = vshrl.u32 %v1206, 7
      %v1208 = vsub.s32 0, %v1207
      %v1209 = vrot.slane %v1203, %v1208
      %v1211 = vmul.f32 %v1201, %v1209
      %v1212 = vmul.f32 %v1202, %v1209
      %v1214 = vlaneseq
      %v1215 = vshrl.u32 %v1214, 7
      %v1216 = vsub.s32 0, %v1215
      %v1217 = vrot.slane %v1204, %v1216
      %v1219 = vadd.f32 %v1211, %v1217
      %v1220 = vadd.f32 %v1212, %v1217
      %v1221 = vmax.f32 %v1219, 0.0
      %v1222 = vmax.f32 %v1220, 0.0
      %1225 = vrot.lane.b32.xlu0 %v1221, 2
      %v1226 = vpop.permute.xlu0 %1225
      %1227 = vrot.lane.b32.xlu0 %v1222, 2
      %v1228 = vpop.permute.xlu0 %1227
      %v1231 = vsel %vm1082, %v1199, %v1226
      %v1232 = vsel %vm1082, %v1200, %v1228
      %p1233 = scmp.lt.s32.totalorder %s31, 1
      %s1234 = scalar_select %p1233, 1, 0
      %v1235 = vstv %s1234
      %vm1236 = vcmp.eq.s32.totalorder %v1235, 1
      %v1237 = vsel %vm1236, %v1231, 0.0
      %v1238 = vsel %vm1236, %v1232, 0.0
      %s1239 = scalar_lea.vmem [#allocation2], 216
      %1240 = vst.msk [vmem:[%s1239 + $0x1] sm:$0xff] %vm1100, %v1237
      %1241 = vst.msk [vmem:[%s1239 + $0x9] sm:$0xff] %vm1100, %v1238
      %v1242 = vld [vmem:[#allocation2] sm:$0xff]
      %v1243 = vld [vmem:[#allocation2 + $0x8] sm:$0xff]
      %v1244 = vld [vmem:[#allocation2 + $0x18] sm:$0xff]
      %v1245 = vld [vmem:[#allocation2 + $0x20] sm:$0xff]
      %v1246 = vld [vmem:[#allocation2 + $0x30] sm:$0xff]
      %v1247 = vld [vmem:[#allocation2 + $0x38] sm:$0xff]
      %v1248 = vld [vmem:[#allocation2 + $0x48] sm:$0xff]
      %v1249 = vld [vmem:[#allocation2 + $0x50] sm:$0xff]
      %v1250 = vld [vmem:[#allocation2 + $0x60] sm:$0xff]
      %v1251 = vld [vmem:[#allocation2 + $0x68] sm:$0xff]
      %v1252 = vld [vmem:[#allocation2 + $0x78] sm:$0xff]
      %v1253 = vld [vmem:[#allocation2 + $0x80] sm:$0xff]
      %v1254 = vld [vmem:[#allocation2 + $0x90] sm:$0xff]
      %v1255 = vld [vmem:[#allocation2 + $0x98] sm:$0xff]
      %v1256 = vld [vmem:[#allocation2 + $0xa8] sm:$0xff]
      %v1257 = vld [vmem:[#allocation2 + $0xb0] sm:$0xff]
      %v1258 = vld [vmem:[#allocation2 + $0x1] sm:$0xff]
      %v1259 = vld [vmem:[#allocation2 + $0x9] sm:$0xff]
      %v1260 = vld [vmem:[#allocation2 + $0x19] sm:$0xff]
      %v1261 = vld [vmem:[#allocation2 + $0x21] sm:$0xff]
      %v1262 = vld [vmem:[#allocation2 + $0x31] sm:$0xff]
      %v1263 = vld [vmem:[#allocation2 + $0x39] sm:$0xff]
      %v1264 = vld [vmem:[#allocation2 + $0x49] sm:$0xff]
      %v1265 = vld [vmem:[#allocation2 + $0x51] sm:$0xff]
      %v1266 = vld [vmem:[#allocation2 + $0x61] sm:$0xff]
      %v1267 = vld [vmem:[#allocation2 + $0x69] sm:$0xff]
      %v1268 = vld [vmem:[#allocation2 + $0x79] sm:$0xff]
      %v1269 = vld [vmem:[#allocation2 + $0x81] sm:$0xff]
      %v1270 = vld [vmem:[#allocation2 + $0x91] sm:$0xff]
      %v1271 = vld [vmem:[#allocation2 + $0x99] sm:$0xff]
      %v1272 = vld [vmem:[#allocation2 + $0xa9] sm:$0xff]
      %v1273 = vld [vmem:[#allocation2 + $0xb1] sm:$0xff]
      %v1274 = vld [vmem:[#allocation2 + $0x2] sm:$0xff]
      %v1275 = vld [vmem:[#allocation2 + $0xa] sm:$0xff]
      %v1276 = vld [vmem:[#allocation2 + $0x1a] sm:$0xff]
      %v1277 = vld [vmem:[#allocation2 + $0x22] sm:$0xff]
      %v1278 = vld [vmem:[#allocation2 + $0x32] sm:$0xff]
      %v1279 = vld [vmem:[#allocation2 + $0x3a] sm:$0xff]
      %v1280 = vld [vmem:[#allocation2 + $0x4a] sm:$0xff]
      %v1281 = vld [vmem:[#allocation2 + $0x52] sm:$0xff]
      %v1282 = vld [vmem:[#allocation2 + $0x62] sm:$0xff]
      %v1283 = vld [vmem:[#allocation2 + $0x6a] sm:$0xff]
      %v1284 = vld [vmem:[#allocation2 + $0x7a] sm:$0xff]
      %v1285 = vld [vmem:[#allocation2 + $0x82] sm:$0xff]
      %v1286 = vld [vmem:[#allocation2 + $0x92] sm:$0xff]
      %v1287 = vld [vmem:[#allocation2 + $0x9a] sm:$0xff]
      %v1288 = vld [vmem:[#allocation2 + $0xaa] sm:$0xff]
      %v1289 = vld [vmem:[#allocation2 + $0xb2] sm:$0xff]
      %1306 = vrot.lane.b32.xlu0 %v1258, 4
      %v1307 = vpop.permute.xlu0 %1306
      %1308 = vrot.lane.b32.xlu0 %v1259, 4
      %v1309 = vpop.permute.xlu0 %1308
      %1310 = vrot.lane.b32.xlu0 %v1260, 4
      %v1311 = vpop.permute.xlu0 %1310
      %1312 = vrot.lane.b32.xlu0 %v1261, 4
      %v1313 = vpop.permute.xlu0 %1312
      %1314 = vrot.lane.b32.xlu0 %v1262, 4
      %v1315 = vpop.permute.xlu0 %1314
      %1316 = vrot.lane.b32.xlu0 %v1263, 4
      %v1317 = vpop.permute.xlu0 %1316
      %1318 = vrot.lane.b32.xlu0 %v1264, 4
      %v1319 = vpop.permute.xlu0 %1318
      %1320 = vrot.lane.b32.xlu0 %v1265, 4
      %v1321 = vpop.permute.xlu0 %1320
      %1322 = vrot.lane.b32.xlu0 %v1266, 4
      %v1323 = vpop.permute.xlu0 %1322
      %1324 = vrot.lane.b32.xlu0 %v1267, 4
      %v1325 = vpop.permute.xlu0 %1324
      %1326 = vrot.lane.b32.xlu0 %v1268, 4
      %v1327 = vpop.permute.xlu0 %1326
      %1328 = vrot.lane.b32.xlu0 %v1269, 4
      %v1329 = vpop.permute.xlu0 %1328
      %1330 = vrot.lane.b32.xlu0 %v1270, 4
      %v1331 = vpop.permute.xlu0 %1330
      %1332 = vrot.lane.b32.xlu0 %v1271, 4
      %v1333 = vpop.permute.xlu0 %1332
      %1334 = vrot.lane.b32.xlu0 %v1272, 4
      %v1335 = vpop.permute.xlu0 %1334
      %1336 = vrot.lane.b32.xlu0 %v1273, 4
      %v1337 = vpop.permute.xlu0 %1336
      %1370 = vrot.lane.b32.xlu0 %v1274, 8
      %v1371 = vpop.permute.xlu0 %1370
      %1372 = vrot.lane.b32.xlu0 %v1275, 8
      %v1373 = vpop.permute.xlu0 %1372
      %1374 = vrot.lane.b32.xlu0 %v1276, 8
      %v1375 = vpop.permute.xlu0 %1374
      %1376 = vrot.lane.b32.xlu0 %v1277, 8
      %v1377 = vpop.permute.xlu0 %1376
      %1378 = vrot.lane.b32.xlu0 %v1278, 8
      %v1379 = vpop.permute.xlu0 %1378
      %1380 = vrot.lane.b32.xlu0 %v1279, 8
      %v1381 = vpop.permute.xlu0 %1380
      %1382 = vrot.lane.b32.xlu0 %v1280, 8
      %v1383 = vpop.permute.xlu0 %1382
      %1384 = vrot.lane.b32.xlu0 %v1281, 8
      %v1385 = vpop.permute.xlu0 %1384
      %1386 = vrot.lane.b32.xlu0 %v1282, 8
      %v1387 = vpop.permute.xlu0 %1386
      %1388 = vrot.lane.b32.xlu0 %v1283, 8
      %v1389 = vpop.permute.xlu0 %1388
      %1390 = vrot.lane.b32.xlu0 %v1284, 8
      %v1391 = vpop.permute.xlu0 %1390
      %1392 = vrot.lane.b32.xlu0 %v1285, 8
      %v1393 = vpop.permute.xlu0 %1392
      %1394 = vrot.lane.b32.xlu0 %v1286, 8
      %v1395 = vpop.permute.xlu0 %1394
      %1396 = vrot.lane.b32.xlu0 %v1287, 8
      %v1397 = vpop.permute.xlu0 %1396
      %1398 = vrot.lane.b32.xlu0 %v1288, 8
      %v1399 = vpop.permute.xlu0 %1398
      %1400 = vrot.lane.b32.xlu0 %v1289, 8
      %v1401 = vpop.permute.xlu0 %1400
      %v1418 = vsel %vm1100, %v1242, %v1307
      %v1419 = vsel %vm1100, %v1243, %v1309
      %v1420 = vsel %vm1100, %v1244, %v1311
      %v1421 = vsel %vm1100, %v1245, %v1313
      %v1422 = vsel %vm1100, %v1246, %v1315
      %v1423 = vsel %vm1100, %v1247, %v1317
      %v1424 = vsel %vm1100, %v1248, %v1319
      %v1425 = vsel %vm1100, %v1249, %v1321
      %v1426 = vsel %vm1100, %v1250, %v1323
      %v1427 = vsel %vm1100, %v1251, %v1325
      %v1428 = vsel %vm1100, %v1252, %v1327
      %v1429 = vsel %vm1100, %v1253, %v1329
      %v1430 = vsel %vm1100, %v1254, %v1331
      %v1431 = vsel %vm1100, %v1255, %v1333
      %v1432 = vsel %vm1100, %v1256, %v1335
      %v1433 = vsel %vm1100, %v1257, %v1337
      %vm1434 = vcmask 64512
      %v1435 = vsel %vm1434, %v1418, %v1371
      %v1436 = vsel %vm1434, %v1419, %v1373
      %v1437 = vsel %vm1434, %v1420, %v1375
      %v1438 = vsel %vm1434, %v1421, %v1377
      %v1439 = vsel %vm1434, %v1422, %v1379
      %v1440 = vsel %vm1434, %v1423, %v1381
      %v1441 = vsel %vm1434, %v1424, %v1383
      %v1442 = vsel %vm1434, %v1425, %v1385
      %v1443 = vsel %vm1434, %v1426, %v1387
      %v1444 = vsel %vm1434, %v1427, %v1389
      %v1445 = vsel %vm1434, %v1428, %v1391
      %v1446 = vsel %vm1434, %v1429, %v1393
      %v1447 = vsel %vm1434, %v1430, %v1395
      %v1448 = vsel %vm1434, %v1431, %v1397
      %v1449 = vsel %vm1434, %v1432, %v1399
      %v1450 = vsel %vm1434, %v1433, %v1401
      %v1451 = vpack.c.bf16 %v1436, %v1435
      %v1452 = vpack.c.bf16 %v1438, %v1437
      %v1453 = vpack.c.bf16 %v1440, %v1439
      %v1454 = vpack.c.bf16 %v1442, %v1441
      %v1455 = vpack.c.bf16 %v1444, %v1443
      %v1456 = vpack.c.bf16 %v1446, %v1445
      %v1457 = vpack.c.bf16 %v1448, %v1447
      %v1458 = vpack.c.bf16 %v1450, %v1449
      %v1459 = vld [vmem:[%s10] sm:$0xf]
      %v1460 = vld [vmem:[%s10 + $0x4] sm:$0x3]
      %v1461 = vld [vmem:[%s1099] sm:$0xff]
      %v1462 = vld [vmem:[%s1099 + $0x8] sm:$0xff]
      %v1463 = vld [vmem:[%s1099 + $0x18] sm:$0xff]
      %v1464 = vld [vmem:[%s1099 + $0x20] sm:$0xff]
      %v1465 = vld [vmem:[%s1099 + $0x30] sm:$0xff]
      %v1466 = vld [vmem:[%s1099 + $0x38] sm:$0xff]
      %v1467 = vld [vmem:[%s1099 + $0x48] sm:$0xff]
      %v1468 = vld [vmem:[%s1099 + $0x50] sm:$0xff]
      %v1469 = vld [vmem:[%s1099 + $0x60] sm:$0xff]
      %v1470 = vld [vmem:[%s1099 + $0x68] sm:$0xff]
      %v1471 = vld [vmem:[%s1099 + $0x78] sm:$0xff]
      %v1472 = vld [vmem:[%s1099 + $0x80] sm:$0xff]
      %v1473 = vld [vmem:[%s1099 + $0x90] sm:$0xff]
      %v1474 = vld [vmem:[%s1099 + $0x98] sm:$0xff]
      %v1475 = vld [vmem:[%s1099 + $0xa8] sm:$0xff]
      %v1476 = vld [vmem:[%s1099 + $0xb0] sm:$0xff]
      %v1477 = vld [vmem:[%s1099 + $0x1] sm:$0xff]
      %v1478 = vld [vmem:[%s1099 + $0x9] sm:$0xff]
      %v1479 = vld [vmem:[%s1099 + $0x19] sm:$0xff]
      %v1480 = vld [vmem:[%s1099 + $0x21] sm:$0xff]
      %v1481 = vld [vmem:[%s1099 + $0x31] sm:$0xff]
      %v1482 = vld [vmem:[%s1099 + $0x39] sm:$0xff]
      %v1483 = vld [vmem:[%s1099 + $0x49] sm:$0xff]
      %v1484 = vld [vmem:[%s1099 + $0x51] sm:$0xff]
      %v1485 = vld [vmem:[%s1099 + $0x61] sm:$0xff]
      %v1486 = vld [vmem:[%s1099 + $0x69] sm:$0xff]
      %v1487 = vld [vmem:[%s1099 + $0x79] sm:$0xff]
      %v1488 = vld [vmem:[%s1099 + $0x81] sm:$0xff]
      %v1489 = vld [vmem:[%s1099 + $0x91] sm:$0xff]
      %v1490 = vld [vmem:[%s1099 + $0x99] sm:$0xff]
      %v1491 = vld [vmem:[%s1099 + $0xa9] sm:$0xff]
      %v1492 = vld [vmem:[%s1099 + $0xb1] sm:$0xff]
      %v1493 = vld [vmem:[%s1099 + $0x2] sm:$0xff]
      %v1494 = vld [vmem:[%s1099 + $0xa] sm:$0xff]
      %v1495 = vld [vmem:[%s1099 + $0x1a] sm:$0xff]
      %v1496 = vld [vmem:[%s1099 + $0x22] sm:$0xff]
      %v1497 = vld [vmem:[%s1099 + $0x32] sm:$0xff]
      %v1498 = vld [vmem:[%s1099 + $0x3a] sm:$0xff]
      %v1499 = vld [vmem:[%s1099 + $0x4a] sm:$0xff]
      %v1500 = vld [vmem:[%s1099 + $0x52] sm:$0xff]
      %v1501 = vld [vmem:[%s1099 + $0x62] sm:$0xff]
      %v1502 = vld [vmem:[%s1099 + $0x6a] sm:$0xff]
      %v1503 = vld [vmem:[%s1099 + $0x7a] sm:$0xff]
      %v1504 = vld [vmem:[%s1099 + $0x82] sm:$0xff]
      %v1505 = vld [vmem:[%s1099 + $0x92] sm:$0xff]
      %v1506 = vld [vmem:[%s1099 + $0x9a] sm:$0xff]
      %v1507 = vld [vmem:[%s1099 + $0xaa] sm:$0xff]
      %v1508 = vld [vmem:[%s1099 + $0xb2] sm:$0xff]
      %1525 = vrot.lane.b32.xlu0 %v1477, 4
      %v1526 = vpop.permute.xlu0 %1525
      %1527 = vrot.lane.b32.xlu0 %v1478, 4
      %v1528 = vpop.permute.xlu0 %1527
      %1529 = vrot.lane.b32.xlu0 %v1479, 4
      %v1530 = vpop.permute.xlu0 %1529
      %1531 = vrot.lane.b32.xlu0 %v1480, 4
      %v1532 = vpop.permute.xlu0 %1531
      %1533 = vrot.lane.b32.xlu0 %v1481, 4
      %v1534 = vpop.permute.xlu0 %1533
      %1535 = vrot.lane.b32.xlu0 %v1482, 4
      %v1536 = vpop.permute.xlu0 %1535
      %1537 = vrot.lane.b32.xlu0 %v1483, 4
      %v1538 = vpop.permute.xlu0 %1537
      %1539 = vrot.lane.b32.xlu0 %v1484, 4
      %v1540 = vpop.permute.xlu0 %1539
      %1541 = vrot.lane.b32.xlu0 %v1485, 4
      %v1542 = vpop.permute.xlu0 %1541
      %1543 = vrot.lane.b32.xlu0 %v1486, 4
      %v1544 = vpop.permute.xlu0 %1543
      %1545 = vrot.lane.b32.xlu0 %v1487, 4
      %v1546 = vpop.permute.xlu0 %1545
      %1547 = vrot.lane.b32.xlu0 %v1488, 4
      %v1548 = vpop.permute.xlu0 %1547
      %1549 = vrot.lane.b32.xlu0 %v1489, 4
      %v1550 = vpop.permute.xlu0 %1549
      %1551 = vrot.lane.b32.xlu0 %v1490, 4
      %v1552 = vpop.permute.xlu0 %1551
      %1553 = vrot.lane.b32.xlu0 %v1491, 4
      %v1554 = vpop.permute.xlu0 %1553
      %1555 = vrot.lane.b32.xlu0 %v1492, 4
      %v1556 = vpop.permute.xlu0 %1555
      %1589 = vrot.lane.b32.xlu0 %v1493, 8
      %v1590 = vpop.permute.xlu0 %1589
      %1591 = vrot.lane.b32.xlu0 %v1494, 8
      %v1592 = vpop.permute.xlu0 %1591
      %1593 = vrot.lane.b32.xlu0 %v1495, 8
      %v1594 = vpop.permute.xlu0 %1593
      %1595 = vrot.lane.b32.xlu0 %v1496, 8
      %v1596 = vpop.permute.xlu0 %1595
      %1597 = vrot.lane.b32.xlu0 %v1497, 8
      %v1598 = vpop.permute.xlu0 %1597
      %1599 = vrot.lane.b32.xlu0 %v1498, 8
      %v1600 = vpop.permute.xlu0 %1599
      %1601 = vrot.lane.b32.xlu0 %v1499, 8
      %v1602 = vpop.permute.xlu0 %1601
      %1603 = vrot.lane.b32.xlu0 %v1500, 8
      %v1604 = vpop.permute.xlu0 %1603
      %1605 = vrot.lane.b32.xlu0 %v1501, 8
      %v1606 = vpop.permute.xlu0 %1605
      %1607 = vrot.lane.b32.xlu0 %v1502, 8
      %v1608 = vpop.permute.xlu0 %1607
      %1609 = vrot.lane.b32.xlu0 %v1503, 8
      %v1610 = vpop.permute.xlu0 %1609
      %1611 = vrot.lane.b32.xlu0 %v1504, 8
      %v1612 = vpop.permute.xlu0 %1611
      %1613 = vrot.lane.b32.xlu0 %v1505, 8
      %v1614 = vpop.permute.xlu0 %1613
      %1615 = vrot.lane.b32.xlu0 %v1506, 8
      %v1616 = vpop.permute.xlu0 %1615
      %1617 = vrot.lane.b32.xlu0 %v1507, 8
      %v1618 = vpop.permute.xlu0 %1617
      %1619 = vrot.lane.b32.xlu0 %v1508, 8
      %v1620 = vpop.permute.xlu0 %1619
      %v1637 = vsel %vm1100, %v1461, %v1526
      %v1638 = vsel %vm1100, %v1462, %v1528
      %v1639 = vsel %vm1100, %v1463, %v1530
      %v1640 = vsel %vm1100, %v1464, %v1532
      %v1641 = vsel %vm1100, %v1465, %v1534
      %v1642 = vsel %vm1100, %v1466, %v1536
      %v1643 = vsel %vm1100, %v1467, %v1538
      %v1644 = vsel %vm1100, %v1468, %v1540
      %v1645 = vsel %vm1100, %v1469, %v1542
      %v1646 = vsel %vm1100, %v1470, %v1544
      %v1647 = vsel %vm1100, %v1471, %v1546
      %v1648 = vsel %vm1100, %v1472, %v1548
      %v1649 = vsel %vm1100, %v1473, %v1550
      %v1650 = vsel %vm1100, %v1474, %v1552
      %v1651 = vsel %vm1100, %v1475, %v1554
      %v1652 = vsel %vm1100, %v1476, %v1556
      %v1653 = vsel %vm1434, %v1637, %v1590
      %v1654 = vsel %vm1434, %v1638, %v1592
      %v1655 = vsel %vm1434, %v1639, %v1594
      %v1656 = vsel %vm1434, %v1640, %v1596
      %v1657 = vsel %vm1434, %v1641, %v1598
      %v1658 = vsel %vm1434, %v1642, %v1600
      %v1659 = vsel %vm1434, %v1643, %v1602
      %v1660 = vsel %vm1434, %v1644, %v1604
      %v1661 = vsel %vm1434, %v1645, %v1606
      %v1662 = vsel %vm1434, %v1646, %v1608
      %v1663 = vsel %vm1434, %v1647, %v1610
      %v1664 = vsel %vm1434, %v1648, %v1612
      %v1665 = vsel %vm1434, %v1649, %v1614
      %v1666 = vsel %vm1434, %v1650, %v1616
      %v1667 = vsel %vm1434, %v1651, %v1618
      %v1668 = vsel %vm1434, %v1652, %v1620
      %v1669 = vpack.c.bf16 %v1654, %v1653
      %v1670 = vpack.c.bf16 %v1656, %v1655
      %v1671 = vpack.c.bf16 %v1658, %v1657
      %v1672 = vpack.c.bf16 %v1660, %v1659
      %v1673 = vpack.c.bf16 %v1662, %v1661
      %v1674 = vpack.c.bf16 %v1664, %v1663
      %v1675 = vpack.c.bf16 %v1666, %v1665
      %v1676 = vpack.c.bf16 %v1668, %v1667
      %s1677 = scalar_lea.vmem %s10, 8
      %v1678 = vld [vmem:[%s1677] sm:$0xf]
      %v1679 = vld [vmem:[%s1677 + $0x4] sm:$0x3]
      %v1682 = vunpack.c.l.b16 %v1678
      %v1683 = vunpack.c.l.b16 %v1679
      %v1684 = vpack.c.b16 %v1683, %v1682
      %vm1685 = vcmask 97280
      %v1687 = vsel %vm1685, %v1669, 0
      %v1690 = vsel %vm1685, %v1670, 0
      %v1693 = vsel %vm1685, %v1671, 0
      %v1696 = vsel %vm1685, %v1672, 0
      %v1699 = vsel %vm1685, %v1673, 0
      %v1702 = vsel %vm1685, %v1674, 0
      %v1705 = vsel %vm1685, %v1675, 0
      %v1708 = vsel %vm1685, %v1676, 0
      %vm1710 = vcmask 1045504
      %v1712 = vsel %vm1710, %v1684, 0
      %1714 = vmatprep.subr.bf16.mxu0 0
      %1715 = vmatpush1.bf16.msra.mxu0 %v1712
      %1716 = vmatprep.subr.bf16.mxu0 0
      %1717 = vmatpush1.bf16.msra.mxu0 0
      %1718 = vmatprep.subr.bf16.mxu0 0
      %1719 = vmatpush1.bf16.msra.mxu0 0
      %1720 = vmatprep.subr.bf16.mxu0 0
      %1721 = vmatpush1.bf16.msra.mxu0 0
      %1722 = vmatprep.subr.bf16.mxu0 0
      %1723 = vmatpush1.bf16.msra.mxu0 0
      %1724 = vmatprep.subr.bf16.mxu0 0
      %1725 = vmatpush1.bf16.msra.mxu0 0
      %1726 = vmatprep.subr.bf16.mxu0 0
      %1727 = vmatpush1.bf16.msra.mxu0 0
      %1728 = vmatprep.subr.bf16.mxu0 0
      %1729 = vmatpush1.bf16.msra.mxu0 0
      %1730 = vmatprep.subr.bf16.mxu0 0
      %1731 = vmatpush1.bf16.msra.mxu0 0
      %1732 = vmatprep.subr.bf16.mxu0 0
      %1733 = vmatpush1.bf16.msra.mxu0 0
      %1734 = vmatprep.subr.bf16.mxu0 0
      %1735 = vmatpush1.bf16.msra.mxu0 0
      %1736 = vmatprep.subr.bf16.mxu0 0
      %1737 = vmatpush1.bf16.msra.mxu0 0
      %1738 = vmatprep.subr.bf16.mxu0 0
      %1739 = vmatpush1.bf16.msra.mxu0 0
      %1740 = vmatprep.subr.bf16.mxu0 0
      %1741 = vmatpush1.bf16.msra.mxu0 0
      %1742 = vmatprep.subr.bf16.mxu0 0
      %1743 = vmatpush1.bf16.msra.mxu0 0
      %1744 = vmatprep.subr.bf16.mxu0 0
      %1745 = vmatpush1.bf16.msra.mxu0 0
      %1746 = vmatprep.mubr.bf16.mxu0 0
      %1747 = vmatmul.mubr.bf16.gmra.mrb[0].mxu0 %v1687
      %v1748 = vpop.f32.mrb[0].mxu0
      %v1749 = vadd.f32 0.0, %v1748
      %v1750 = vpop.f32.mrb[0].mxu0
      %v1751 = vpop.f32.mrb[0].mxu0
      %v1752 = vadd.f32 0.0, %v1751
      %v1753 = vpop.f32.mrb[0].mxu0
      %1754 = vmatprep.mubr.bf16.mxu0 0
      %1755 = vmatmul.mubr.bf16.gmra.mrb[0].mxu0 %v1690
      %v1756 = vpop.f32.mrb[0].mxu0
      %v1757 = vadd.f32 0.0, %v1756
      %v1758 = vpop.f32.mrb[0].mxu0
      %v1759 = vpop.f32.mrb[0].mxu0
      %v1760 = vadd.f32 0.0, %v1759
      %v1761 = vpop.f32.mrb[0].mxu0
      %1762 = vmatprep.mubr.bf16.mxu0 0
      %1763 = vmatmul.mubr.bf16.gmra.mrb[0].mxu0 %v1693
      %v1764 = vpop.f32.mrb[0].mxu0
      %v1765 = vadd.f32 0.0, %v1764
      %v1766 = vpop.f32.mrb[0].mxu0
      %v1767 = vpop.f32.mrb[0].mxu0
      %v1768 = vadd.f32 0.0, %v1767
      %v1769 = vpop.f32.mrb[0].mxu0
      %1770 = vmatprep.mubr.bf16.mxu0 0
      %1771 = vmatmul.mubr.bf16.gmra.mrb[0].mxu0 %v1696
      %v1772 = vpop.f32.mrb[0].mxu0
      %v1773 = vadd.f32 0.0, %v1772
      %v1774 = vpop.f32.mrb[0].mxu0
      %v1775 = vpop.f32.mrb[0].mxu0
      %v1776 = vadd.f32 0.0, %v1775
      %v1777 = vpop.f32.mrb[0].mxu0
      %1778 = vmatprep.mubr.bf16.mxu0 0
      %1779 = vmatmul.mubr.bf16.gmra.mrb[0].mxu0 %v1699
      %v1780 = vpop.f32.mrb[0].mxu0
      %v1781 = vadd.f32 0.0, %v1780
      %v1782 = vpop.f32.mrb[0].mxu0
      %v1783 = vpop.f32.mrb[0].mxu0
      %v1784 = vadd.f32 0.0, %v1783
      %v1785 = vpop.f32.mrb[0].mxu0
      %1786 = vmatprep.mubr.bf16.mxu0 0
      %1787 = vmatmul.mubr.bf16.gmra.mrb[0].mxu0 %v1702
      %v1788 = vpop.f32.mrb[0].mxu0
      %v1789 = vadd.f32 0.0, %v1788
      %v1790 = vpop.f32.mrb[0].mxu0
      %v1791 = vpop.f32.mrb[0].mxu0
      %v1792 = vadd.f32 0.0, %v1791
      %v1793 = vpop.f32.mrb[0].mxu0
      %1794 = vmatprep.mubr.bf16.mxu0 0
      %1795 = vmatmul.mubr.bf16.gmra.mrb[0].mxu0 %v1705
      %v1796 = vpop.f32.mrb[0].mxu0
      %v1797 = vadd.f32 0.0, %v1796
      %v1798 = vpop.f32.mrb[0].mxu0
      %v1799 = vpop.f32.mrb[0].mxu0
      %v1800 = vadd.f32 0.0, %v1799
      %v1801 = vpop.f32.mrb[0].mxu0
      %1802 = vmatprep.mubr.bf16.mxu0 0
      %1803 = vmatmul.mubr.bf16.gmra.mrb[0].mxu0 %v1708
      %v1804 = vpop.f32.mrb[0].mxu0
      %v1805 = vadd.f32 0.0, %v1804
      %v1806 = vpop.f32.mrb[0].mxu0
      %v1807 = vpop.f32.mrb[0].mxu0
      %v1808 = vadd.f32 0.0, %v1807
      %v1809 = vpop.f32.mrb[0].mxu0
      %1810 = vdwg.mxu0
      %v1813 = vunpack.c.l.b16 %v1459
      %v1814 = vunpack.c.l.b16 %v1460
      %v1815 = vpack.c.b16 %v1814, %v1813
      %v1817 = vsel %vm1685, %v1451, 0
      %v1820 = vsel %vm1685, %v1452, 0
      %v1823 = vsel %vm1685, %v1453, 0
      %v1826 = vsel %vm1685, %v1454, 0
      %v1829 = vsel %vm1685, %v1455, 0
      %v1832 = vsel %vm1685, %v1456, 0
      %v1835 = vsel %vm1685, %v1457, 0
      %v1838 = vsel %vm1685, %v1458, 0
      %v1841 = vsel %vm1710, %v1815, 0
      %1843 = vmatprep.subr.bf16.mxu0 0
      %1844 = vmatpush1.bf16.msra.mxu0 %v1841
      %1845 = vmatprep.subr.bf16.mxu0 0
      %1846 = vmatpush1.bf16.msra.mxu0 0
      %1847 = vmatprep.subr.bf16.mxu0 0
      %1848 = vmatpush1.bf16.msra.mxu0 0
      %1849 = vmatprep.subr.bf16.mxu0 0
      %1850 = vmatpush1.bf16.msra.mxu0 0
      %1851 = vmatprep.subr.bf16.mxu0 0
      %1852 = vmatpush1.bf16.msra.mxu0 0
      %1853 = vmatprep.subr.bf16.mxu0 0
      %1854 = vmatpush1.bf16.msra.mxu0 0
      %1855 = vmatprep.subr.bf16.mxu0 0
      %1856 = vmatpush1.bf16.msra.mxu0 0
      %1857 = vmatprep.subr.bf16.mxu0 0
      %1858 = vmatpush1.bf16.msra.mxu0 0
      %1859 = vmatprep.subr.bf16.mxu0 0
      %1860 = vmatpush1.bf16.msra.mxu0 0
      %1861 = vmatprep.subr.bf16.mxu0 0
      %1862 = vmatpush1.bf16.msra.mxu0 0
      %1863 = vmatprep.subr.bf16.mxu0 0
      %1864 = vmatpush1.bf16.msra.mxu0 0
      %1865 = vmatprep.subr.bf16.mxu0 0
      %1866 = vmatpush1.bf16.msra.mxu0 0
      %1867 = vmatprep.subr.bf16.mxu0 0
      %1868 = vmatpush1.bf16.msra.mxu0 0
      %1869 = vmatprep.subr.bf16.mxu0 0
      %1870 = vmatpush1.bf16.msra.mxu0 0
      %1871 = vmatprep.subr.bf16.mxu0 0
      %1872 = vmatpush1.bf16.msra.mxu0 0
      %1873 = vmatprep.subr.bf16.mxu0 0
      %1874 = vmatpush1.bf16.msra.mxu0 0
      %1875 = vmatprep.mubr.bf16.mxu0 0
      %1876 = vmatmul.mubr.bf16.gmra.mrb[0].mxu0 %v1817
      %v1877 = vpop.f32.mrb[0].mxu0
      %v1878 = vadd.f32 %v1749, %v1877
      %v1879 = vpop.f32.mrb[0].mxu0
      %v1880 = vpop.f32.mrb[0].mxu0
      %v1881 = vadd.f32 %v1752, %v1880
      %v1882 = vpop.f32.mrb[0].mxu0
      %1883 = vmatprep.mubr.bf16.mxu0 0
      %1884 = vmatmul.mubr.bf16.gmra.mrb[0].mxu0 %v1820
      %v1885 = vpop.f32.mrb[0].mxu0
      %v1886 = vadd.f32 %v1757, %v1885
      %v1887 = vpop.f32.mrb[0].mxu0
      %v1888 = vpop.f32.mrb[0].mxu0
      %v1889 = vadd.f32 %v1760, %v1888
      %v1890 = vpop.f32.mrb[0].mxu0
      %1891 = vmatprep.mubr.bf16.mxu0 0
      %1892 = vmatmul.mubr.bf16.gmra.mrb[0].mxu0 %v1823
      %v1893 = vpop.f32.mrb[0].mxu0
      %v1894 = vadd.f32 %v1765, %v1893
      %v1895 = vpop.f32.mrb[0].mxu0
      %v1896 = vpop.f32.mrb[0].mxu0
      %v1897 = vadd.f32 %v1768, %v1896
      %v1898 = vpop.f32.mrb[0].mxu0
      %1899 = vmatprep.mubr.bf16.mxu0 0
      %1900 = vmatmul.mubr.bf16.gmra.mrb[0].mxu0 %v1826
      %v1901 = vpop.f32.mrb[0].mxu0
      %v1902 = vadd.f32 %v1773, %v1901
      %v1903 = vpop.f32.mrb[0].mxu0
      %v1904 = vpop.f32.mrb[0].mxu0
      %v1905 = vadd.f32 %v1776, %v1904
      %v1906 = vpop.f32.mrb[0].mxu0
      %1907 = vmatprep.mubr.bf16.mxu0 0
      %1908 = vmatmul.mubr.bf16.gmra.mrb[0].mxu0 %v1829
      %v1909 = vpop.f32.mrb[0].mxu0
      %v1910 = vadd.f32 %v1781, %v1909
      %v1911 = vpop.f32.mrb[0].mxu0
      %v1912 = vpop.f32.mrb[0].mxu0
      %v1913 = vadd.f32 %v1784, %v1912
      %v1914 = vpop.f32.mrb[0].mxu0
      %1915 = vmatprep.mubr.bf16.mxu0 0
      %1916 = vmatmul.mubr.bf16.gmra.mrb[0].mxu0 %v1832
      %v1917 = vpop.f32.mrb[0].mxu0
      %v1918 = vadd.f32 %v1789, %v1917
      %v1919 = vpop.f32.mrb[0].mxu0
      %v1920 = vpop.f32.mrb[0].mxu0
      %v1921 = vadd.f32 %v1792, %v1920
      %v1922 = vpop.f32.mrb[0].mxu0
      %1923 = vmatprep.mubr.bf16.mxu0 0
      %1924 = vmatmul.mubr.bf16.gmra.mrb[0].mxu0 %v1835
      %v1925 = vpop.f32.mrb[0].mxu0
      %v1926 = vadd.f32 %v1797, %v1925
      %v1927 = vpop.f32.mrb[0].mxu0
      %v1928 = vpop.f32.mrb[0].mxu0
      %v1929 = vadd.f32 %v1800, %v1928
      %v1930 = vpop.f32.mrb[0].mxu0
      %1931 = vmatprep.mubr.bf16.mxu0 0
      %1932 = vmatmul.mubr.bf16.gmra.mrb[0].mxu0 %v1838
      %v1933 = vpop.f32.mrb[0].mxu0
      %v1934 = vadd.f32 %v1805, %v1933
      %v1935 = vpop.f32.mrb[0].mxu0
      %v1936 = vpop.f32.mrb[0].mxu0
      %v1937 = vadd.f32 %v1808, %v1936
      %v1938 = vpop.f32.mrb[0].mxu0
      %1939 = vdwg.mxu0
      %s1940 = scalar_lea.vmem [#allocation2], 48
      %v1941 = vld [vmem:[%s1940] sm:$0xff]
      %v1942 = vld [vmem:[%s1940 + $0x8] sm:$0xff]
      %v1943 = vld [vmem:[%s1940 + $0x18] sm:$0xff]
      %v1944 = vld [vmem:[%s1940 + $0x20] sm:$0xff]
      %v1945 = vld [vmem:[%s1940 + $0x30] sm:$0xff]
      %v1946 = vld [vmem:[%s1940 + $0x38] sm:$0xff]
      %v1947 = vld [vmem:[%s1940 + $0x48] sm:$0xff]
      %v1948 = vld [vmem:[%s1940 + $0x50] sm:$0xff]
      %v1949 = vld [vmem:[%s1940 + $0x60] sm:$0xff]
      %v1950 = vld [vmem:[%s1940 + $0x68] sm:$0xff]
      %v1951 = vld [vmem:[%s1940 + $0x78] sm:$0xff]
      %v1952 = vld [vmem:[%s1940 + $0x80] sm:$0xff]
      %v1953 = vld [vmem:[%s1940 + $0x90] sm:$0xff]
      %v1954 = vld [vmem:[%s1940 + $0x98] sm:$0xff]
      %v1955 = vld [vmem:[%s1940 + $0xa8] sm:$0xff]
      %v1956 = vld [vmem:[%s1940 + $0xb0] sm:$0xff]
      %v1957 = vld [vmem:[%s1940 + $0x1] sm:$0xff]
      %v1958 = vld [vmem:[%s1940 + $0x9] sm:$0xff]
      %v1959 = vld [vmem:[%s1940 + $0x19] sm:$0xff]
      %v1960 = vld [vmem:[%s1940 + $0x21] sm:$0xff]
      %v1961 = vld [vmem:[%s1940 + $0x31] sm:$0xff]
      %v1962 = vld [vmem:[%s1940 + $0x39] sm:$0xff]
      %v1963 = vld [vmem:[%s1940 + $0x49] sm:$0xff]
      %v1964 = vld [vmem:[%s1940 + $0x51] sm:$0xff]
      %v1965 = vld [vmem:[%s1940 + $0x61] sm:$0xff]
      %v1966 = vld [vmem:[%s1940 + $0x69] sm:$0xff]
      %v1967 = vld [vmem:[%s1940 + $0x79] sm:$0xff]
      %v1968 = vld [vmem:[%s1940 + $0x81] sm:$0xff]
      %v1969 = vld [vmem:[%s1940 + $0x91] sm:$0xff]
      %v1970 = vld [vmem:[%s1940 + $0x99] sm:$0xff]
      %v1971 = vld [vmem:[%s1940 + $0xa9] sm:$0xff]
      %v1972 = vld [vmem:[%s1940 + $0xb1] sm:$0xff]
      %v1973 = vld [vmem:[%s1940 + $0x2] sm:$0xff]
      %v1974 = vld [vmem:[%s1940 + $0xa] sm:$0xff]
      %v1975 = vld [vmem:[%s1940 + $0x1a] sm:$0xff]
      %v1976 = vld [vmem:[%s1940 + $0x22] sm:$0xff]
      %v1977 = vld [vmem:[%s1940 + $0x32] sm:$0xff]
      %v1978 = vld [vmem:[%s1940 + $0x3a] sm:$0xff]
      %v1979 = vld [vmem:[%s1940 + $0x4a] sm:$0xff]
      %v1980 = vld [vmem:[%s1940 + $0x52] sm:$0xff]
      %v1981 = vld [vmem:[%s1940 + $0x62] sm:$0xff]
      %v1982 = vld [vmem:[%s1940 + $0x6a] sm:$0xff]
      %v1983 = vld [vmem:[%s1940 + $0x7a] sm:$0xff]
      %v1984 = vld [vmem:[%s1940 + $0x82] sm:$0xff]
      %v1985 = vld [vmem:[%s1940 + $0x92] sm:$0xff]
      %v1986 = vld [vmem:[%s1940 + $0x9a] sm:$0xff]
      %v1987 = vld [vmem:[%s1940 + $0xaa] sm:$0xff]
      %v1988 = vld [vmem:[%s1940 + $0xb2] sm:$0xff]
      %2005 = vrot.lane.b32.xlu0 %v1957, 4
      %v2006 = vpop.permute.xlu0 %2005
      %2007 = vrot.lane.b32.xlu0 %v1958, 4
      %v2008 = vpop.permute.xlu0 %2007
      %2009 = vrot.lane.b32.xlu0 %v1959, 4
      %v2010 = vpop.permute.xlu0 %2009
      %2011 = vrot.lane.b32.xlu0 %v1960, 4
      %v2012 = vpop.permute.xlu0 %2011
      %2013 = vrot.lane.b32.xlu0 %v1961, 4
      %v2014 = vpop.permute.xlu0 %2013
      %2015 = vrot.lane.b32.xlu0 %v1962, 4
      %v2016 = vpop.permute.xlu0 %2015
      %2017 = vrot.lane.b32.xlu0 %v1963, 4
      %v2018 = vpop.permute.xlu0 %2017
      %2019 = vrot.lane.b32.xlu0 %v1964, 4
      %v2020 = vpop.permute.xlu0 %2019
      %2021 = vrot.lane.b32.xlu0 %v1965, 4
      %v2022 = vpop.permute.xlu0 %2021
      %2023 = vrot.lane.b32.xlu0 %v1966, 4
      %v2024 = vpop.permute.xlu0 %2023
      %2025 = vrot.lane.b32.xlu0 %v1967, 4
      %v2026 = vpop.permute.xlu0 %2025
      %2027 = vrot.lane.b32.xlu0 %v1968, 4
      %v2028 = vpop.permute.xlu0 %2027
      %2029 = vrot.lane.b32.xlu0 %v1969, 4
      %v2030 = vpop.permute.xlu0 %2029
      %2031 = vrot.lane.b32.xlu0 %v1970, 4
      %v2032 = vpop.permute.xlu0 %2031
      %2033 = vrot.lane.b32.xlu0 %v1971, 4
      %v2034 = vpop.permute.xlu0 %2033
      %2035 = vrot.lane.b32.xlu0 %v1972, 4
      %v2036 = vpop.permute.xlu0 %2035
      %2069 = vrot.lane.b32.xlu0 %v1973, 8
      %v2070 = vpop.permute.xlu0 %2069
      %2071 = vrot.lane.b32.xlu0 %v1974, 8
      %v2072 = vpop.permute.xlu0 %2071
      %2073 = vrot.lane.b32.xlu0 %v1975, 8
      %v2074 = vpop.permute.xlu0 %2073
      %2075 = vrot.lane.b32.xlu0 %v1976, 8
      %v2076 = vpop.permute.xlu0 %2075
      %2077 = vrot.lane.b32.xlu0 %v1977, 8
      %v2078 = vpop.permute.xlu0 %2077
      %2079 = vrot.lane.b32.xlu0 %v1978, 8
      %v2080 = vpop.permute.xlu0 %2079
      %2081 = vrot.lane.b32.xlu0 %v1979, 8
      %v2082 = vpop.permute.xlu0 %2081
      %2083 = vrot.lane.b32.xlu0 %v1980, 8
      %v2084 = vpop.permute.xlu0 %2083
      %2085 = vrot.lane.b32.xlu0 %v1981, 8
      %v2086 = vpop.permute.xlu0 %2085
      %2087 = vrot.lane.b32.xlu0 %v1982, 8
      %v2088 = vpop.permute.xlu0 %2087
      %2089 = vrot.lane.b32.xlu0 %v1983, 8
      %v2090 = vpop.permute.xlu0 %2089
      %2091 = vrot.lane.b32.xlu0 %v1984, 8
      %v2092 = vpop.permute.xlu0 %2091
      %2093 = vrot.lane.b32.xlu0 %v1985, 8
      %v2094 = vpop.permute.xlu0 %2093
      %2095 = vrot.lane.b32.xlu0 %v1986, 8
      %v2096 = vpop.permute.xlu0 %2095
      %2097 = vrot.lane.b32.xlu0 %v1987, 8
      %v2098 = vpop.permute.xlu0 %2097
      %2099 = vrot.lane.b32.xlu0 %v1988, 8
      %v2100 = vpop.permute.xlu0 %2099
      %v2117 = vsel %vm1100, %v1941, %v2006
      %v2118 = vsel %vm1100, %v1942, %v2008
      %v2119 = vsel %vm1100, %v1943, %v2010
      %v2120 = vsel %vm1100, %v1944, %v2012
      %v2121 = vsel %vm1100, %v1945, %v2014
      %v2122 = vsel %vm1100, %v1946, %v2016
      %v2123 = vsel %vm1100, %v1947, %v2018
      %v2124 = vsel %vm1100, %v1948, %v2020
      %v2125 = vsel %vm1100, %v1949, %v2022
      %v2126 = vsel %vm1100, %v1950, %v2024
      %v2127 = vsel %vm1100, %v1951, %v2026
      %v2128 = vsel %vm1100, %v1952, %v2028
      %v2129 = vsel %vm1100, %v1953, %v2030
      %v2130 = vsel %vm1100, %v1954, %v2032
      %v2131 = vsel %vm1100, %v1955, %v2034
      %v2132 = vsel %vm1100, %v1956, %v2036
      %v2133 = vsel %vm1434, %v2117, %v2070
      %v2134 = vsel %vm1434, %v2118, %v2072
      %v2135 = vsel %vm1434, %v2119, %v2074
      %v2136 = vsel %vm1434, %v2120, %v2076
      %v2137 = vsel %vm1434, %v2121, %v2078
      %v2138 = vsel %vm1434, %v2122, %v2080
      %v2139 = vsel %vm1434, %v2123, %v2082
      %v2140 = vsel %vm1434, %v2124, %v2084
      %v2141 = vsel %vm1434, %v2125, %v2086
      %v2142 = vsel %vm1434, %v2126, %v2088
      %v2143 = vsel %vm1434, %v2127, %v2090
      %v2144 = vsel %vm1434, %v2128, %v2092
      %v2145 = vsel %vm1434, %v2129, %v2094
      %v2146 = vsel %vm1434, %v2130, %v2096
      %v2147 = vsel %vm1434, %v2131, %v2098
      %v2148 = vsel %vm1434, %v2132, %v2100
      %v2149 = vpack.c.bf16 %v2134, %v2133
      %v2150 = vpack.c.bf16 %v2136, %v2135
      %v2151 = vpack.c.bf16 %v2138, %v2137
      %v2152 = vpack.c.bf16 %v2140, %v2139
      %v2153 = vpack.c.bf16 %v2142, %v2141
      %v2154 = vpack.c.bf16 %v2144, %v2143
      %v2155 = vpack.c.bf16 %v2146, %v2145
      %v2156 = vpack.c.bf16 %v2148, %v2147
      %s2157 = scalar_lea.vmem %s10, 16
      %v2158 = vld [vmem:[%s2157] sm:$0xf]
      %v2159 = vld [vmem:[%s2157 + $0x4] sm:$0x3]
      %v2162 = vunpack.c.l.b16 %v2158
      %v2163 = vunpack.c.l.b16 %v2159
      %v2164 = vpack.c.b16 %v2163, %v2162
      %v2166 = vsel %vm1685, %v2149, 0
      %v2169 = vsel %vm1685, %v2150, 0
      %v2172 = vsel %vm1685, %v2151, 0
      %v2175 = vsel %vm1685, %v2152, 0
      %v2178 = vsel %vm1685, %v2153, 0
      %v2181 = vsel %vm1685, %v2154, 0
      %v2184 = vsel %vm1685, %v2155, 0
      %v2187 = vsel %vm1685, %v2156, 0
      %v2190 = vsel %vm1710, %v2164, 0
      %2192 = vmatprep.subr.bf16.mxu0 0
      %2193 = vmatpush1.bf16.msra.mxu0 %v2190
      %2194 = vmatprep.subr.bf16.mxu0 0
      %2195 = vmatpush1.bf16.msra.mxu0 0
      %2196 = vmatprep.subr.bf16.mxu0 0
      %2197 = vmatpush1.bf16.msra.mxu0 0
      %2198 = vmatprep.subr.bf16.mxu0 0
      %2199 = vmatpush1.bf16.msra.mxu0 0
      %2200 = vmatprep.subr.bf16.mxu0 0
      %2201 = vmatpush1.bf16.msra.mxu0 0
      %2202 = vmatprep.subr.bf16.mxu0 0
      %2203 = vmatpush1.bf16.msra.mxu0 0
      %2204 = vmatprep.subr.bf16.mxu0 0
      %2205 = vmatpush1.bf16.msra.mxu0 0
      %2206 = vmatprep.subr.bf16.mxu0 0
      %2207 = vmatpush1.bf16.msra.mxu0 0
      %2208 = vmatprep.subr.bf16.mxu0 0
      %2209 = vmatpush1.bf16.msra.mxu0 0
      %2210 = vmatprep.subr.bf16.mxu0 0
      %2211 = vmatpush1.bf16.msra.mxu0 0
      %2212 = vmatprep.subr.bf16.mxu0 0
      %2213 = vmatpush1.bf16.msra.mxu0 0
      %2214 = vmatprep.subr.bf16.mxu0 0
      %2215 = vmatpush1.bf16.msra.mxu0 0
      %2216 = vmatprep.subr.bf16.mxu0 0
      %2217 = vmatpush1.bf16.msra.mxu0 0
      %2218 = vmatprep.subr.bf16.mxu0 0
      %2219 = vmatpush1.bf16.msra.mxu0 0
      %2220 = vmatprep.subr.bf16.mxu0 0
      %2221 = vmatpush1.bf16.msra.mxu0 0
      %2222 = vmatprep.subr.bf16.mxu0 0
      %2223 = vmatpush1.bf16.msra.mxu0 0
      %2224 = vmatprep.mubr.bf16.mxu0 0
      %2225 = vmatmul.mubr.bf16.gmra.mrb[0].mxu0 %v2166
      %v2226 = vpop.f32.mrb[0].mxu0
      %v2227 = vadd.f32 0.0, %v2226
      %v2228 = vpop.f32.mrb[0].mxu0
      %v2229 = vpop.f32.mrb[0].mxu0
      %v2230 = vadd.f32 0.0, %v2229
      %v2231 = vpop.f32.mrb[0].mxu0
      %2232 = vmatprep.mubr.bf16.mxu0 0
      %2233 = vmatmul.mubr.bf16.gmra.mrb[0].mxu0 %v2169
      %v2234 = vpop.f32.mrb[0].mxu0
      %v2235 = vadd.f32 0.0, %v2234
      %v2236 = vpop.f32.mrb[0].mxu0
      %v2237 = vpop.f32.mrb[0].mxu0
      %v2238 = vadd.f32 0.0, %v2237
      %v2239 = vpop.f32.mrb[0].mxu0
      %2240 = vmatprep.mubr.bf16.mxu0 0
      %2241 = vmatmul.mubr.bf16.gmra.mrb[0].mxu0 %v2172
      %v2242 = vpop.f32.mrb[0].mxu0
      %v2243 = vadd.f32 0.0, %v2242
      %v2244 = vpop.f32.mrb[0].mxu0
      %v2245 = vpop.f32.mrb[0].mxu0
      %v2246 = vadd.f32 0.0, %v2245
      %v2247 = vpop.f32.mrb[0].mxu0
      %2248 = vmatprep.mubr.bf16.mxu0 0
      %2249 = vmatmul.mubr.bf16.gmra.mrb[0].mxu0 %v2175
      %v2250 = vpop.f32.mrb[0].mxu0
      %v2251 = vadd.f32 0.0, %v2250
      %v2252 = vpop.f32.mrb[0].mxu0
      %v2253 = vpop.f32.mrb[0].mxu0
      %v2254 = vadd.f32 0.0, %v2253
      %v2255 = vpop.f32.mrb[0].mxu0
      %2256 = vmatprep.mubr.bf16.mxu0 0
      %2257 = vmatmul.mubr.bf16.gmra.mrb[0].mxu0 %v2178
      %v2258 = vpop.f32.mrb[0].mxu0
      %v2259 = vadd.f32 0.0, %v2258
      %v2260 = vpop.f32.mrb[0].mxu0
      %v2261 = vpop.f32.mrb[0].mxu0
      %v2262 = vadd.f32 0.0, %v2261
      %v2263 = vpop.f32.mrb[0].mxu0
      %2264 = vmatprep.mubr.bf16.mxu0 0
      %2265 = vmatmul.mubr.bf16.gmra.mrb[0].mxu0 %v2181
      %v2266 = vpop.f32.mrb[0].mxu0
      %v2267 = vadd.f32 0.0, %v2266
      %v2268 = vpop.f32.mrb[0].mxu0
      %v2269 = vpop.f32.mrb[0].mxu0
      %v2270 = vadd.f32 0.0, %v2269
      %v2271 = vpop.f32.mrb[0].mxu0
      %2272 = vmatprep.mubr.bf16.mxu0 0
      %2273 = vmatmul.mubr.bf16.gmra.mrb[0].mxu0 %v2184
      %v2274 = vpop.f32.mrb[0].mxu0
      %v2275 = vadd.f32 0.0, %v2274
      %v2276 = vpop.f32.mrb[0].mxu0
      %v2277 = vpop.f32.mrb[0].mxu0
      %v2278 = vadd.f32 0.0, %v2277
      %v2279 = vpop.f32.mrb[0].mxu0
      %2280 = vmatprep.mubr.bf16.mxu0 0
      %2281 = vmatmul.mubr.bf16.gmra.mrb[0].mxu0 %v2187
      %v2282 = vpop.f32.mrb[0].mxu0
      %v2283 = vadd.f32 0.0, %v2282
      %v2284 = vpop.f32.mrb[0].mxu0
      %v2285 = vpop.f32.mrb[0].mxu0
      %v2286 = vadd.f32 0.0, %v2285
      %v2287 = vpop.f32.mrb[0].mxu0
      %2288 = vdwg.mxu0
      %v2289 = vadd.f32 %v1878, %v2227
      %v2290 = vadd.f32 %v1881, %v2230
      %v2291 = vadd.f32 %v1886, %v2235
      %v2292 = vadd.f32 %v1889, %v2238
      %v2293 = vadd.f32 %v1894, %v2243
      %v2294 = vadd.f32 %v1897, %v2246
      %v2295 = vadd.f32 %v1902, %v2251
      %v2296 = vadd.f32 %v1905, %v2254
      %v2297 = vadd.f32 %v1910, %v2259
      %v2298 = vadd.f32 %v1913, %v2262
      %v2299 = vadd.f32 %v1918, %v2267
      %v2300 = vadd.f32 %v1921, %v2270
      %v2301 = vadd.f32 %v1926, %v2275
      %v2302 = vadd.f32 %v1929, %v2278
      %v2303 = vadd.f32 %v1934, %v2283
      %v2304 = vadd.f32 %v1937, %v2286
      %v2305 = vld [vmem:[%s11] sm:$0x1]
      %v2307 = vlaneseq
      %v2308 = vshrl.u32 %v2307, 7
      %v2309 = vsub.s32 0, %v2308
      %v2310 = vrot.slane %v2305, %v2309
      %v2312 = vadd.f32 %v2289, %v2310
      %v2313 = vadd.f32 %v2290, %v2310
      %v2314 = vadd.f32 %v2291, %v2310
      %v2315 = vadd.f32 %v2292, %v2310
      %v2316 = vadd.f32 %v2293, %v2310
      %v2317 = vadd.f32 %v2294, %v2310
      %v2318 = vadd.f32 %v2295, %v2310
      %v2319 = vadd.f32 %v2296, %v2310
      %v2320 = vadd.f32 %v2297, %v2310
      %v2321 = vadd.f32 %v2298, %v2310
      %v2322 = vadd.f32 %v2299, %v2310
      %v2323 = vadd.f32 %v2300, %v2310
      %v2324 = vadd.f32 %v2301, %v2310
      %v2325 = vadd.f32 %v2302, %v2310
      %v2326 = vadd.f32 %v2303, %v2310
      %v2327 = vadd.f32 %v2304, %v2310
      %2328 = vst.msk [vmem:[%s822] sm:$0xff] %vm1100, %v2312
      %2329 = vst.msk [vmem:[%s822 + $0x8] sm:$0xff] %vm1100, %v2313
      %2330 = vst.msk [vmem:[%s822 + $0x10] sm:$0xff] %vm1100, %v2314
      %2331 = vst.msk [vmem:[%s822 + $0x18] sm:$0xff] %vm1100, %v2315
      %2332 = vst.msk [vmem:[%s822 + $0x20] sm:$0xff] %vm1100, %v2316
      %2333 = vst.msk [vmem:[%s822 + $0x28] sm:$0xff] %vm1100, %v2317
      %2334 = vst.msk [vmem:[%s822 + $0x30] sm:$0xff] %vm1100, %v2318
      %2335 = vst.msk [vmem:[%s822 + $0x38] sm:$0xff] %vm1100, %v2319
      %2336 = vst.msk [vmem:[%s822 + $0x40] sm:$0xff] %vm1100, %v2320
      %2337 = vst.msk [vmem:[%s822 + $0x48] sm:$0xff] %vm1100, %v2321
      %2338 = vst.msk [vmem:[%s822 + $0x50] sm:$0xff] %vm1100, %v2322
      %2339 = vst.msk [vmem:[%s822 + $0x58] sm:$0xff] %vm1100, %v2323
      %2340 = vst.msk [vmem:[%s822 + $0x60] sm:$0xff] %vm1100, %v2324
      %2341 = vst.msk [vmem:[%s822 + $0x68] sm:$0xff] %vm1100, %v2325
      %2342 = vst.msk [vmem:[%s822 + $0x70] sm:$0xff] %vm1100, %v2326
      %2343 = vst.msk [vmem:[%s822 + $0x78] sm:$0xff] %vm1100, %v2327
      %v2344 = vsel %vm1100, %v2312, 0.0
      %v2345 = vsel %vm1100, %v2313, 0.0
      %v2346 = vadd.f32 %v2344, %v2345
      %v2347 = vsel %vm1100, %v2314, 0.0
      %v2348 = vadd.f32 %v2346, %v2347
      %v2349 = vsel %vm1100, %v2315, 0.0
      %v2350 = vadd.f32 %v2348, %v2349
      %v2351 = vsel %vm1100, %v2316, 0.0
      %v2352 = vadd.f32 %v2350, %v2351
      %v2353 = vsel %vm1100, %v2317, 0.0
      %v2354 = vadd.f32 %v2352, %v2353
      %v2355 = vsel %vm1100, %v2318, 0.0
      %v2356 = vadd.f32 %v2354, %v2355
      %v2357 = vsel %vm1100, %v2319, 0.0
      %v2358 = vadd.f32 %v2356, %v2357
      %v2359 = vsel %vm1100, %v2320, 0.0
      %v2360 = vadd.f32 %v2358, %v2359
      %v2361 = vsel %vm1100, %v2321, 0.0
      %v2362 = vadd.f32 %v2360, %v2361
      %v2363 = vsel %vm1100, %v2322, 0.0
      %v2364 = vadd.f32 %v2362, %v2363
      %v2365 = vsel %vm1100, %v2323, 0.0
      %v2366 = vadd.f32 %v2364, %v2365
      %v2367 = vsel %vm1100, %v2324, 0.0
      %v2368 = vadd.f32 %v2366, %v2367
      %v2369 = vsel %vm1100, %v2325, 0.0
      %v2370 = vadd.f32 %v2368, %v2369
      %v2371 = vsel %vm1100, %v2326, 0.0
      %v2372 = vadd.f32 %v2370, %v2371
      %v2373 = vsel %vm1100, %v2327, 0.0
      %v2374 = vadd.f32 %v2372, %v2373
      %v2375 = vrot.slane %v2374, 4
      %v2376 = vadd.f32 %v2374, %v2375
      %v2377 = vrot.slane %v2376, 2
      %v2378 = vadd.f32 %v2376, %v2377
      %v2379 = vrot.slane %v2378, 1
      %v2380 = vadd.f32 %v2378, %v2379
      %2381 = vst.msk [vmem:[%s831] sm:$0xff] %vm1100, %v2380
      %v2382 = vmul.f32 %v2312, %v2312
      %v2383 = vmul.f32 %v2313, %v2313
      %v2384 = vmul.f32 %v2314, %v2314
      %v2385 = vmul.f32 %v2315, %v2315
      %v2386 = vmul.f32 %v2316, %v2316
      %v2387 = vmul.f32 %v2317, %v2317
      %v2388 = vmul.f32 %v2318, %v2318
      %v2389 = vmul.f32 %v2319, %v2319
      %v2390 = vmul.f32 %v2320, %v2320
      %v2391 = vmul.f32 %v2321, %v2321
      %v2392 = vmul.f32 %v2322, %v2322
      %v2393 = vmul.f32 %v2323, %v2323
      %v2394 = vmul.f32 %v2324, %v2324
      %v2395 = vmul.f32 %v2325, %v2325
      %v2396 = vmul.f32 %v2326, %v2326
      %v2397 = vmul.f32 %v2327, %v2327
      %v2398 = vsel %vm1100, %v2382, 0.0
      %v2399 = vsel %vm1100, %v2383, 0.0
      %v2400 = vadd.f32 %v2398, %v2399
      %v2401 = vsel %vm1100, %v2384, 0.0
      %v2402 = vadd.f32 %v2400, %v2401
      %v2403 = vsel %vm1100, %v2385, 0.0
      %v2404 = vadd.f32 %v2402, %v2403
      %v2405 = vsel %vm1100, %v2386, 0.0
      %v2406 = vadd.f32 %v2404, %v2405
      %v2407 = vsel %vm1100, %v2387, 0.0
      %v2408 = vadd.f32 %v2406, %v2407
      %v2409 = vsel %vm1100, %v2388, 0.0
      %v2410 = vadd.f32 %v2408, %v2409
      %v2411 = vsel %vm1100, %v2389, 0.0
      %v2412 = vadd.f32 %v2410, %v2411
      %v2413 = vsel %vm1100, %v2390, 0.0
      %v2414 = vadd.f32 %v2412, %v2413
      %v2415 = vsel %vm1100, %v2391, 0.0
      %v2416 = vadd.f32 %v2414, %v2415
      %v2417 = vsel %vm1100, %v2392, 0.0
      %v2418 = vadd.f32 %v2416, %v2417
      %v2419 = vsel %vm1100, %v2393, 0.0
      %v2420 = vadd.f32 %v2418, %v2419
      %v2421 = vsel %vm1100, %v2394, 0.0
      %v2422 = vadd.f32 %v2420, %v2421
      %v2423 = vsel %vm1100, %v2395, 0.0
      %v2424 = vadd.f32 %v2422, %v2423
      %v2425 = vsel %vm1100, %v2396, 0.0
      %v2426 = vadd.f32 %v2424, %v2425
      %v2427 = vsel %vm1100, %v2397, 0.0
      %v2428 = vadd.f32 %v2426, %v2427
      %v2429 = vrot.slane %v2428, 4
      %v2430 = vadd.f32 %v2428, %v2429
      %v2431 = vrot.slane %v2430, 2
      %v2432 = vadd.f32 %v2430, %v2431
      %v2433 = vrot.slane %v2432, 1
      %v2434 = vadd.f32 %v2432, %v2433
      %2435 = vst.msk [vmem:[%s839] sm:$0xff] %vm1100, %v2434
      %s2436 = smul.u32 8, %s31
      %p2437 = scmp.lt.s32.totalorder %s30, 1
      %s2438 = scalar_select %p2437, %s30, 1
      %p2439 = scmp.lt.s32.totalorder %s2436, 15
      %s2440 = scalar_select %p2439, %s2436, 15
      %s2441 = smul.addr %s2440, 2
      %s2442 = smul.addr %s2438, 32
      %s2443 = sadd.s32 %s2441, %s2442
      %s2444 = smul.addr %s2443, 8
      %s2445 = scalar_lea.vmem %s12, %s2444
      %p2446 = scmp.lt.s32.totalorder %s30, 1
      %s2447 = scalar_select %p2446, %s30, 1
      %p2448 = scmp.lt.s32.totalorder %s31, 1
      %s2449 = scalar_select %p2448, %s31, 1
      %s2450 = smul.addr %s2447, 2
      %s2451 = sadd.s32 %s2449, %s2450
      %s2452 = smul.addr %s2451, 8
      %s2453 = scalar_lea.vmem %s13, %s2452
      %p2454 = scmp.lt.s32.totalorder %s30, 1
      %s2455 = scalar_select %p2454, %s30, 1
      %p2456 = scmp.lt.s32.totalorder %s31, 1
      %s2457 = scalar_select %p2456, %s31, 1
      %s2458 = smul.addr %s2455, 2
      %s2459 = sadd.s32 %s2457, %s2458
      %s2460 = smul.addr %s2459, 8
      %s2461 = scalar_lea.vmem %s14, %s2460
      // Predicated region
      $region69: #{up_forward.6} parent=67 // pred_check
        %p2462 = pneg %p384
      $region70: #{up_forward.6} parent=67 // pred_check_branch
        %2464 = sbr.rel (%p2462) target = $region72
      $region71: #{up_forward.6} parent=67 // pred_region
        %s2465 = smul.u32 8, %s31
      $region72: #{up_forward.6} parent=67 // pred_fallthru
        _
      // Predicated region
      $region73: #{up_forward.6} parent=67 // pred_check
        %p2466 = pneg %p412
      $region74: #{up_forward.6} parent=67 // pred_check_branch
        %2468 = sbr.rel (%p2466) target = $region76
      $region75: #{up_forward.6} parent=67 // pred_region
        _
      $region76: #{up_forward.6} parent=67 // pred_fallthru
        _
      // Predicated region
      $region77: #{up_forward.6} parent=67 // pred_check
        %p2469 = pneg %p440
      $region78: #{up_forward.6} parent=67 // pred_check_branch
        %2471 = sbr.rel (%p2469) target = $region80
      $region79: #{up_forward.6} parent=67 // pred_region
        _
      $region80: #{up_forward.6} parent=67 // pred_fallthru
        _
    $region68: #{up_forward.6} parent=5 // pred_fallthru
      _
    %p2472 = scmp.le.s32.totalorder 2, %s21
    // Predicated region
    $region81: #{up_forward.6} parent=5 // pred_check
      %p2473 = pneg %p2472
    $region82: #{up_forward.6} parent=5 // pred_check_branch
      %2475 = sbr.rel (%p2473) target = $region84
    $region83: #{up_forward.6} parent=5 // pred_region
      %s2476 = ssub.s32 %s21, 2
      // Predicated region
      $region85: #{up_forward.6} parent=83 // pred_check
        %p2477 = pneg %p390
      $region86: #{up_forward.6} parent=83 // pred_check_branch
        %2479 = sbr.rel (%p2477) target = $region88
      $region87: #{up_forward.6} parent=83 // pred_region
        %s2480 = smul.u32 8, %s33
        %p2481 = scmp.lt.s32.totalorder %s32, 1
        %s2482 = scalar_select %p2481, %s32, 1
        %p2483 = scmp.lt.s32.totalorder %s2480, 15
        %s2484 = scalar_select %p2483, %s2480, 15
        %s2485 = smul.addr %s2484, 2
        %s2486 = smul.addr %s2482, 32
        %s2487 = sadd.s32 %s2485, %s2486
        %s2488 = smul.addr %s2487, 8
        %s2489 = scalar_lea.vmem %s12, %s2488
      $region88: #{up_forward.6} parent=83 // pred_fallthru
        _
      // Predicated region
      $region89: #{up_forward.6} parent=83 // pred_check
        %p2490 = pneg %p418
      $region90: #{up_forward.6} parent=83 // pred_check_branch
        %2492 = sbr.rel (%p2490) target = $region92
      $region91: #{up_forward.6} parent=83 // pred_region
        %p2493 = scmp.lt.s32.totalorder %s32, 1
        %s2494 = scalar_select %p2493, %s32, 1
        %p2495 = scmp.lt.s32.totalorder %s33, 1
        %s2496 = scalar_select %p2495, %s33, 1
        %s2497 = smul.addr %s2494, 2
        %s2498 = sadd.s32 %s2496, %s2497
        %s2499 = smul.addr %s2498, 8
        %s2500 = scalar_lea.vmem %s13, %s2499
      $region92: #{up_forward.6} parent=83 // pred_fallthru
        _
      // Predicated region
      $region93: #{up_forward.6} parent=83 // pred_check
        %p2501 = pneg %p446
      $region94: #{up_forward.6} parent=83 // pred_check_branch
        %2503 = sbr.rel (%p2501) target = $region96
      $region95: #{up_forward.6} parent=83 // pred_region
        %p2504 = scmp.lt.s32.totalorder %s32, 1
        %s2505 = scalar_select %p2504, %s32, 1
        %p2506 = scmp.lt.s32.totalorder %s33, 1
        %s2507 = scalar_select %p2506, %s33, 1
        %s2508 = smul.addr %s2505, 2
        %s2509 = sadd.s32 %s2507, %s2508
        %s2510 = smul.addr %s2509, 8
        %s2511 = scalar_lea.vmem %s14, %s2510
      $region96: #{up_forward.6} parent=83 // pred_fallthru
        _
    $region84: #{up_forward.6} parent=5 // pred_fallthru
      _
  $region6: #{up_forward.6} parent=0 // loop_footer
    %s25 = sadd.s32 1, %s21
  $region7: #{up_forward.6} parent=0 // loop_footer_branch
    %20 = sbr.rel target = $region3
  $region8: #{up_forward.6} parent=0 // loop_exit
    _

// kernel: up_forward.7
$region0: #{up_forward.7}
  #allocation0 [shape = 'u32[]', space=smem, size = 0x4, offset = 0x4, fixed_abs, tag = 'smem constant byte address 0x4 - core index']
  #allocation1 [shape = 'u32[144,128]{1,0:T(1,128)}', space=vmem, size = 0x12000, scoped, tag = 'internal scratch']
  #allocation2 [shape = 'f32[10,18,4]{2,1,0:T(8,128)}', space=vmem, size = 0x1e000, scoped, tag = 'scratch operand']
  %s0 = inlined_call_operand.vmem [shape: f32[2,16,16,4], index: 0, kind: input, shape index: {}, may-alias: {0,1,2}]
  %s1 = inlined_call_operand.vmem [shape: f32[2,16,16,4], index: 1, kind: input, shape index: {}, may-alias: {0,1,2}]
  %s2 = inlined_call_operand.vmem [shape: f32[2,16,16,4], index: 2, kind: input, shape index: {}, may-alias: {0,1,2}]
  %s3 = inlined_call_operand.vmem [shape: f32[1,4], index: 3, kind: input, shape index: {}]
  %s4 = inlined_call_operand.vmem [shape: f32[1,4], index: 4, kind: input, shape index: {}]
  %s5 = inlined_call_operand.vmem [shape: bf16[3,12,4], index: 5, kind: input, shape index: {}]
  %s6 = inlined_call_operand.vmem [shape: f32[1,4], index: 6, kind: input, shape index: {}]
  %s7 = inlined_call_operand.vmem [shape: f32[2,16,16,4], index: 7, kind: output, shape index: {}]
  %s8 = sld [smem:[#allocation0]]
  $region61: #{up_forward.7} parent=0
    _
  %s10 = ssub.s32 1, %s8
  %s11 = scalar_select 0, %s10, %s8
  loop: start=0, step=1, limit=6
  $region2: #{up_forward.7} parent=0 // loop_pre_header
    _
  $region3: #{up_forward.7} parent=0 // loop_header
    %s13 = sphi 0, %s17
    %p14 = scmp.ge.s32.totalorder %s13, 6
    %s20 = sphi 0, %s32
    %s21 = sphi 0, %s28
    %s22 = sphi 0, %s20
    %s23 = sphi 0, %s21
    %s24 = sphi 0, %s22
    %s25 = sphi 0, %s23
    %s37 = sphi 0, %s39
    %s40 = sphi 0, %s37
    %s41 = sphi 0, %s40
    %s57 = sphi 0, %s41
    %s73 = sphi 0, %s75
    %s76 = sphi 0, %s73
    %s77 = sphi 0, %s76
    %s93 = sphi 0, %s77
    %s109 = sphi 0, %s111
    %s112 = sphi 0, %s109
    %s113 = sphi 0, %s112
    %s129 = sphi 0, %s113
    %s133 = sphi 0, %s133
    %s135 = sphi 0, %s133
    %s136 = sphi 0, %s135
    %s150 = sphi 0, %s136
    %s154 = sphi 0, %s154
    %s156 = sphi 0, %s154
    %s157 = sphi 0, %s156
    %s171 = sphi 0, %s157
    %s175 = sphi 0, %s175
    %s177 = sphi 0, %s175
    %s178 = sphi 0, %s177
    %s192 = sphi 0, %s178
    %s196 = sphi 0, %s196
    %s198 = sphi 0, %s196
    %s199 = sphi 0, %s198
    %s213 = sphi 0, %s199
    %s221 = sphi 0, %s223
    %s224 = sphi 0, %s221
    %s225 = sphi 0, %s224
    %s241 = sphi 0, %s225
  $region4: #{up_forward.7} parent=0 // loop_header_branch
    %16 = sbr.rel (%p14) target = $region8
  $region5: #{up_forward.7} parent=0 // loop_body
    %s18 = ssub.s32 %s13, 1
    %s19 = ssub.s32 %s13, 2
    %s26 = sadd.s32 1, %s21
    %p27 = scmp.ge.s32.totalorder %s26, 2
    %s28 = scalar_select %p27, 0, %s26
    %s29 = sadd.s32 1, %s20
    %s30 = scalar_select %p27, %s29, %s20
    %p31 = scmp.ge.s32.totalorder %s30, 2
    %s32 = scalar_select %p31, 0, %s30
    %s33 = ssub.s32 %s20, %s32
    %s34 = ssub.s32 %s21, %s28
    %s35 = sor.u32 %s33, %s34
    %p36 = scmp.eq.s32.totalorder %s35, 0
    %s38 = sadd.s32 %s37, 1
    %s39 = scalar_select %p36, %s37, %s38
    %p42 = pneg %p36
    %p43 = scmp.eq.s32.totalorder %s13, 3
    %p44 = por %p42, %p43
    %p45 = scmp.ne.s32.totalorder %s37, %s40
    %p46 = scmp.eq.s32.totalorder %s13, 0
    %p47 = por %p45, %p46
    %p48 = scmp.ne.s32.totalorder %s37, %s40
    %p49 = scmp.eq.s32.totalorder %s18, 3
    %p50 = por %p48, %p49
    %p51 = scmp.ne.s32.totalorder %s40, %s41
    %p52 = scmp.eq.s32.totalorder %s18, 0
    %p53 = por %p51, %p52
    %p54 = scmp.ne.s32.totalorder %s40, %s41
    %p55 = scmp.eq.s32.totalorder %s19, 3
    %p56 = por %p54, %p55
    %p58 = scmp.ne.s32.totalorder %s41, %s57
    %p59 = scmp.eq.s32.totalorder %s19, 0
    %p60 = por %p58, %p59
    %s61 = smul.u32 %s21, 8
    %s62 = ssub.s32 %s61, 1
    %p63 = scmp.gt.s32.totalorder %s62, 0
    %s64 = scalar_select %p63, %s62, 0
    %s65 = smul.u32 %s28, 8
    %s66 = ssub.s32 %s65, 1
    %p67 = scmp.gt.s32.totalorder %s66, 0
    %s68 = scalar_select %p67, %s66, 0
    %s69 = ssub.s32 %s20, %s32
    %s70 = ssub.s32 %s64, %s68
    %s71 = sor.u32 %s69, %s70
    %p72 = scmp.eq.s32.totalorder %s71, 0
    %s74 = sadd.s32 %s73, 1
    %s75 = scalar_select %p72, %s73, %s74
    %p78 = pneg %p72
    %p79 = scmp.eq.s32.totalorder %s13, 3
    %p80 = por %p78, %p79
    %p81 = scmp.ne.s32.totalorder %s73, %s76
    %p82 = scmp.eq.s32.totalorder %s13, 0
    %p83 = por %p81, %p82
    %p84 = scmp.ne.s32.totalorder %s73, %s76
    %p85 = scmp.eq.s32.totalorder %s18, 3
    %p86 = por %p84, %p85
    %p87 = scmp.ne.s32.totalorder %s76, %s77
    %p88 = scmp.eq.s32.totalorder %s18, 0
    %p89 = por %p87, %p88
    %p90 = scmp.ne.s32.totalorder %s76, %s77
    %p91 = scmp.eq.s32.totalorder %s19, 3
    %p92 = por %p90, %p91
    %p94 = scmp.ne.s32.totalorder %s77, %s93
    %p95 = scmp.eq.s32.totalorder %s19, 0
    %p96 = por %p94, %p95
    %s97 = sadd.s32 %s21, 1
    %s98 = smul.u32 %s97, 8
    %p99 = scmp.lt.s32.totalorder %s98, 15
    %s100 = scalar_select %p99, %s98, 15
    %s101 = sadd.s32 %s28, 1
    %s102 = smul.u32 %s101, 8
    %p103 = scmp.lt.s32.totalorder %s102, 15
    %s104 = scalar_select %p103, %s102, 15
    %s105 = ssub.s32 %s20, %s32
    %s106 = ssub.s32 %s100, %s104
    %s107 = sor.u32 %s105, %s106
    %p108 = scmp.eq.s32.totalorder %s107, 0
    %s110 = sadd.s32 %s109, 1
    %s111 = scalar_select %p108, %s109, %s110
    %p114 = pneg %p108
    %p115 = scmp.eq.s32.totalorder %s13, 3
    %p116 = por %p114, %p115
    %p117 = scmp.ne.s32.totalorder %s109, %s112
    %p118 = scmp.eq.s32.totalorder %s13, 0
    %p119 = por %p117, %p118
    %p120 = scmp.ne.s32.totalorder %s109, %s112
    %p121 = scmp.eq.s32.totalorder %s18, 3
    %p122 = por %p120, %p121
    %p123 = scmp.ne.s32.totalorder %s112, %s113
    %p124 = scmp.eq.s32.totalorder %s18, 0
    %p125 = por %p123, %p124
    %p126 = scmp.ne.s32.totalorder %s112, %s113
    %p127 = scmp.eq.s32.totalorder %s19, 3
    %p128 = por %p126, %p127
    %p130 = scmp.ne.s32.totalorder %s113, %s129
    %p131 = scmp.eq.s32.totalorder %s19, 0
    %p132 = por %p130, %p131
    %s134 = sadd.s32 %s133, 1
    %p137 = scmp.eq.s32.totalorder %s13, 3
    %p138 = scmp.ne.s32.totalorder %s133, %s135
    %p139 = scmp.eq.s32.totalorder %s13, 0
    %p140 = por %p138, %p139
    %p141 = scmp.ne.s32.totalorder %s133, %s135
    %p142 = scmp.eq.s32.totalorder %s18, 3
    %p143 = por %p141, %p142
    %p144 = scmp.ne.s32.totalorder %s135, %s136
    %p145 = scmp.eq.s32.totalorder %s18, 0
    %p146 = por %p144, %p145
    %p147 = scmp.ne.s32.totalorder %s135, %s136
    %p148 = scmp.eq.s32.totalorder %s19, 3
    %p149 = por %p147, %p148
    %p151 = scmp.ne.s32.totalorder %s136, %s150
    %p152 = scmp.eq.s32.totalorder %s19, 0
    %p153 = por %p151, %p152
    %s155 = sadd.s32 %s154, 1
    %p158 = scmp.eq.s32.totalorder %s13, 3
    %p159 = scmp.ne.s32.totalorder %s154, %s156
    %p160 = scmp.eq.s32.totalorder %s13, 0
    %p161 = por %p159, %p160
    %p162 = scmp.ne.s32.totalorder %s154, %s156
    %p163 = scmp.eq.s32.totalorder %s18, 3
    %p164 = por %p162, %p163
    %p165 = scmp.ne.s32.totalorder %s156, %s157
    %p166 = scmp.eq.s32.totalorder %s18, 0
    %p167 = por %p165, %p166
    %p168 = scmp.ne.s32.totalorder %s156, %s157
    %p169 = scmp.eq.s32.totalorder %s19, 3
    %p170 = por %p168, %p169
    %p172 = scmp.ne.s32.totalorder %s157, %s171
    %p173 = scmp.eq.s32.totalorder %s19, 0
    %p174 = por %p172, %p173
    %s176 = sadd.s32 %s175, 1
    %p179 = scmp.eq.s32.totalorder %s13, 3
    %p180 = scmp.ne.s32.totalorder %s175, %s177
    %p181 = scmp.eq.s32.totalorder %s13, 0
    %p182 = por %p180, %p181
    %p183 = scmp.ne.s32.totalorder %s175, %s177
    %p184 = scmp.eq.s32.totalorder %s18, 3
    %p185 = por %p183, %p184
    %p186 = scmp.ne.s32.totalorder %s177, %s178
    %p187 = scmp.eq.s32.totalorder %s18, 0
    %p188 = por %p186, %p187
    %p189 = scmp.ne.s32.totalorder %s177, %s178
    %p190 = scmp.eq.s32.totalorder %s19, 3
    %p191 = por %p189, %p190
    %p193 = scmp.ne.s32.totalorder %s178, %s192
    %p194 = scmp.eq.s32.totalorder %s19, 0
    %p195 = por %p193, %p194
    %s197 = sadd.s32 %s196, 1
    %p200 = scmp.eq.s32.totalorder %s13, 3
    %p201 = scmp.ne.s32.totalorder %s196, %s198
    %p202 = scmp.eq.s32.totalorder %s13, 0
    %p203 = por %p201, %p202
    %p204 = scmp.ne.s32.totalorder %s196, %s198
    %p205 = scmp.eq.s32.totalorder %s18, 3
    %p206 = por %p204, %p205
    %p207 = scmp.ne.s32.totalorder %s198, %s199
    %p208 = scmp.eq.s32.totalorder %s18, 0
    %p209 = por %p207, %p208
    %p210 = scmp.ne.s32.totalorder %s198, %s199
    %p211 = scmp.eq.s32.totalorder %s19, 3
    %p212 = por %p210, %p211
    %p214 = scmp.ne.s32.totalorder %s199, %s213
    %p215 = scmp.eq.s32.totalorder %s19, 0
    %p216 = por %p214, %p215
    %s217 = ssub.s32 %s20, %s32
    %s218 = ssub.s32 %s21, %s28
    %s219 = sor.u32 %s217, %s218
    %p220 = scmp.eq.s32.totalorder %s219, 0
    %s222 = sadd.s32 %s221, 1
    %s223 = scalar_select %p220, %s221, %s222
    %p226 = pneg %p220
    %p227 = scmp.eq.s32.totalorder %s13, 3
    %p228 = por %p226, %p227
    %p229 = scmp.ne.s32.totalorder %s221, %s224
    %p230 = scmp.eq.s32.totalorder %s13, 0
    %p231 = por %p229, %p230
    %p232 = scmp.ne.s32.totalorder %s221, %s224
    %p233 = scmp.eq.s32.totalorder %s18, 3
    %p234 = por %p232, %p233
    %p235 = scmp.ne.s32.totalorder %s224, %s225
    %p236 = scmp.eq.s32.totalorder %s18, 0
    %p237 = por %p235, %p236
    %p238 = scmp.ne.s32.totalorder %s224, %s225
    %p239 = scmp.eq.s32.totalorder %s19, 3
    %p240 = por %p238, %p239
    %p242 = scmp.ne.s32.totalorder %s225, %s241
    %p243 = scmp.eq.s32.totalorder %s19, 0
    %p244 = por %p242, %p243
    %p245 = scmp.le.s32.totalorder 1, %s13
    %p246 = scmp.lt.s32.totalorder %s13, 5
    %p247 = pnand %p245, %p246
    %p248 = pneg %p247
    // Predicated region
    $region9: #{up_forward.7} parent=5 // pred_check
      _
    $region10: #{up_forward.7} parent=5 // pred_check_branch
      %250 = sbr.rel (%p247) target = $region12
    $region11: #{up_forward.7} parent=5 // pred_region
      %s251 = ssub.s32 %s13, 1
      // Predicated region
      $region13: #{up_forward.7} parent=11 // pred_check
        %p252 = pneg %p146
      $region14: #{up_forward.7} parent=11 // pred_check_branch
        %254 = sbr.rel (%p252) target = $region16
      $region15: #{up_forward.7} parent=11 // pred_region
        _
      $region16: #{up_forward.7} parent=11 // pred_fallthru
        _
      // Predicated region
      $region17: #{up_forward.7} parent=11 // pred_check
        %p255 = pneg %p167
      $region18: #{up_forward.7} parent=11 // pred_check_branch
        %257 = sbr.rel (%p255) target = $region20
      $region19: #{up_forward.7} parent=11 // pred_region
        _
      $region20: #{up_forward.7} parent=11 // pred_fallthru
        _
      // Predicated region
      $region21: #{up_forward.7} parent=11 // pred_check
        %p258 = pneg %p188
      $region22: #{up_forward.7} parent=11 // pred_check_branch
        %260 = sbr.rel (%p258) target = $region24
      $region23: #{up_forward.7} parent=11 // pred_region
        _
      $region24: #{up_forward.7} parent=11 // pred_fallthru
        _
      // Predicated region
      $region25: #{up_forward.7} parent=11 // pred_check
        %p261 = pneg %p209
      $region26: #{up_forward.7} parent=11 // pred_check_branch
        %263 = sbr.rel (%p261) target = $region28
      $region27: #{up_forward.7} parent=11 // pred_region
        _
      $region28: #{up_forward.7} parent=11 // pred_fallthru
        _
    $region12: #{up_forward.7} parent=5 // pred_fallthru
      _
    %p264 = scmp.lt.s32.totalorder %s13, 4
    // Predicated region
    $region29: #{up_forward.7} parent=5 // pred_check
      %p265 = pneg %p264
    $region30: #{up_forward.7} parent=5 // pred_check_branch
      %267 = sbr.rel (%p265) target = $region32
    $region31: #{up_forward.7} parent=5 // pred_region
      // Predicated region
      $region33: #{up_forward.7} parent=31 // pred_check
        %p268 = pneg %p47
      $region34: #{up_forward.7} parent=31 // pred_check_branch
        %270 = sbr.rel (%p268) target = $region36
      $region35: #{up_forward.7} parent=31 // pred_region
        %s271 = smul.u32 8, %s21
        %p272 = scmp.lt.s32.totalorder %s20, 1
        %s273 = scalar_select %p272, %s20, 1
        %p274 = scmp.lt.s32.totalorder %s271, 15
        %s275 = scalar_select %p274, %s271, 15
        %s276 = smul.addr %s275, 2
        %s277 = smul.addr %s273, 32
        %s278 = sadd.s32 %s276, %s277
        %s279 = smul.addr %s278, 8
        %s280 = scalar_lea.vmem %s0, %s279
        %s281 = smul.u32 8, %s21
      $region36: #{up_forward.7} parent=31 // pred_fallthru
        _
      // Predicated region
      $region37: #{up_forward.7} parent=31 // pred_check
        %p282 = pneg %p83
      $region38: #{up_forward.7} parent=31 // pred_check_branch
        %284 = sbr.rel (%p282) target = $region40
      $region39: #{up_forward.7} parent=31 // pred_region
        %s285 = smul.u32 %s21, 8
        %s286 = ssub.s32 %s285, 1
        %p287 = scmp.gt.s32.totalorder %s286, 0
        %s288 = scalar_select %p287, %s286, 0
        %p289 = scmp.lt.s32.totalorder %s20, 1
        %s290 = scalar_select %p289, %s20, 1
        %p291 = scmp.lt.s32.totalorder %s288, 15
        %s292 = scalar_select %p291, %s288, 15
        %s293 = smul.addr %s292, 2
        %s294 = smul.addr %s290, 32
        %s295 = sadd.s32 %s293, %s294
        %s296 = smul.addr %s295, 8
        %s297 = scalar_lea.vmem %s1, %s296
        %s298 = smul.u32 %s21, 8
        %s299 = ssub.s32 %s298, 1
        %p300 = scmp.gt.s32.totalorder %s299, 0
        %s301 = scalar_select %p300, %s299, 0
      $region40: #{up_forward.7} parent=31 // pred_fallthru
        _
      // Predicated region
      $region41: #{up_forward.7} parent=31 // pred_check
        %p302 = pneg %p119
      $region42: #{up_forward.7} parent=31 // pred_check_branch
        %304 = sbr.rel (%p302) target = $region44
      $region43: #{up_forward.7} parent=31 // pred_region
        %s305 = sadd.s32 %s21, 1
        %s306 = smul.u32 %s305, 8
        %p307 = scmp.lt.s32.totalorder %s306, 15
        %s308 = scalar_select %p307, %s306, 15
        %p309 = scmp.lt.s32.totalorder %s20, 1
        %s310 = scalar_select %p309, %s20, 1
        %p311 = scmp.lt.s32.totalorder %s308, 15
        %s312 = scalar_select %p311, %s308, 15
        %s313 = smul.addr %s312, 2
        %s314 = smul.addr %s310, 32
        %s315 = sadd.s32 %s313, %s314
        %s316 = smul.addr %s315, 8
        %s317 = scalar_lea.vmem %s2, %s316
        %s318 = sadd.s32 %s21, 1
        %s319 = smul.u32 %s318, 8
        %p320 = scmp.lt.s32.totalorder %s319, 15
        %s321 = scalar_select %p320, %s319, 15
      $region44: #{up_forward.7} parent=31 // pred_fallthru
        _
    $region32: #{up_forward.7} parent=5 // pred_fallthru
      _
    %p322 = scmp.le.s32.totalorder 1, %s13
    %p323 = scmp.lt.s32.totalorder %s13, 5
    %p324 = pnand %p322, %p323
    %p325 = pneg %p324
    // Predicated region
    $region45: #{up_forward.7} parent=5 // pred_check
      _
    $region46: #{up_forward.7} parent=5 // pred_check_branch
      %327 = sbr.rel (%p324) target = $region48
    $region47: #{up_forward.7} parent=5 // pred_region
      %s328 = ssub.s32 %s13, 1
      %s329 = smul.u32 8, %s23
      %p330 = scmp.lt.s32.totalorder %s22, 1
      %s331 = scalar_select %p330, %s22, 1
      %p332 = scmp.lt.s32.totalorder %s329, 15
      %s333 = scalar_select %p332, %s329, 15
      %s334 = smul.addr %s333, 2
      %s335 = smul.addr %s331, 32
      %s336 = sadd.s32 %s334, %s335
      %s337 = smul.addr %s336, 8
      %s338 = scalar_lea.vmem %s0, %s337
      %p339 = pneg %p53
      %p340 = pneg %p50
      %s341 = smul.u32 %s23, 8
      %s342 = ssub.s32 %s341, 1
      %p343 = scmp.gt.s32.totalorder %s342, 0
      %s344 = scalar_select %p343, %s342, 0
      %p345 = scmp.lt.s32.totalorder %s22, 1
      %s346 = scalar_select %p345, %s22, 1
      %p347 = scmp.lt.s32.totalorder %s344, 15
      %s348 = scalar_select %p347, %s344, 15
      %s349 = smul.addr %s348, 2
      %s350 = smul.addr %s346, 32
      %s351 = sadd.s32 %s349, %s350
      %s352 = smul.addr %s351, 8
      %s353 = scalar_lea.vmem %s1, %s352
      %p354 = pneg %p89
      %p355 = pneg %p86
      %s356 = sadd.s32 %s23, 1
      %s357 = smul.u32 %s356, 8
      %p358 = scmp.lt.s32.totalorder %s357, 15
      %s359 = scalar_select %p358, %s357, 15
      %p360 = scmp.lt.s32.totalorder %s22, 1
      %s361 = scalar_select %p360, %s22, 1
      %p362 = scmp.lt.s32.totalorder %s359, 15
      %s363 = scalar_select %p362, %s359, 15
      %s364 = smul.addr %s363, 2
      %s365 = smul.addr %s361, 32
      %s366 = sadd.s32 %s364, %s365
      %s367 = smul.addr %s366, 8
      %s368 = scalar_lea.vmem %s2, %s367
      %p369 = pneg %p125
      %p370 = pneg %p122
      %p371 = pneg %p146
      %p372 = pneg %p143
      %p373 = pneg %p167
      %p374 = pneg %p164
      %p375 = pneg %p188
      %p376 = pneg %p185
      %p377 = pneg %p209
      %p378 = pneg %p206
      %p379 = pneg %p237
      %p380 = pneg %p234
      %s381 = smul.u32 8, %s23
      %p382 = scmp.lt.s32.totalorder %s22, 1
      %s383 = scalar_select %p382, %s22, 1
      %p384 = scmp.lt.s32.totalorder %s381, 15
      %s385 = scalar_select %p384, %s381, 15
      %s386 = smul.addr %s385, 2
      %s387 = smul.addr %s383, 32
      %s388 = sadd.s32 %s386, %s387
      %s389 = smul.addr %s388, 8
      %s390 = scalar_lea.vmem %s7, %s389
      %s391 = smul.u32 8, %s23
      %p392 = scmp.lt.s32.totalorder %s22, 1
      %s393 = scalar_select %p392, %s22, 1
      %p394 = scmp.lt.s32.totalorder %s391, 15
      %s395 = scalar_select %p394, %s391, 15
      %s396 = smul.addr %s395, 2
      %s397 = smul.addr %s393, 32
      %s398 = sadd.s32 %s396, %s397
      %s399 = smul.addr %s398, 8
      %s400 = scalar_lea.vmem %s0, %s399
      %s401 = smul.u32 8, %s23
      %s402 = smul.u32 %s23, 8
      %s403 = ssub.s32 %s402, 1
      %p404 = scmp.gt.s32.totalorder %s403, 0
      %s405 = scalar_select %p404, %s403, 0
      %p406 = scmp.lt.s32.totalorder %s22, 1
      %s407 = scalar_select %p406, %s22, 1
      %p408 = scmp.lt.s32.totalorder %s405, 15
      %s409 = scalar_select %p408, %s405, 15
      %s410 = smul.addr %s409, 2
      %s411 = smul.addr %s407, 32
      %s412 = sadd.s32 %s410, %s411
      %s413 = smul.addr %s412, 8
      %s414 = scalar_lea.vmem %s1, %s413
      %s415 = smul.u32 %s23, 8
      %s416 = ssub.s32 %s415, 1
      %p417 = scmp.gt.s32.totalorder %s416, 0
      %s418 = scalar_select %p417, %s416, 0
      %s419 = sadd.s32 %s23, 1
      %s420 = smul.u32 %s419, 8
      %p421 = scmp.lt.s32.totalorder %s420, 15
      %s422 = scalar_select %p421, %s420, 15
      %p423 = scmp.lt.s32.totalorder %s22, 1
      %s424 = scalar_select %p423, %s22, 1
      %p425 = scmp.lt.s32.totalorder %s422, 15
      %s426 = scalar_select %p425, %s422, 15
      %s427 = smul.addr %s426, 2
      %s428 = smul.addr %s424, 32
      %s429 = sadd.s32 %s427, %s428
      %s430 = smul.addr %s429, 8
      %s431 = scalar_lea.vmem %s2, %s430
      %s432 = sadd.s32 %s23, 1
      %s433 = smul.u32 %s432, 8
      %p434 = scmp.lt.s32.totalorder %s433, 15
      %s435 = scalar_select %p434, %s433, 15
      %s436 = smul.u32 8, %s23
      %p437 = scmp.lt.s32.totalorder %s22, 1
      %s438 = scalar_select %p437, %s22, 1
      %p439 = scmp.lt.s32.totalorder %s436, 15
      %s440 = scalar_select %p439, %s436, 15
      %s441 = smul.addr %s440, 2
      %s442 = smul.addr %s438, 32
      %s443 = sadd.s32 %s441, %s442
      %s444 = smul.addr %s443, 8
      %s445 = scalar_lea.vmem %s7, %s444
      %s446 = smul.u32 8, %s23
      %vm448 = vcmask 24576
      %449 = vst.msk [vmem:[#allocation2] sm:$0x1] %vm448, 0.0
      %450 = vst.msk [vmem:[#allocation2 + $0x18] sm:$0x1] %vm448, 0.0
      %451 = vst.msk [vmem:[#allocation2 + $0x30] sm:$0x1] %vm448, 0.0
      %452 = vst.msk [vmem:[#allocation2 + $0x48] sm:$0x1] %vm448, 0.0
      %453 = vst.msk [vmem:[#allocation2 + $0x60] sm:$0x1] %vm448, 0.0
      %454 = vst.msk [vmem:[#allocation2 + $0x78] sm:$0x1] %vm448, 0.0
      %455 = vst.msk [vmem:[#allocation2 + $0x90] sm:$0x1] %vm448, 0.0
      %456 = vst.msk [vmem:[#allocation2 + $0xa8] sm:$0x1] %vm448, 0.0
      %457 = vst.msk [vmem:[#allocation2 + $0xc0] sm:$0x1] %vm448, 0.0
      %458 = vst.msk [vmem:[#allocation2 + $0xd8] sm:$0x1] %vm448, 0.0
      %459 = vst.msk [vmem:[#allocation2 + $0x11] sm:$0x1] %vm448, 0.0
      %460 = vst.msk [vmem:[#allocation2 + $0x29] sm:$0x1] %vm448, 0.0
      %461 = vst.msk [vmem:[#allocation2 + $0x41] sm:$0x1] %vm448, 0.0
      %462 = vst.msk [vmem:[#allocation2 + $0x59] sm:$0x1] %vm448, 0.0
      %463 = vst.msk [vmem:[#allocation2 + $0x71] sm:$0x1] %vm448, 0.0
      %464 = vst.msk [vmem:[#allocation2 + $0x89] sm:$0x1] %vm448, 0.0
      %465 = vst.msk [vmem:[#allocation2 + $0xa1] sm:$0x1] %vm448, 0.0
      %466 = vst.msk [vmem:[#allocation2 + $0xb9] sm:$0x1] %vm448, 0.0
      %467 = vst.msk [vmem:[#allocation2 + $0xd1] sm:$0x1] %vm448, 0.0
      %468 = vst.msk [vmem:[#allocation2 + $0xe9] sm:$0x1] %vm448, 0.0
      %v469 = vld [vmem:[%s400] sm:$0xff]
      %v470 = vld [vmem:[%s400 + $0x8] sm:$0xff]
      %v471 = vld [vmem:[%s400 + $0x10] sm:$0xff]
      %v472 = vld [vmem:[%s400 + $0x18] sm:$0xff]
      %v473 = vld [vmem:[%s400 + $0x20] sm:$0xff]
      %v474 = vld [vmem:[%s400 + $0x28] sm:$0xff]
      %v475 = vld [vmem:[%s400 + $0x30] sm:$0xff]
      %v476 = vld [vmem:[%s400 + $0x38] sm:$0xff]
      %v477 = vld [vmem:[%s400 + $0x40] sm:$0xff]
      %v478 = vld [vmem:[%s400 + $0x48] sm:$0xff]
      %v479 = vld [vmem:[%s400 + $0x50] sm:$0xff]
      %v480 = vld [vmem:[%s400 + $0x58] sm:$0xff]
      %v481 = vld [vmem:[%s400 + $0x60] sm:$0xff]
      %v482 = vld [vmem:[%s400 + $0x68] sm:$0xff]
      %v483 = vld [vmem:[%s400 + $0x70] sm:$0xff]
      %v484 = vld [vmem:[%s400 + $0x78] sm:$0xff]
      %v485 = vld [vmem:[%s3] sm:$0x1]
      %v487 = vlaneseq
      %v488 = vshrl.u32 %v487, 7
      %v489 = vsub.s32 0, %v488
      %v490 = vrot.slane %v485, %v489
      %v492 = vmul.f32 %v469, %v490
      %v493 = vmul.f32 %v470, %v490
      %v494 = vmul.f32 %v471, %v490
      %v495 = vmul.f32 %v472, %v490
      %v496 = vmul.f32 %v473, %v490
      %v497 = vmul.f32 %v474, %v490
      %v498 = vmul.f32 %v475, %v490
      %v499 = vmul.f32 %v476, %v490
      %v500 = vmul.f32 %v477, %v490
      %v501 = vmul.f32 %v478, %v490
      %v502 = vmul.f32 %v479, %v490
      %v503 = vmul.f32 %v480, %v490
      %v504 = vmul.f32 %v481, %v490
      %v505 = vmul.f32 %v482, %v490
      %v506 = vmul.f32 %v483, %v490
      %v507 = vmul.f32 %v484, %v490
      %v508 = vld [vmem:[%s4] sm:$0x1]
      %v510 = vlaneseq
      %v511 = vshrl.u32 %v510, 7
      %v512 = vsub.s32 0, %v511
      %v513 = vrot.slane %v508, %v512
      %v515 = vadd.f32 %v492, %v513
      %v516 = vadd.f32 %v493, %v513
      %v517 = vadd.f32 %v494, %v513
      %v518 = vadd.f32 %v495, %v513
      %v519 = vadd.f32 %v496, %v513
      %v520 = vadd.f32 %v497, %v513
      %v521 = vadd.f32 %v498, %v513
      %v522 = vadd.f32 %v499, %v513
      %v523 = vadd.f32 %v500, %v513
      %v524 = vadd.f32 %v501, %v513
      %v525 = vadd.f32 %v502, %v513
      %v526 = vadd.f32 %v503, %v513
      %v527 = vadd.f32 %v504, %v513
      %v528 = vadd.f32 %v505, %v513
      %v529 = vadd.f32 %v506, %v513
      %v530 = vadd.f32 %v507, %v513
      %v531 = vmax.f32 %v515, 0.0
      %v532 = vmax.f32 %v516, 0.0
      %v533 = vmax.f32 %v517, 0.0
      %v534 = vmax.f32 %v518, 0.0
      %v535 = vmax.f32 %v519, 0.0
      %v536 = vmax.f32 %v520, 0.0
      %v537 = vmax.f32 %v521, 0.0
      %v538 = vmax.f32 %v522, 0.0
      %v539 = vmax.f32 %v523, 0.0
      %v540 = vmax.f32 %v524, 0.0
      %v541 = vmax.f32 %v525, 0.0
      %v542 = vmax.f32 %v526, 0.0
      %v543 = vmax.f32 %v527, 0.0
      %v544 = vmax.f32 %v528, 0.0
      %v545 = vmax.f32 %v529, 0.0
      %v546 = vmax.f32 %v530, 0.0
      %s547 = scalar_lea.vmem [#allocation2], 24
      %vm548 = vcmask 31744
      %549 = vst.msk [vmem:[%s547 + $0x1] sm:$0xff] %vm548, %v531
      %550 = vst.msk [vmem:[%s547 + $0x9] sm:$0xff] %vm548, %v532
      %551 = vst.msk [vmem:[%s547 + $0x19] sm:$0xff] %vm548, %v533
      %552 = vst.msk [vmem:[%s547 + $0x21] sm:$0xff] %vm548, %v534
      %553 = vst.msk [vmem:[%s547 + $0x31] sm:$0xff] %vm548, %v535
      %554 = vst.msk [vmem:[%s547 + $0x39] sm:$0xff] %vm548, %v536
      %555 = vst.msk [vmem:[%s547 + $0x49] sm:$0xff] %vm548, %v537
      %556 = vst.msk [vmem:[%s547 + $0x51] sm:$0xff] %vm548, %v538
      %557 = vst.msk [vmem:[%s547 + $0x61] sm:$0xff] %vm548, %v539
      %558 = vst.msk [vmem:[%s547 + $0x69] sm:$0xff] %vm548, %v540
      %559 = vst.msk [vmem:[%s547 + $0x79] sm:$0xff] %vm548, %v541
      %560 = vst.msk [vmem:[%s547 + $0x81] sm:$0xff] %vm548, %v542
      %561 = vst.msk [vmem:[%s547 + $0x91] sm:$0xff] %vm548, %v543
      %562 = vst.msk [vmem:[%s547 + $0x99] sm:$0xff] %vm548, %v544
      %563 = vst.msk [vmem:[%s547 + $0xa9] sm:$0xff] %vm548, %v545
      %564 = vst.msk [vmem:[%s547 + $0xb1] sm:$0xff] %vm548, %v546
      %p565 = scmp.gt.s32.totalorder %s23, 0
      %v566 = vld [vmem:[%s414] sm:$0xff]
      %v567 = vld [vmem:[%s414 + $0x8] sm:$0xff]
      %v568 = vld [vmem:[%s3] sm:$0x1]
      %v570 = vlaneseq
      %v571 = vshrl.u32 %v570, 7
      %v572 = vsub.s32 0, %v571
      %v573 = vrot.slane %v568, %v572
      %v575 = vmul.f32 %v566, %v573
      %v576 = vmul.f32 %v567, %v573
      %v577 = vld [vmem:[%s4] sm:$0x1]
      %v579 = vlaneseq
      %v580 = vshrl.u32 %v579, 7
      %v581 = vsub.s32 0, %v580
      %v582 = vrot.slane %v577, %v581
      %v584 = vadd.f32 %v575, %v582
      %v585 = vadd.f32 %v576, %v582
      %v586 = vmax.f32 %v584, 0.0
      %v587 = vmax.f32 %v585, 0.0
      %s588 = scalar_select %p565, 1, 0
      %v589 = vstv %s588
      %vm590 = vcmp.eq.s32.totalorder %v589, 1
      %v591 = vsel %vm590, %v586, 0.0
      %v592 = vsel %vm590, %v587, 0.0
      %593 = vst.msk [vmem:[#allocation2 + $0x1] sm:$0xff] %vm548, %v591
      %594 = vst.msk [vmem:[#allocation2 + $0x9] sm:$0xff] %vm548, %v592
      %p595 = scmp.lt.s32.totalorder %s23, 1
      %v596 = vld [vmem:[%s431] sm:$0xff]
      %v597 = vld [vmem:[%s431 + $0x8] sm:$0xff]
      %v598 = vld [vmem:[%s3] sm:$0x1]
      %v600 = vlaneseq
      %v601 = vshrl.u32 %v600, 7
      %v602 = vsub.s32 0, %v601
      %v603 = vrot.slane %v598, %v602
      %v605 = vmul.f32 %v596, %v603
      %v606 = vmul.f32 %v597, %v603
      %v607 = vld [vmem:[%s4] sm:$0x1]
      %v609 = vlaneseq
      %v610 = vshrl.u32 %v609, 7
      %v611 = vsub.s32 0, %v610
      %v612 = vrot.slane %v607, %v611
      %v614 = vadd.f32 %v605, %v612
      %v615 = vadd.f32 %v606, %v612
      %v616 = vmax.f32 %v614, 0.0
      %v617 = vmax.f32 %v615, 0.0
      %s618 = scalar_select %p595, 1, 0
      %v619 = vstv %s618
      %vm620 = vcmp.eq.s32.totalorder %v619, 1
      %v621 = vsel %vm620, %v616, 0.0
      %v622 = vsel %vm620, %v617, 0.0
      %s623 = scalar_lea.vmem [#allocation2], 216
      %624 = vst.msk [vmem:[%s623 + $0x1] sm:$0xff] %vm548, %v621
      %625 = vst.msk [vmem:[%s623 + $0x9] sm:$0xff] %vm548, %v622
      %v626 = vld [vmem:[#allocation2] sm:$0xff]
      %v627 = vld [vmem:[#allocation2 + $0x8] sm:$0xff]
      %v628 = vld [vmem:[#allocation2 + $0x18] sm:$0xff]
      %v629 = vld [vmem:[#allocation2 + $0x20] sm:$0xff]
      %v630 = vld [vmem:[#allocation2 + $0x30] sm:$0xff]
      %v631 = vld [vmem:[#allocation2 + $0x38] sm:$0xff]
      %v632 = vld [vmem:[#allocation2 + $0x48] sm:$0xff]
      %v633 = vld [vmem:[#allocation2 + $0x50] sm:$0xff]
      %v634 = vld [vmem:[#allocation2 + $0x60] sm:$0xff]
      %v635 = vld [vmem:[#allocation2 + $0x68] sm:$0xff]
      %v636 = vld [vmem:[#allocation2 + $0x78] sm:$0xff]
      %v637 = vld [vmem:[#allocation2 + $0x80] sm:$0xff]
      %v638 = vld [vmem:[#allocation2 + $0x90] sm:$0xff]
      %v639 = vld [vmem:[#allocation2 + $0x98] sm:$0xff]
      %v640 = vld [vmem:[#allocation2 + $0xa8] sm:$0xff]
      %v641 = vld [vmem:[#allocation2 + $0xb0] sm:$0xff]
      %v642 = vld [vmem:[#allocation2 + $0x1] sm:$0xff]
      %v643 = vld [vmem:[#allocation2 + $0x9] sm:$0xff]
      %v644 = vld [vmem:[#allocation2 + $0x19] sm:$0xff]
      %v645 = vld [vmem:[#allocation2 + $0x21] sm:$0xff]
      %v646 = vld [vmem:[#allocation2 + $0x31] sm:$0xff]
      %v647 = vld [vmem:[#allocation2 + $0x39] sm:$0xff]
      %v648 = vld [vmem:[#allocation2 + $0x49] sm:$0xff]
      %v649 = vld [vmem:[#allocation2 + $0x51] sm:$0xff]
      %v650 = vld [vmem:[#allocation2 + $0x61] sm:$0xff]
      %v651 = vld [vmem:[#allocation2 + $0x69] sm:$0xff]
      %v652 = vld [vmem:[#allocation2 + $0x79] sm:$0xff]
      %v653 = vld [vmem:[#allocation2 + $0x81] sm:$0xff]
      %v654 = vld [vmem:[#allocation2 + $0x91] sm:$0xff]
      %v655 = vld [vmem:[#allocation2 + $0x99] sm:$0xff]
      %v656 = vld [vmem:[#allocation2 + $0xa9] sm:$0xff]
      %v657 = vld [vmem:[#allocation2 + $0xb1] sm:$0xff]
      %v658 = vld [vmem:[#allocation2 + $0x2] sm:$0xff]
      %v659 = vld [vmem:[#allocation2 + $0xa] sm:$0xff]
      %v660 = vld [vmem:[#allocation2 + $0x1a] sm:$0xff]
      %v661 = vld [vmem:[#allocation2 + $0x22] sm:$0xff]
      %v662 = vld [vmem:[#allocation2 + $0x32] sm:$0xff]
      %v663 = vld [vmem:[#allocation2 + $0x3a] sm:$0xff]
      %v664 = vld [vmem:[#allocation2 + $0x4a] sm:$0xff]
      %v665 = vld [vmem:[#allocation2 + $0x52] sm:$0xff]
      %v666 = vld [vmem:[#allocation2 + $0x62] sm:$0xff]
      %v667 = vld [vmem:[#allocation2 + $0x6a] sm:$0xff]
      %v668 = vld [vmem:[#allocation2 + $0x7a] sm:$0xff]
      %v669 = vld [vmem:[#allocation2 + $0x82] sm:$0xff]
      %v670 = vld [vmem:[#allocation2 + $0x92] sm:$0xff]
      %v671 = vld [vmem:[#allocation2 + $0x9a] sm:$0xff]
      %v672 = vld [vmem:[#allocation2 + $0xaa] sm:$0xff]
      %v673 = vld [vmem:[#allocation2 + $0xb2] sm:$0xff]
      %690 = vrot.lane.b32.xlu0 %v642, 4
      %v691 = vpop.permute.xlu0 %690
      %692 = vrot.lane.b32.xlu0 %v643, 4
      %v693 = vpop.permute.xlu0 %692
      %694 = vrot.lane.b32.xlu0 %v644, 4
      %v695 = vpop.permute.xlu0 %694
      %696 = vrot.lane.b32.xlu0 %v645, 4
      %v697 = vpop.permute.xlu0 %696
      %698 = vrot.lane.b32.xlu0 %v646, 4
      %v699 = vpop.permute.xlu0 %698
      %700 = vrot.lane.b32.xlu0 %v647, 4
      %v701 = vpop.permute.xlu0 %700
      %702 = vrot.lane.b32.xlu0 %v648, 4
      %v703 = vpop.permute.xlu0 %702
      %704 = vrot.lane.b32.xlu0 %v649, 4
      %v705 = vpop.permute.xlu0 %704
      %706 = vrot.lane.b32.xlu0 %v650, 4
      %v707 = vpop.permute.xlu0 %706
      %708 = vrot.lane.b32.xlu0 %v651, 4
      %v709 = vpop.permute.xlu0 %708
      %710 = vrot.lane.b32.xlu0 %v652, 4
      %v711 = vpop.permute.xlu0 %710
      %712 = vrot.lane.b32.xlu0 %v653, 4
      %v713 = vpop.permute.xlu0 %712
      %714 = vrot.lane.b32.xlu0 %v654, 4
      %v715 = vpop.permute.xlu0 %714
      %716 = vrot.lane.b32.xlu0 %v655, 4
      %v717 = vpop.permute.xlu0 %716
      %718 = vrot.lane.b32.xlu0 %v656, 4
      %v719 = vpop.permute.xlu0 %718
      %720 = vrot.lane.b32.xlu0 %v657, 4
      %v721 = vpop.permute.xlu0 %720
      %754 = vrot.lane.b32.xlu0 %v658, 8
      %v755 = vpop.permute.xlu0 %754
      %756 = vrot.lane.b32.xlu0 %v659, 8
      %v757 = vpop.permute.xlu0 %756
      %758 = vrot.lane.b32.xlu0 %v660, 8
      %v759 = vpop.permute.xlu0 %758
      %760 = vrot.lane.b32.xlu0 %v661, 8
      %v761 = vpop.permute.xlu0 %760
      %762 = vrot.lane.b32.xlu0 %v662, 8
      %v763 = vpop.permute.xlu0 %762
      %764 = vrot.lane.b32.xlu0 %v663, 8
      %v765 = vpop.permute.xlu0 %764
      %766 = vrot.lane.b32.xlu0 %v664, 8
      %v767 = vpop.permute.xlu0 %766
      %768 = vrot.lane.b32.xlu0 %v665, 8
      %v769 = vpop.permute.xlu0 %768
      %770 = vrot.lane.b32.xlu0 %v666, 8
      %v771 = vpop.permute.xlu0 %770
      %772 = vrot.lane.b32.xlu0 %v667, 8
      %v773 = vpop.permute.xlu0 %772
      %774 = vrot.lane.b32.xlu0 %v668, 8
      %v775 = vpop.permute.xlu0 %774
      %776 = vrot.lane.b32.xlu0 %v669, 8
      %v777 = vpop.permute.xlu0 %776
      %778 = vrot.lane.b32.xlu0 %v670, 8
      %v779 = vpop.permute.xlu0 %778
      %780 = vrot.lane.b32.xlu0 %v671, 8
      %v781 = vpop.permute.xlu0 %780
      %782 = vrot.lane.b32.xlu0 %v672, 8
      %v783 = vpop.permute.xlu0 %782
      %784 = vrot.lane.b32.xlu0 %v673, 8
      %v785 = vpop.permute.xlu0 %784
      %v802 = vsel %vm548, %v626, %v691
      %v803 = vsel %vm548, %v627, %v693
      %v804 = vsel %vm548, %v628, %v695
      %v805 = vsel %vm548, %v629, %v697
      %v806 = vsel %vm548, %v630, %v699
      %v807 = vsel %vm548, %v631, %v701
      %v808 = vsel %vm548, %v632, %v703
      %v809 = vsel %vm548, %v633, %v705
      %v810 = vsel %vm548, %v634, %v707
      %v811 = vsel %vm548, %v635, %v709
      %v812 = vsel %vm548, %v636, %v711
      %v813 = vsel %vm548, %v637, %v713
      %v814 = vsel %vm548, %v638, %v715
      %v815 = vsel %vm548, %v639, %v717
      %v816 = vsel %vm548, %v640, %v719
      %v817 = vsel %vm548, %v641, %v721
      %vm818 = vcmask 64512
      %v819 = vsel %vm818, %v802, %v755
      %v820 = vsel %vm818, %v803, %v757
      %v821 = vsel %vm818, %v804, %v759
      %v822 = vsel %vm818, %v805, %v761
      %v823 = vsel %vm818, %v806, %v763
      %v824 = vsel %vm818, %v807, %v765
      %v825 = vsel %vm818, %v808, %v767
      %v826 = vsel %vm818, %v809, %v769
      %v827 = vsel %vm818, %v810, %v771
      %v828 = vsel %vm818, %v811, %v773
      %v829 = vsel %vm818, %v812, %v775
      %v830 = vsel %vm818, %v813, %v777
      %v831 = vsel %vm818, %v814, %v779
      %v832 = vsel %vm818, %v815, %v781
      %v833 = vsel %vm818, %v816, %v783
      %v834 = vsel %vm818, %v817, %v785
      %v835 = vpack.c.bf16 %v820, %v819
      %v836 = vpack.c.bf16 %v822, %v821
      %v837 = vpack.c.bf16 %v824, %v823
      %v838 = vpack.c.bf16 %v826, %v825
      %v839 = vpack.c.bf16 %v828, %v827
      %v840 = vpack.c.bf16 %v830, %v829
      %v841 = vpack.c.bf16 %v832, %v831
      %v842 = vpack.c.bf16 %v834, %v833
      %v843 = vld [vmem:[%s5] sm:$0xf]
      %v844 = vld [vmem:[%s5 + $0x4] sm:$0x3]
      %v845 = vld [vmem:[%s547] sm:$0xff]
      %v846 = vld [vmem:[%s547 + $0x8] sm:$0xff]
      %v847 = vld [vmem:[%s547 + $0x18] sm:$0xff]
      %v848 = vld [vmem:[%s547 + $0x20] sm:$0xff]
      %v849 = vld [vmem:[%s547 + $0x30] sm:$0xff]
      %v850 = vld [vmem:[%s547 + $0x38] sm:$0xff]
      %v851 = vld [vmem:[%s547 + $0x48] sm:$0xff]
      %v852 = vld [vmem:[%s547 + $0x50] sm:$0xff]
      %v853 = vld [vmem:[%s547 + $0x60] sm:$0xff]
      %v854 = vld [vmem:[%s547 + $0x68] sm:$0xff]
      %v855 = vld [vmem:[%s547 + $0x78] sm:$0xff]
      %v856 = vld [vmem:[%s547 + $0x80] sm:$0xff]
      %v857 = vld [vmem:[%s547 + $0x90] sm:$0xff]
      %v858 = vld [vmem:[%s547 + $0x98] sm:$0xff]
      %v859 = vld [vmem:[%s547 + $0xa8] sm:$0xff]
      %v860 = vld [vmem:[%s547 + $0xb0] sm:$0xff]
      %v861 = vld [vmem:[%s547 + $0x1] sm:$0xff]
      %v862 = vld [vmem:[%s547 + $0x9] sm:$0xff]
      %v863 = vld [vmem:[%s547 + $0x19] sm:$0xff]
      %v864 = vld [vmem:[%s547 + $0x21] sm:$0xff]
      %v865 = vld [vmem:[%s547 + $0x31] sm:$0xff]
      %v866 = vld [vmem:[%s547 + $0x39] sm:$0xff]
      %v867 = vld [vmem:[%s547 + $0x49] sm:$0xff]
      %v868 = vld [vmem:[%s547 + $0x51] sm:$0xff]
      %v869 = vld [vmem:[%s547 + $0x61] sm:$0xff]
      %v870 = vld [vmem:[%s547 + $0x69] sm:$0xff]
      %v871 = vld [vmem:[%s547 + $0x79] sm:$0xff]
      %v872 = vld [vmem:[%s547 + $0x81] sm:$0xff]
      %v873 = vld [vmem:[%s547 + $0x91] sm:$0xff]
      %v874 = vld [vmem:[%s547 + $0x99] sm:$0xff]
      %v875 = vld [vmem:[%s547 + $0xa9] sm:$0xff]
      %v876 = vld [vmem:[%s547 + $0xb1] sm:$0xff]
      %v877 = vld [vmem:[%s547 + $0x2] sm:$0xff]
      %v878 = vld [vmem:[%s547 + $0xa] sm:$0xff]
      %v879 = vld [vmem:[%s547 + $0x1a] sm:$0xff]
      %v880 = vld [vmem:[%s547 + $0x22] sm:$0xff]
      %v881 = vld [vmem:[%s547 + $0x32] sm:$0xff]
      %v882 = vld [vmem:[%s547 + $0x3a] sm:$0xff]
      %v883 = vld [vmem:[%s547 + $0x4a] sm:$0xff]
      %v884 = vld [vmem:[%s547 + $0x52] sm:$0xff]
      %v885 = vld [vmem:[%s547 + $0x62] sm:$0xff]
      %v886 = vld [vmem:[%s547 + $0x6a] sm:$0xff]
      %v887 = vld [vmem:[%s547 + $0x7a] sm:$0xff]
      %v888 = vld [vmem:[%s547 + $0x82] sm:$0xff]
      %v889 = vld [vmem:[%s547 + $0x92] sm:$0xff]
      %v890 = vld [vmem:[%s547 + $0x9a] sm:$0xff]
      %v891 = vld [vmem:[%s547 + $0xaa] sm:$0xff]
      %v892 = vld [vmem:[%s547 + $0xb2] sm:$0xff]
      %909 = vrot.lane.b32.xlu0 %v861, 4
      %v910 = vpop.permute.xlu0 %909
      %911 = vrot.lane.b32.xlu0 %v862, 4
      %v912 = vpop.permute.xlu0 %911
      %913 = vrot.lane.b32.xlu0 %v863, 4
      %v914 = vpop.permute.xlu0 %913
      %915 = vrot.lane.b32.xlu0 %v864, 4
      %v916 = vpop.permute.xlu0 %915
      %917 = vrot.lane.b32.xlu0 %v865, 4
      %v918 = vpop.permute.xlu0 %917
      %919 = vrot.lane.b32.xlu0 %v866, 4
      %v920 = vpop.permute.xlu0 %919
      %921 = vrot.lane.b32.xlu0 %v867, 4
      %v922 = vpop.permute.xlu0 %921
      %923 = vrot.lane.b32.xlu0 %v868, 4
      %v924 = vpop.permute.xlu0 %923
      %925 = vrot.lane.b32.xlu0 %v869, 4
      %v926 = vpop.permute.xlu0 %925
      %927 = vrot.lane.b32.xlu0 %v870, 4
      %v928 = vpop.permute.xlu0 %927
      %929 = vrot.lane.b32.xlu0 %v871, 4
      %v930 = vpop.permute.xlu0 %929
      %931 = vrot.lane.b32.xlu0 %v872, 4
      %v932 = vpop.permute.xlu0 %931
      %933 = vrot.lane.b32.xlu0 %v873, 4
      %v934 = vpop.permute.xlu0 %933
      %935 = vrot.lane.b32.xlu0 %v874, 4
      %v936 = vpop.permute.xlu0 %935
      %937 = vrot.lane.b32.xlu0 %v875, 4
      %v938 = vpop.permute.xlu0 %937
      %939 = vrot.lane.b32.xlu0 %v876, 4
      %v940 = vpop.permute.xlu0 %939
      %973 = vrot.lane.b32.xlu0 %v877, 8
      %v974 = vpop.permute.xlu0 %973
      %975 = vrot.lane.b32.xlu0 %v878, 8
      %v976 = vpop.permute.xlu0 %975
      %977 = vrot.lane.b32.xlu0 %v879, 8
      %v978 = vpop.permute.xlu0 %977
      %979 = vrot.lane.b32.xlu0 %v880, 8
      %v980 = vpop.permute.xlu0 %979
      %981 = vrot.lane.b32.xlu0 %v881, 8
      %v982 = vpop.permute.xlu0 %981
      %983 = vrot.lane.b32.xlu0 %v882, 8
      %v984 = vpop.permute.xlu0 %983
      %985 = vrot.lane.b32.xlu0 %v883, 8
      %v986 = vpop.permute.xlu0 %985
      %987 = vrot.lane.b32.xlu0 %v884, 8
      %v988 = vpop.permute.xlu0 %987
      %989 = vrot.lane.b32.xlu0 %v885, 8
      %v990 = vpop.permute.xlu0 %989
      %991 = vrot.lane.b32.xlu0 %v886, 8
      %v992 = vpop.permute.xlu0 %991
      %993 = vrot.lane.b32.xlu0 %v887, 8
      %v994 = vpop.permute.xlu0 %993
      %995 = vrot.lane.b32.xlu0 %v888, 8
      %v996 = vpop.permute.xlu0 %995
      %997 = vrot.lane.b32.xlu0 %v889, 8
      %v998 = vpop.permute.xlu0 %997
      %999 = vrot.lane.b32.xlu0 %v890, 8
      %v1000 = vpop.permute.xlu0 %999
      %1001 = vrot.lane.b32.xlu0 %v891, 8
      %v1002 = vpop.permute.xlu0 %1001
      %1003 = vrot.lane.b32.xlu0 %v892, 8
      %v1004 = vpop.permute.xlu0 %1003
      %v1021 = vsel %vm548, %v845, %v910
      %v1022 = vsel %vm548, %v846, %v912
      %v1023 = vsel %vm548, %v847, %v914
      %v1024 = vsel %vm548, %v848, %v916
      %v1025 = vsel %vm548, %v849, %v918
      %v1026 = vsel %vm548, %v850, %v920
      %v1027 = vsel %vm548, %v851, %v922
      %v1028 = vsel %vm548, %v852, %v924
      %v1029 = vsel %vm548, %v853, %v926
      %v1030 = vsel %vm548, %v854, %v928
      %v1031 = vsel %vm548, %v855, %v930
      %v1032 = vsel %vm548, %v856, %v932
      %v1033 = vsel %vm548, %v857, %v934
      %v1034 = vsel %vm548, %v858, %v936
      %v1035 = vsel %vm548, %v859, %v938
      %v1036 = vsel %vm548, %v860, %v940
      %v1037 = vsel %vm818, %v1021, %v974
      %v1038 = vsel %vm818, %v1022, %v976
      %v1039 = vsel %vm818, %v1023, %v978
      %v1040 = vsel %vm818, %v1024, %v980
      %v1041 = vsel %vm818, %v1025, %v982
      %v1042 = vsel %vm818, %v1026, %v984
      %v1043 = vsel %vm818, %v1027, %v986
      %v1044 = vsel %vm818, %v1028, %v988
      %v1045 = vsel %vm818, %v1029, %v990
      %v1046 = vsel %vm818, %v1030, %v992
      %v1047 = vsel %vm818, %v1031, %v994
      %v1048 = vsel %vm818, %v1032, %v996
      %v1049 = vsel %vm818, %v1033, %v998
      %v1050 = vsel %vm818, %v1034, %v1000
      %v1051 = vsel %vm818, %v1035, %v1002
      %v1052 = vsel %vm818, %v1036, %v1004
      %v1053 = vpack.c.bf16 %v1038, %v1037
      %v1054 = vpack.c.bf16 %v1040, %v1039
      %v1055 = vpack.c.bf16 %v1042, %v1041
      %v1056 = vpack.c.bf16 %v1044, %v1043
      %v1057 = vpack.c.bf16 %v1046, %v1045
      %v1058 = vpack.c.bf16 %v1048, %v1047
      %v1059 = vpack.c.bf16 %v1050, %v1049
      %v1060 = vpack.c.bf16 %v1052, %v1051
      %s1061 = scalar_lea.vmem %s5, 8
      %v1062 = vld [vmem:[%s1061] sm:$0xf]
      %v1063 = vld [vmem:[%s1061 + $0x4] sm:$0x3]
      %v1066 = vunpack.c.l.b16 %v1062
      %v1067 = vunpack.c.l.b16 %v1063
      %v1068 = vpack.c.b16 %v1067, %v1066
      %vm1069 = vcmask 97280
      %v1071 = vsel %vm1069, %v1053, 0
      %v1074 = vsel %vm1069, %v1054, 0
      %v1077 = vsel %vm1069, %v1055, 0
      %v1080 = vsel %vm1069, %v1056, 0
      %v1083 = vsel %vm1069, %v1057, 0
      %v1086 = vsel %vm1069, %v1058, 0
      %v1089 = vsel %vm1069, %v1059, 0
      %v1092 = vsel %vm1069, %v1060, 0
      %vm1094 = vcmask 1045504
      %v1096 = vsel %vm1094, %v1068, 0
      %1098 = vmatprep.subr.bf16.mxu0 0
      %1099 = vmatpush1.bf16.msra.mxu0 %v1096
      %1100 = vmatprep.subr.bf16.mxu0 0
      %1101 = vmatpush1.bf16.msra.mxu0 0
      %1102 = vmatprep.subr.bf16.mxu0 0
      %1103 = vmatpush1.bf16.msra.mxu0 0
      %1104 = vmatprep.subr.bf16.mxu0 0
      %1105 = vmatpush1.bf16.msra.mxu0 0
      %1106 = vmatprep.subr.bf16.mxu0 0
      %1107 = vmatpush1.bf16.msra.mxu0 0
      %1108 = vmatprep.subr.bf16.mxu0 0
      %1109 = vmatpush1.bf16.msra.mxu0 0
      %1110 = vmatprep.subr.bf16.mxu0 0
      %1111 = vmatpush1.bf16.msra.mxu0 0
      %1112 = vmatprep.subr.bf16.mxu0 0
      %1113 = vmatpush1.bf16.msra.mxu0 0
      %1114 = vmatprep.subr.bf16.mxu0 0
      %1115 = vmatpush1.bf16.msra.mxu0 0
      %1116 = vmatprep.subr.bf16.mxu0 0
      %1117 = vmatpush1.bf16.msra.mxu0 0
      %1118 = vmatprep.subr.bf16.mxu0 0
      %1119 = vmatpush1.bf16.msra.mxu0 0
      %1120 = vmatprep.subr.bf16.mxu0 0
      %1121 = vmatpush1.bf16.msra.mxu0 0
      %1122 = vmatprep.subr.bf16.mxu0 0
      %1123 = vmatpush1.bf16.msra.mxu0 0
      %1124 = vmatprep.subr.bf16.mxu0 0
      %1125 = vmatpush1.bf16.msra.mxu0 0
      %1126 = vmatprep.subr.bf16.mxu0 0
      %1127 = vmatpush1.bf16.msra.mxu0 0
      %1128 = vmatprep.subr.bf16.mxu0 0
      %1129 = vmatpush1.bf16.msra.mxu0 0
      %1130 = vmatprep.mubr.bf16.mxu0 0
      %1131 = vmatmul.mubr.bf16.gmra.mrb[0].mxu0 %v1071
      %v1132 = vpop.f32.mrb[0].mxu0
      %v1133 = vadd.f32 0.0, %v1132
      %v1134 = vpop.f32.mrb[0].mxu0
      %v1135 = vpop.f32.mrb[0].mxu0
      %v1136 = vadd.f32 0.0, %v1135
      %v1137 = vpop.f32.mrb[0].mxu0
      %1138 = vmatprep.mubr.bf16.mxu0 0
      %1139 = vmatmul.mubr.bf16.gmra.mrb[0].mxu0 %v1074
      %v1140 = vpop.f32.mrb[0].mxu0
      %v1141 = vadd.f32 0.0, %v1140
      %v1142 = vpop.f32.mrb[0].mxu0
      %v1143 = vpop.f32.mrb[0].mxu0
      %v1144 = vadd.f32 0.0, %v1143
      %v1145 = vpop.f32.mrb[0].mxu0
      %1146 = vmatprep.mubr.bf16.mxu0 0
      %1147 = vmatmul.mubr.bf16.gmra.mrb[0].mxu0 %v1077
      %v1148 = vpop.f32.mrb[0].mxu0
      %v1149 = vadd.f32 0.0, %v1148
      %v1150 = vpop.f32.mrb[0].mxu0
      %v1151 = vpop.f32.mrb[0].mxu0
      %v1152 = vadd.f32 0.0, %v1151
      %v1153 = vpop.f32.mrb[0].mxu0
      %1154 = vmatprep.mubr.bf16.mxu0 0
      %1155 = vmatmul.mubr.bf16.gmra.mrb[0].mxu0 %v1080
      %v1156 = vpop.f32.mrb[0].mxu0
      %v1157 = vadd.f32 0.0, %v1156
      %v1158 = vpop.f32.mrb[0].mxu0
      %v1159 = vpop.f32.mrb[0].mxu0
      %v1160 = vadd.f32 0.0, %v1159
      %v1161 = vpop.f32.mrb[0].mxu0
      %1162 = vmatprep.mubr.bf16.mxu0 0
      %1163 = vmatmul.mubr.bf16.gmra.mrb[0].mxu0 %v1083
      %v1164 = vpop.f32.mrb[0].mxu0
      %v1165 = vadd.f32 0.0, %v1164
      %v1166 = vpop.f32.mrb[0].mxu0
      %v1167 = vpop.f32.mrb[0].mxu0
      %v1168 = vadd.f32 0.0, %v1167
      %v1169 = vpop.f32.mrb[0].mxu0
      %1170 = vmatprep.mubr.bf16.mxu0 0
      %1171 = vmatmul.mubr.bf16.gmra.mrb[0].mxu0 %v1086
      %v1172 = vpop.f32.mrb[0].mxu0
      %v1173 = vadd.f32 0.0, %v1172
      %v1174 = vpop.f32.mrb[0].mxu0
      %v1175 = vpop.f32.mrb[0].mxu0
      %v1176 = vadd.f32 0.0, %v1175
      %v1177 = vpop.f32.mrb[0].mxu0
      %1178 = vmatprep.mubr.bf16.mxu0 0
      %1179 = vmatmul.mubr.bf16.gmra.mrb[0].mxu0 %v1089
      %v1180 = vpop.f32.mrb[0].mxu0
      %v1181 = vadd.f32 0.0, %v1180
      %v1182 = vpop.f32.mrb[0].mxu0
      %v1183 = vpop.f32.mrb[0].mxu0
      %v1184 = vadd.f32 0.0, %v1183
      %v1185 = vpop.f32.mrb[0].mxu0
      %1186 = vmatprep.mubr.bf16.mxu0 0
      %1187 = vmatmul.mubr.bf16.gmra.mrb[0].mxu0 %v1092
      %v1188 = vpop.f32.mrb[0].mxu0
      %v1189 = vadd.f32 0.0, %v1188
      %v1190 = vpop.f32.mrb[0].mxu0
      %v1191 = vpop.f32.mrb[0].mxu0
      %v1192 = vadd.f32 0.0, %v1191
      %v1193 = vpop.f32.mrb[0].mxu0
      %1194 = vdwg.mxu0
      %v1197 = vunpack.c.l.b16 %v843
      %v1198 = vunpack.c.l.b16 %v844
      %v1199 = vpack.c.b16 %v1198, %v1197
      %v1201 = vsel %vm1069, %v835, 0
      %v1204 = vsel %vm1069, %v836, 0
      %v1207 = vsel %vm1069, %v837, 0
      %v1210 = vsel %vm1069, %v838, 0
      %v1213 = vsel %vm1069, %v839, 0
      %v1216 = vsel %vm1069, %v840, 0
      %v1219 = vsel %vm1069, %v841, 0
      %v1222 = vsel %vm1069, %v842, 0
      %v1225 = vsel %vm1094, %v1199, 0
      %1227 = vmatprep.subr.bf16.mxu0 0
      %1228 = vmatpush1.bf16.msra.mxu0 %v1225
      %1229 = vmatprep.subr.bf16.mxu0 0
      %1230 = vmatpush1.bf16.msra.mxu0 0
      %1231 = vmatprep.subr.bf16.mxu0 0
      %1232 = vmatpush1.bf16.msra.mxu0 0
      %1233 = vmatprep.subr.bf16.mxu0 0
      %1234 = vmatpush1.bf16.msra.mxu0 0
      %1235 = vmatprep.subr.bf16.mxu0 0
      %1236 = vmatpush1.bf16.msra.mxu0 0
      %1237 = vmatprep.subr.bf16.mxu0 0
      %1238 = vmatpush1.bf16.msra.mxu0 0
      %1239 = vmatprep.subr.bf16.mxu0 0
      %1240 = vmatpush1.bf16.msra.mxu0 0
      %1241 = vmatprep.subr.bf16.mxu0 0
      %1242 = vmatpush1.bf16.msra.mxu0 0
      %1243 = vmatprep.subr.bf16.mxu0 0
      %1244 = vmatpush1.bf16.msra.mxu0 0
      %1245 = vmatprep.subr.bf16.mxu0 0
      %1246 = vmatpush1.bf16.msra.mxu0 0
      %1247 = vmatprep.subr.bf16.mxu0 0
      %1248 = vmatpush1.bf16.msra.mxu0 0
      %1249 = vmatprep.subr.bf16.mxu0 0
      %1250 = vmatpush1.bf16.msra.mxu0 0
      %1251 = vmatprep.subr.bf16.mxu0 0
      %1252 = vmatpush1.bf16.msra.mxu0 0
      %1253 = vmatprep.subr.bf16.mxu0 0
      %1254 = vmatpush1.bf16.msra.mxu0 0
      %1255 = vmatprep.subr.bf16.mxu0 0
      %1256 = vmatpush1.bf16.msra.mxu0 0
      %1257 = vmatprep.subr.bf16.mxu0 0
      %1258 = vmatpush1.bf16.msra.mxu0 0
      %1259 = vmatprep.mubr.bf16.mxu0 0
      %1260 = vmatmul.mubr.bf16.gmra.mrb[0].mxu0 %v1201
      %v1261 = vpop.f32.mrb[0].mxu0
      %v1262 = vadd.f32 %v1133, %v1261
      %v1263 = vpop.f32.mrb[0].mxu0
      %v1264 = vpop.f32.mrb[0].mxu0
      %v1265 = vadd.f32 %v1136, %v1264
      %v1266 = vpop.f32.mrb[0].mxu0
      %1267 = vmatprep.mubr.bf16.mxu0 0
      %1268 = vmatmul.mubr.bf16.gmra.mrb[0].mxu0 %v1204
      %v1269 = vpop.f32.mrb[0].mxu0
      %v1270 = vadd.f32 %v1141, %v1269
      %v1271 = vpop.f32.mrb[0].mxu0
      %v1272 = vpop.f32.mrb[0].mxu0
      %v1273 = vadd.f32 %v1144, %v1272
      %v1274 = vpop.f32.mrb[0].mxu0
      %1275 = vmatprep.mubr.bf16.mxu0 0
      %1276 = vmatmul.mubr.bf16.gmra.mrb[0].mxu0 %v1207
      %v1277 = vpop.f32.mrb[0].mxu0
      %v1278 = vadd.f32 %v1149, %v1277
      %v1279 = vpop.f32.mrb[0].mxu0
      %v1280 = vpop.f32.mrb[0].mxu0
      %v1281 = vadd.f32 %v1152, %v1280
      %v1282 = vpop.f32.mrb[0].mxu0
      %1283 = vmatprep.mubr.bf16.mxu0 0
      %1284 = vmatmul.mubr.bf16.gmra.mrb[0].mxu0 %v1210
      %v1285 = vpop.f32.mrb[0].mxu0
      %v1286 = vadd.f32 %v1157, %v1285
      %v1287 = vpop.f32.mrb[0].mxu0
      %v1288 = vpop.f32.mrb[0].mxu0
      %v1289 = vadd.f32 %v1160, %v1288
      %v1290 = vpop.f32.mrb[0].mxu0
      %1291 = vmatprep.mubr.bf16.mxu0 0
      %1292 = vmatmul.mubr.bf16.gmra.mrb[0].mxu0 %v1213
      %v1293 = vpop.f32.mrb[0].mxu0
      %v1294 = vadd.f32 %v1165, %v1293
      %v1295 = vpop.f32.mrb[0].mxu0
      %v1296 = vpop.f32.mrb[0].mxu0
      %v1297 = vadd.f32 %v1168, %v1296
      %v1298 = vpop.f32.mrb[0].mxu0
      %1299 = vmatprep.mubr.bf16.mxu0 0
      %1300 = vmatmul.mubr.bf16.gmra.mrb[0].mxu0 %v1216
      %v1301 = vpop.f32.mrb[0].mxu0
      %v1302 = vadd.f32 %v1173, %v1301
      %v1303 = vpop.f32.mrb[0].mxu0
      %v1304 = vpop.f32.mrb[0].mxu0
      %v1305 = vadd.f32 %v1176, %v1304
      %v1306 = vpop.f32.mrb[0].mxu0
      %1307 = vmatprep.mubr.bf16.mxu0 0
      %1308 = vmatmul.mubr.bf16.gmra.mrb[0].mxu0 %v1219
      %v1309 = vpop.f32.mrb[0].mxu0
      %v1310 = vadd.f32 %v1181, %v1309
      %v1311 = vpop.f32.mrb[0].mxu0
      %v1312 = vpop.f32.mrb[0].mxu0
      %v1313 = vadd.f32 %v1184, %v1312
      %v1314 = vpop.f32.mrb[0].mxu0
      %1315 = vmatprep.mubr.bf16.mxu0 0
      %1316 = vmatmul.mubr.bf16.gmra.mrb[0].mxu0 %v1222
      %v1317 = vpop.f32.mrb[0].mxu0
      %v1318 = vadd.f32 %v1189, %v1317
      %v1319 = vpop.f32.mrb[0].mxu0
      %v1320 = vpop.f32.mrb[0].mxu0
      %v1321 = vadd.f32 %v1192, %v1320
      %v1322 = vpop.f32.mrb[0].mxu0
      %1323 = vdwg.mxu0
      %s1324 = scalar_lea.vmem [#allocation2], 48
      %v1325 = vld [vmem:[%s1324] sm:$0xff]
      %v1326 = vld [vmem:[%s1324 + $0x8] sm:$0xff]
      %v1327 = vld [vmem:[%s1324 + $0x18] sm:$0xff]
      %v1328 = vld [vmem:[%s1324 + $0x20] sm:$0xff]
      %v1329 = vld [vmem:[%s1324 + $0x30] sm:$0xff]
      %v1330 = vld [vmem:[%s1324 + $0x38] sm:$0xff]
      %v1331 = vld [vmem:[%s1324 + $0x48] sm:$0xff]
      %v1332 = vld [vmem:[%s1324 + $0x50] sm:$0xff]
      %v1333 = vld [vmem:[%s1324 + $0x60] sm:$0xff]
      %v1334 = vld [vmem:[%s1324 + $0x68] sm:$0xff]
      %v1335 = vld [vmem:[%s1324 + $0x78] sm:$0xff]
      %v1336 = vld [vmem:[%s1324 + $0x80] sm:$0xff]
      %v1337 = vld [vmem:[%s1324 + $0x90] sm:$0xff]
      %v1338 = vld [vmem:[%s1324 + $0x98] sm:$0xff]
      %v1339 = vld [vmem:[%s1324 + $0xa8] sm:$0xff]
      %v1340 = vld [vmem:[%s1324 + $0xb0] sm:$0xff]
      %v1341 = vld [vmem:[%s1324 + $0x1] sm:$0xff]
      %v1342 = vld [vmem:[%s1324 + $0x9] sm:$0xff]
      %v1343 = vld [vmem:[%s1324 + $0x19] sm:$0xff]
      %v1344 = vld [vmem:[%s1324 + $0x21] sm:$0xff]
      %v1345 = vld [vmem:[%s1324 + $0x31] sm:$0xff]
      %v1346 = vld [vmem:[%s1324 + $0x39] sm:$0xff]
      %v1347 = vld [vmem:[%s1324 + $0x49] sm:$0xff]
      %v1348 = vld [vmem:[%s1324 + $0x51] sm:$0xff]
      %v1349 = vld [vmem:[%s1324 + $0x61] sm:$0xff]
      %v1350 = vld [vmem:[%s1324 + $0x69] sm:$0xff]
      %v1351 = vld [vmem:[%s1324 + $0x79] sm:$0xff]
      %v1352 = vld [vmem:[%s1324 + $0x81] sm:$0xff]
      %v1353 = vld [vmem:[%s1324 + $0x91] sm:$0xff]
      %v1354 = vld [vmem:[%s1324 + $0x99] sm:$0xff]
      %v1355 = vld [vmem:[%s1324 + $0xa9] sm:$0xff]
      %v1356 = vld [vmem:[%s1324 + $0xb1] sm:$0xff]
      %v1357 = vld [vmem:[%s1324 + $0x2] sm:$0xff]
      %v1358 = vld [vmem:[%s1324 + $0xa] sm:$0xff]
      %v1359 = vld [vmem:[%s1324 + $0x1a] sm:$0xff]
      %v1360 = vld [vmem:[%s1324 + $0x22] sm:$0xff]
      %v1361 = vld [vmem:[%s1324 + $0x32] sm:$0xff]
      %v1362 = vld [vmem:[%s1324 + $0x3a] sm:$0xff]
      %v1363 = vld [vmem:[%s1324 + $0x4a] sm:$0xff]
      %v1364 = vld [vmem:[%s1324 + $0x52] sm:$0xff]
      %v1365 = vld [vmem:[%s1324 + $0x62] sm:$0xff]
      %v1366 = vld [vmem:[%s1324 + $0x6a] sm:$0xff]
      %v1367 = vld [vmem:[%s1324 + $0x7a] sm:$0xff]
      %v1368 = vld [vmem:[%s1324 + $0x82] sm:$0xff]
      %v1369 = vld [vmem:[%s1324 + $0x92] sm:$0xff]
      %v1370 = vld [vmem:[%s1324 + $0x9a] sm:$0xff]
      %v1371 = vld [vmem:[%s1324 + $0xaa] sm:$0xff]
      %v1372 = vld [vmem:[%s1324 + $0xb2] sm:$0xff]
      %1389 = vrot.lane.b32.xlu0 %v1341, 4
      %v1390 = vpop.permute.xlu0 %1389
      %1391 = vrot.lane.b32.xlu0 %v1342, 4
      %v1392 = vpop.permute.xlu0 %1391
      %1393 = vrot.lane.b32.xlu0 %v1343, 4
      %v1394 = vpop.permute.xlu0 %1393
      %1395 = vrot.lane.b32.xlu0 %v1344, 4
      %v1396 = vpop.permute.xlu0 %1395
      %1397 = vrot.lane.b32.xlu0 %v1345, 4
      %v1398 = vpop.permute.xlu0 %1397
      %1399 = vrot.lane.b32.xlu0 %v1346, 4
      %v1400 = vpop.permute.xlu0 %1399
      %1401 = vrot.lane.b32.xlu0 %v1347, 4
      %v1402 = vpop.permute.xlu0 %1401
      %1403 = vrot.lane.b32.xlu0 %v1348, 4
      %v1404 = vpop.permute.xlu0 %1403
      %1405 = vrot.lane.b32.xlu0 %v1349, 4
      %v1406 = vpop.permute.xlu0 %1405
      %1407 = vrot.lane.b32.xlu0 %v1350, 4
      %v1408 = vpop.permute.xlu0 %1407
      %1409 = vrot.lane.b32.xlu0 %v1351, 4
      %v1410 = vpop.permute.xlu0 %1409
      %1411 = vrot.lane.b32.xlu0 %v1352, 4
      %v1412 = vpop.permute.xlu0 %1411
      %1413 = vrot.lane.b32.xlu0 %v1353, 4
      %v1414 = vpop.permute.xlu0 %1413
      %1415 = vrot.lane.b32.xlu0 %v1354, 4
      %v1416 = vpop.permute.xlu0 %1415
      %1417 = vrot.lane.b32.xlu0 %v1355, 4
      %v1418 = vpop.permute.xlu0 %1417
      %1419 = vrot.lane.b32.xlu0 %v1356, 4
      %v1420 = vpop.permute.xlu0 %1419
      %1453 = vrot.lane.b32.xlu0 %v1357, 8
      %v1454 = vpop.permute.xlu0 %1453
      %1455 = vrot.lane.b32.xlu0 %v1358, 8
      %v1456 = vpop.permute.xlu0 %1455
      %1457 = vrot.lane.b32.xlu0 %v1359, 8
      %v1458 = vpop.permute.xlu0 %1457
      %1459 = vrot.lane.b32.xlu0 %v1360, 8
      %v1460 = vpop.permute.xlu0 %1459
      %1461 = vrot.lane.b32.xlu0 %v1361, 8
      %v1462 = vpop.permute.xlu0 %1461
      %1463 = vrot.lane.b32.xlu0 %v1362, 8
      %v1464 = vpop.permute.xlu0 %1463
      %1465 = vrot.lane.b32.xlu0 %v1363, 8
      %v1466 = vpop.permute.xlu0 %1465
      %1467 = vrot.lane.b32.xlu0 %v1364, 8
      %v1468 = vpop.permute.xlu0 %1467
      %1469 = vrot.lane.b32.xlu0 %v1365, 8
      %v1470 = vpop.permute.xlu0 %1469
      %1471 = vrot.lane.b32.xlu0 %v1366, 8
      %v1472 = vpop.permute.xlu0 %1471
      %1473 = vrot.lane.b32.xlu0 %v1367, 8
      %v1474 = vpop.permute.xlu0 %1473
      %1475 = vrot.lane.b32.xlu0 %v1368, 8
      %v1476 = vpop.permute.xlu0 %1475
      %1477 = vrot.lane.b32.xlu0 %v1369, 8
      %v1478 = vpop.permute.xlu0 %1477
      %1479 = vrot.lane.b32.xlu0 %v1370, 8
      %v1480 = vpop.permute.xlu0 %1479
      %1481 = vrot.lane.b32.xlu0 %v1371, 8
      %v1482 = vpop.permute.xlu0 %1481
      %1483 = vrot.lane.b32.xlu0 %v1372, 8
      %v1484 = vpop.permute.xlu0 %1483
      %v1501 = vsel %vm548, %v1325, %v1390
      %v1502 = vsel %vm548, %v1326, %v1392
      %v1503 = vsel %vm548, %v1327, %v1394
      %v1504 = vsel %vm548, %v1328, %v1396
      %v1505 = vsel %vm548, %v1329, %v1398
      %v1506 = vsel %vm548, %v1330, %v1400
      %v1507 = vsel %vm548, %v1331, %v1402
      %v1508 = vsel %vm548, %v1332, %v1404
      %v1509 = vsel %vm548, %v1333, %v1406
      %v1510 = vsel %vm548, %v1334, %v1408
      %v1511 = vsel %vm548, %v1335, %v1410
      %v1512 = vsel %vm548, %v1336, %v1412
      %v1513 = vsel %vm548, %v1337, %v1414
      %v1514 = vsel %vm548, %v1338, %v1416
      %v1515 = vsel %vm548, %v1339, %v1418
      %v1516 = vsel %vm548, %v1340, %v1420
      %v1517 = vsel %vm818, %v1501, %v1454
      %v1518 = vsel %vm818, %v1502, %v1456
      %v1519 = vsel %vm818, %v1503, %v1458
      %v1520 = vsel %vm818, %v1504, %v1460
      %v1521 = vsel %vm818, %v1505, %v1462
      %v1522 = vsel %vm818, %v1506, %v1464
      %v1523 = vsel %vm818, %v1507, %v1466
      %v1524 = vsel %vm818, %v1508, %v1468
      %v1525 = vsel %vm818, %v1509, %v1470
      %v1526 = vsel %vm818, %v1510, %v1472
      %v1527 = vsel %vm818, %v1511, %v1474
      %v1528 = vsel %vm818, %v1512, %v1476
      %v1529 = vsel %vm818, %v1513, %v1478
      %v1530 = vsel %vm818, %v1514, %v1480
      %v1531 = vsel %vm818, %v1515, %v1482
      %v1532 = vsel %vm818, %v1516, %v1484
      %v1533 = vpack.c.bf16 %v1518, %v1517
      %v1534 = vpack.c.bf16 %v1520, %v1519
      %v1535 = vpack.c.bf16 %v1522, %v1521
      %v1536 = vpack.c.bf16 %v1524, %v1523
      %v1537 = vpack.c.bf16 %v1526, %v1525
      %v1538 = vpack.c.bf16 %v1528, %v1527
      %v1539 = vpack.c.bf16 %v1530, %v1529
      %v1540 = vpack.c.bf16 %v1532, %v1531
      %s1541 = scalar_lea.vmem %s5, 16
      %v1542 = vld [vmem:[%s1541] sm:$0xf]
      %v1543 = vld [vmem:[%s1541 + $0x4] sm:$0x3]
      %v1546 = vunpack.c.l.b16 %v1542
      %v1547 = vunpack.c.l.b16 %v1543
      %v1548 = vpack.c.b16 %v1547, %v1546
      %v1550 = vsel %vm1069, %v1533, 0
      %v1553 = vsel %vm1069, %v1534, 0
      %v1556 = vsel %vm1069, %v1535, 0
      %v1559 = vsel %vm1069, %v1536, 0
      %v1562 = vsel %vm1069, %v1537, 0
      %v1565 = vsel %vm1069, %v1538, 0
      %v1568 = vsel %vm1069, %v1539, 0
      %v1571 = vsel %vm1069, %v1540, 0
      %v1574 = vsel %vm1094, %v1548, 0
      %1576 = vmatprep.subr.bf16.mxu0 0
      %1577 = vmatpush1.bf16.msra.mxu0 %v1574
      %1578 = vmatprep.subr.bf16.mxu0 0
      %1579 = vmatpush1.bf16.msra.mxu0 0
      %1580 = vmatprep.subr.bf16.mxu0 0
      %1581 = vmatpush1.bf16.msra.mxu0 0
      %1582 = vmatprep.subr.bf16.mxu0 0
      %1583 = vmatpush1.bf16.msra.mxu0 0
      %1584 = vmatprep.subr.bf16.mxu0 0
      %1585 = vmatpush1.bf16.msra.mxu0 0
      %1586 = vmatprep.subr.bf16.mxu0 0
      %1587 = vmatpush1.bf16.msra.mxu0 0
      %1588 = vmatprep.subr.bf16.mxu0 0
      %1589 = vmatpush1.bf16.msra.mxu0 0
      %1590 = vmatprep.subr.bf16.mxu0 0
      %1591 = vmatpush1.bf16.msra.mxu0 0
      %1592 = vmatprep.subr.bf16.mxu0 0
      %1593 = vmatpush1.bf16.msra.mxu0 0
      %1594 = vmatprep.subr.bf16.mxu0 0
      %1595 = vmatpush1.bf16.msra.mxu0 0
      %1596 = vmatprep.subr.bf16.mxu0 0
      %1597 = vmatpush1.bf16.msra.mxu0 0
      %1598 = vmatprep.subr.bf16.mxu0 0
      %1599 = vmatpush1.bf16.msra.mxu0 0
      %1600 = vmatprep.subr.bf16.mxu0 0
      %1601 = vmatpush1.bf16.msra.mxu0 0
      %1602 = vmatprep.subr.bf16.mxu0 0
      %1603 = vmatpush1.bf16.msra.mxu0 0
      %1604 = vmatprep.subr.bf16.mxu0 0
      %1605 = vmatpush1.bf16.msra.mxu0 0
      %1606 = vmatprep.subr.bf16.mxu0 0
      %1607 = vmatpush1.bf16.msra.mxu0 0
      %1608 = vmatprep.mubr.bf16.mxu0 0
      %1609 = vmatmul.mubr.bf16.gmra.mrb[0].mxu0 %v1550
      %v1610 = vpop.f32.mrb[0].mxu0
      %v1611 = vadd.f32 0.0, %v1610
      %v1612 = vpop.f32.mrb[0].mxu0
      %v1613 = vpop.f32.mrb[0].mxu0
      %v1614 = vadd.f32 0.0, %v1613
      %v1615 = vpop.f32.mrb[0].mxu0
      %1616 = vmatprep.mubr.bf16.mxu0 0
      %1617 = vmatmul.mubr.bf16.gmra.mrb[0].mxu0 %v1553
      %v1618 = vpop.f32.mrb[0].mxu0
      %v1619 = vadd.f32 0.0, %v1618
      %v1620 = vpop.f32.mrb[0].mxu0
      %v1621 = vpop.f32.mrb[0].mxu0
      %v1622 = vadd.f32 0.0, %v1621
      %v1623 = vpop.f32.mrb[0].mxu0
      %1624 = vmatprep.mubr.bf16.mxu0 0
      %1625 = vmatmul.mubr.bf16.gmra.mrb[0].mxu0 %v1556
      %v1626 = vpop.f32.mrb[0].mxu0
      %v1627 = vadd.f32 0.0, %v1626
      %v1628 = vpop.f32.mrb[0].mxu0
      %v1629 = vpop.f32.mrb[0].mxu0
      %v1630 = vadd.f32 0.0, %v1629
      %v1631 = vpop.f32.mrb[0].mxu0
      %1632 = vmatprep.mubr.bf16.mxu0 0
      %1633 = vmatmul.mubr.bf16.gmra.mrb[0].mxu0 %v1559
      %v1634 = vpop.f32.mrb[0].mxu0
      %v1635 = vadd.f32 0.0, %v1634
      %v1636 = vpop.f32.mrb[0].mxu0
      %v1637 = vpop.f32.mrb[0].mxu0
      %v1638 = vadd.f32 0.0, %v1637
      %v1639 = vpop.f32.mrb[0].mxu0
      %1640 = vmatprep.mubr.bf16.mxu0 0
      %1641 = vmatmul.mubr.bf16.gmra.mrb[0].mxu0 %v1562
      %v1642 = vpop.f32.mrb[0].mxu0
      %v1643 = vadd.f32 0.0, %v1642
      %v1644 = vpop.f32.mrb[0].mxu0
      %v1645 = vpop.f32.mrb[0].mxu0
      %v1646 = vadd.f32 0.0, %v1645
      %v1647 = vpop.f32.mrb[0].mxu0
      %1648 = vmatprep.mubr.bf16.mxu0 0
      %1649 = vmatmul.mubr.bf16.gmra.mrb[0].mxu0 %v1565
      %v1650 = vpop.f32.mrb[0].mxu0
      %v1651 = vadd.f32 0.0, %v1650
      %v1652 = vpop.f32.mrb[0].mxu0
      %v1653 = vpop.f32.mrb[0].mxu0
      %v1654 = vadd.f32 0.0, %v1653
      %v1655 = vpop.f32.mrb[0].mxu0
      %1656 = vmatprep.mubr.bf16.mxu0 0
      %1657 = vmatmul.mubr.bf16.gmra.mrb[0].mxu0 %v1568
      %v1658 = vpop.f32.mrb[0].mxu0
      %v1659 = vadd.f32 0.0, %v1658
      %v1660 = vpop.f32.mrb[0].mxu0
      %v1661 = vpop.f32.mrb[0].mxu0
      %v1662 = vadd.f32 0.0, %v1661
      %v1663 = vpop.f32.mrb[0].mxu0
      %1664 = vmatprep.mubr.bf16.mxu0 0
      %1665 = vmatmul.mubr.bf16.gmra.mrb[0].mxu0 %v1571
      %v1666 = vpop.f32.mrb[0].mxu0
      %v1667 = vadd.f32 0.0, %v1666
      %v1668 = vpop.f32.mrb[0].mxu0
      %v1669 = vpop.f32.mrb[0].mxu0
      %v1670 = vadd.f32 0.0, %v1669
      %v1671 = vpop.f32.mrb[0].mxu0
      %1672 = vdwg.mxu0
      %v1673 = vadd.f32 %v1262, %v1611
      %v1674 = vadd.f32 %v1265, %v1614
      %v1675 = vadd.f32 %v1270, %v1619
      %v1676 = vadd.f32 %v1273, %v1622
      %v1677 = vadd.f32 %v1278, %v1627
      %v1678 = vadd.f32 %v1281, %v1630
      %v1679 = vadd.f32 %v1286, %v1635
      %v1680 = vadd.f32 %v1289, %v1638
      %v1681 = vadd.f32 %v1294, %v1643
      %v1682 = vadd.f32 %v1297, %v1646
      %v1683 = vadd.f32 %v1302, %v1651
      %v1684 = vadd.f32 %v1305, %v1654
      %v1685 = vadd.f32 %v1310, %v1659
      %v1686 = vadd.f32 %v1313, %v1662
      %v1687 = vadd.f32 %v1318, %v1667
      %v1688 = vadd.f32 %v1321, %v1670
      %v1689 = vld [vmem:[%s6] sm:$0x1]
      %v1691 = vlaneseq
      %v1692 = vshrl.u32 %v1691, 7
      %v1693 = vsub.s32 0, %v1692
      %v1694 = vrot.slane %v1689, %v1693
      %v1696 = vadd.f32 %v1673, %v1694
      %v1697 = vadd.f32 %v1674, %v1694
      %v1698 = vadd.f32 %v1675, %v1694
      %v1699 = vadd.f32 %v1676, %v1694
      %v1700 = vadd.f32 %v1677, %v1694
      %v1701 = vadd.f32 %v1678, %v1694
      %v1702 = vadd.f32 %v1679, %v1694
      %v1703 = vadd.f32 %v1680, %v1694
      %v1704 = vadd.f32 %v1681, %v1694
      %v1705 = vadd.f32 %v1682, %v1694
      %v1706 = vadd.f32 %v1683, %v1694
      %v1707 = vadd.f32 %v1684, %v1694
      %v1708 = vadd.f32 %v1685, %v1694
      %v1709 = vadd.f32 %v1686, %v1694
      %v1710 = vadd.f32 %v1687, %v1694
      %v1711 = vadd.f32 %v1688, %v1694
      %1712 = vst.msk [vmem:[%s445] sm:$0xff] %vm548, %v1696
      %1713 = vst.msk [vmem:[%s445 + $0x8] sm:$0xff] %vm548, %v1697
      %1714 = vst.msk [vmem:[%s445 + $0x10] sm:$0xff] %vm548, %v1698
      %1715 = vst.msk [vmem:[%s445 + $0x18] sm:$0xff] %vm548, %v1699
      %1716 = vst.msk [vmem:[%s445 + $0x20] sm:$0xff] %vm548, %v1700
      %1717 = vst.msk [vmem:[%s445 + $0x28] sm:$0xff] %vm548, %v1701
      %1718 = vst.msk [vmem:[%s445 + $0x30] sm:$0xff] %vm548, %v1702
      %1719 = vst.msk [vmem:[%s445 + $0x38] sm:$0xff] %vm548, %v1703
      %1720 = vst.msk [vmem:[%s445 + $0x40] sm:$0xff] %vm548, %v1704
      %1721 = vst.msk [vmem:[%s445 + $0x48] sm:$0xff] %vm548, %v1705
      %1722 = vst.msk [vmem:[%s445 + $0x50] sm:$0xff] %vm548, %v1706
      %1723 = vst.msk [vmem:[%s445 + $0x58] sm:$0xff] %vm548, %v1707
      %1724 = vst.msk [vmem:[%s445 + $0x60] sm:$0xff] %vm548, %v1708
      %1725 = vst.msk [vmem:[%s445 + $0x68] sm:$0xff] %vm548, %v1709
      %1726 = vst.msk [vmem:[%s445 + $0x70] sm:$0xff] %vm548, %v1710
      %1727 = vst.msk [vmem:[%s445 + $0x78] sm:$0xff] %vm548, %v1711
      %s1728 = smul.u32 8, %s23
      %p1729 = scmp.lt.s32.totalorder %s22, 1
      %s1730 = scalar_select %p1729, %s22, 1
      %p1731 = scmp.lt.s32.totalorder %s1728, 15
      %s1732 = scalar_select %p1731, %s1728, 15
      %s1733 = smul.addr %s1732, 2
      %s1734 = smul.addr %s1730, 32
      %s1735 = sadd.s32 %s1733, %s1734
      %s1736 = smul.addr %s1735, 8
      %s1737 = scalar_lea.vmem %s7, %s1736
      // Predicated region
      $region49: #{up_forward.7} parent=47 // pred_check
        %p1738 = pneg %p234
      $region50: #{up_forward.7} parent=47 // pred_check_branch
        %1740 = sbr.rel (%p1738) target = $region52
      $region51: #{up_forward.7} parent=47 // pred_region
        %s1741 = smul.u32 8, %s23
      $region52: #{up_forward.7} parent=47 // pred_fallthru
        _
    $region48: #{up_forward.7} parent=5 // pred_fallthru
      _
    %p1742 = scmp.le.s32.totalorder 2, %s13
    // Predicated region
    $region53: #{up_forward.7} parent=5 // pred_check
      %p1743 = pneg %p1742
    $region54: #{up_forward.7} parent=5 // pred_check_branch
      %1745 = sbr.rel (%p1743) target = $region56
    $region55: #{up_forward.7} parent=5 // pred_region
      %s1746 = ssub.s32 %s13, 2
      // Predicated region
      $region57: #{up_forward.7} parent=55 // pred_check
        %p1747 = pneg %p240
      $region58: #{up_forward.7} parent=55 // pred_check_branch
        %1749 = sbr.rel (%p1747) target = $region60
      $region59: #{up_forward.7} parent=55 // pred_region
        %s1750 = smul.u32 8, %s25
        %p1751 = scmp.lt.s32.totalorder %s24, 1
        %s1752 = scalar_select %p1751, %s24, 1
        %p1753 = scmp.lt.s32.totalorder %s1750, 15
        %s1754 = scalar_select %p1753, %s1750, 15
        %s1755 = smul.addr %s1754, 2
        %s1756 = smul.addr %s1752, 32
        %s1757 = sadd.s32 %s1755, %s1756
        %s1758 = smul.addr %s1757, 8
        %s1759 = scalar_lea.vmem %s7, %s1758
      $region60: #{up_forward.7} parent=55 // pred_fallthru
        _
    $region56: #{up_forward.7} parent=5 // pred_fallthru
      _
  $region6: #{up_forward.7} parent=0 // loop_footer
    %s17 = sadd.s32 1, %s13
  $region7: #{up_forward.7} parent=0 // loop_footer_branch
    %12 = sbr.rel target = $region3
  $region8: #{up_forward.7} parent=0 // loop_exit
    _

</llo_original>
